<compile_context>
chip_gen: v5e
topology: v5e:2x2
jax: 0.10.0
libtpu: 0.0.40
codegen_flags: <defaults>
</compile_context>

<pallas_src>
import functools

import jax
import jax.numpy as jnp
from jax import lax
from jax.experimental import pallas as pl
from jax.experimental.pallas import tpu as pltpu


# ---------------------------------------------------------------------------
# In-kernel helpers
# ---------------------------------------------------------------------------
def _erf_approx(x):
    # Abramowitz & Stegun 7.1.26 rational approximation, |err| < 1.5e-7.
    # Built only from VPU/EUP ops (exp) because lax.erf may not lower in Mosaic.
    a1, a2, a3, a4, a5 = 0.254829592, -0.284496736, 1.421413741, -1.453152027, 1.061405429
    p = 0.3275911
    ax = jnp.abs(x)
    t = 1.0 / (1.0 + p * ax)
    poly = ((((a5 * t + a4) * t + a3) * t + a2) * t + a1) * t
    y = 1.0 - poly * jnp.exp(-ax * ax)
    return jnp.where(x >= 0, y, -y)


def _gelu_exact(x):
    # torch.nn.GELU() default (erf-based, NOT the tanh approximation)
    return 0.5 * x * (1.0 + _erf_approx(x * 0.7071067811865476))


def _dwconv3x3_multi(pad_ref, weights, H, W):
    """Depthwise 3x3 convs (groups == C) sharing one pass over the padded input.

    pad_ref: [H+2, W+2, C] ref.  weights: list of [3, 3, C] values.
    Returns one [H, W, C] accumulator per weight.

    Loads one full-width (sublane-aligned, unmasked) row band per dy and
    produces the dx shifts by slicing the in-register value, so each input
    element is loaded once for all 3 taps and all filters instead of
    9 * len(weights) misaligned masked re-loads.
    """
    accs = [None] * len(weights)
    for dy in range(3):
        band = pad_ref[dy:dy + H, :, :]                # [H, W+2, C] aligned load
        for dx in range(3):
            tap = band[:, dx:dx + W, :]                # in-register sublane shift
            for i, w3 in enumerate(weights):
                contrib = tap * w3[dy:dy + 1, dx:dx + 1, :]
                accs[i] = contrib if accs[i] is None else accs[i] + contrib
    return accs


# ---------------------------------------------------------------------------
# Kernel: one grid step == one batch element
# ---------------------------------------------------------------------------
def conv_ms_msa_kernel(xp_ref, wq_ref, wk_ref, wv_ref, wp1_ref, wp2_ref,
                       pwT_ref, pb_ref, scale_ref, mask_ref, out_ref,
                       pad_scr, *, H, W, C, heads, dim_head):
    N = H * W
    eps2 = 1e-24   # (F.normalize eps = 1e-12)^2

    # --- fused depthwise q / k / v convs (to_q / to_k / to_v, groups=dim) ---
    q, k, v = _dwconv3x3_multi(
        xp_ref, [wq_ref[...], wk_ref[...], wv_ref[...]], H, W)     # each [H, W, C]

    qf = q.reshape(N, C)
    kf = k.reshape(N, C)
    vf = v.reshape(N, C)

    # --- batched spectral (channel) attention over all heads at once ---
    # F.normalize(..., dim=-1) in the torch layout == L2-norm over the N axis
    # per channel; it never mixes heads, so normalize the full [N, C] once.
    qn = qf * lax.rsqrt(jnp.maximum(jnp.sum(qf * qf, axis=0, keepdims=True), eps2))
    kn = kf * lax.rsqrt(jnp.maximum(jnp.sum(kf * kf, axis=0, keepdims=True), eps2))

    # attn_full[i, j] = sum_n kn[n, i] * qn[n, j]  -> [C, C].  Per-head blocks
    # sit on the diagonal; the additive mask (-1e30 off-block, applied after
    # the multiplicative rescale) restricts max/softmax to each head's d x d
    # block, reproducing the per-head softmax exactly (off-block exp == 0).
    attn = lax.dot_general(kn, qn, (((0,), (0,)), ((), ())),
                           preferred_element_type=jnp.float32)
    attn = attn * scale_ref[...] + mask_ref[...]
    attn = attn - jnp.max(attn, axis=-1, keepdims=True)
    attn = jnp.exp(attn)
    attn = attn * pl.reciprocal(jnp.sum(attn, axis=-1, keepdims=True), approx=True)

    # out[n, i] = sum_j vf[n, j] * attn[i, j]  -> [N, C] (off-block entries = 0)
    attn_out = lax.dot_general(vf, attn, (((1,), (1,)), ((), ())),
                               preferred_element_type=jnp.float32)

    # --- proj (1x1 conv == per-pixel linear) ---
    out_c = jnp.dot(attn_out, pwT_ref[...],
                    preferred_element_type=jnp.float32) + pb_ref[...]
    out_c = out_c.reshape(H, W, C)

    # --- positional embedding branch: dwconv -> GELU -> dwconv on v ---
    # Only the 1-px border needs to be zero; the interior is fully rewritten
    # each step, so never re-zero the whole (H+2, W+2, C) buffer.
    zrow = jnp.zeros((1, W + 2, C), jnp.float32)
    zcol = jnp.zeros((H, 1, C), jnp.float32)
    pad_scr[0:1, :, :] = zrow
    pad_scr[H + 1:H + 2, :, :] = zrow
    pad_scr[1:H + 1, 0:1, :] = zcol
    pad_scr[1:H + 1, W + 1:W + 2, :] = zcol

    pad_scr[1:H + 1, 1:W + 1, :] = v
    (p1,) = _dwconv3x3_multi(pad_scr, [wp1_ref[...]], H, W)
    g = _gelu_exact(p1)
    pad_scr[1:H + 1, 1:W + 1, :] = g
    (out_p,) = _dwconv3x3_multi(pad_scr, [wp2_ref[...]], H, W)

    out_ref[...] = (out_c + out_p).astype(out_ref.dtype)


# ---------------------------------------------------------------------------
# Wrapper
# ---------------------------------------------------------------------------
def conv_ms_msa(x, wq3, wk3, wv3, wp13, wp23, proj_wT, proj_b, rescale,
                *, heads, dim_head):
    """x: [B, H, W, C] (channels-last, matching the PyTorch forward's x_in)."""
    B, H, W, C = x.shape
    x_pad = jnp.pad(x, ((0, 0), (1, 1), (1, 1), (0, 0)))  # pad=1 for 3x3 convs

    # Per-channel rescale vector (column scale for the batched [C, C] attention).
    scale_vec = jnp.repeat(rescale.reshape(heads), dim_head).reshape(1, C)
    scale_vec = scale_vec.astype(jnp.float32)
    # Additive block-diagonal mask: 0 inside a head's d x d block, -1e30 outside.
    ch_head = jnp.arange(C) // dim_head
    attn_mask = jnp.where(ch_head[:, None] == ch_head[None, :],
                          0.0, -1e30).astype(jnp.float32)

    kernel = functools.partial(conv_ms_msa_kernel, H=H, W=W, C=C,
                               heads=heads, dim_head=dim_head)

    return pl.pallas_call(
        kernel,
        out_shape=jax.ShapeDtypeStruct((B, H, W, C), x.dtype),
        grid_spec=pltpu.PrefetchScalarGridSpec(
            num_scalar_prefetch=0,
            grid=(B,),
            in_specs=[
                pl.BlockSpec((None, H + 2, W + 2, C), lambda b: (b, 0, 0, 0)),
                pl.BlockSpec((3, 3, C), lambda b: (0, 0, 0)),
                pl.BlockSpec((3, 3, C), lambda b: (0, 0, 0)),
                pl.BlockSpec((3, 3, C), lambda b: (0, 0, 0)),
                pl.BlockSpec((3, 3, C), lambda b: (0, 0, 0)),
                pl.BlockSpec((3, 3, C), lambda b: (0, 0, 0)),
                pl.BlockSpec((C, C), lambda b: (0, 0)),        # proj W^T
                pl.BlockSpec((1, C), lambda b: (0, 0)),        # proj bias
                pl.BlockSpec((1, C), lambda b: (0, 0)),        # per-channel rescale
                pl.BlockSpec((C, C), lambda b: (0, 0)),        # block-diag mask
            ],
            out_specs=pl.BlockSpec((None, H, W, C), lambda b: (b, 0, 0, 0)),
            scratch_shapes=[
                pltpu.VMEM((H + 2, W + 2, C), jnp.float32),    # padded buffer (pos_emb)
            ],
        ),
        compiler_params=pltpu.CompilerParams(dimension_semantics=("parallel",)),
    )(x_pad, wq3, wk3, wv3, wp13, wp23, proj_wT, proj_b, scale_vec, attn_mask)


# ---------------------------------------------------------------------------
# Parameter setup (deterministic, synthetic) + spectral norm glue
# ---------------------------------------------------------------------------
def _spectral_normalize(w, key, eps=1e-12):
    # TODO(synk): SNConv2d assumed to be spectral_norm(Conv2d); one power
    # iteration with a deterministic u vector (synthetic weights, not a checkpoint).
    out_dim = w.shape[0]
    w_mat = w.reshape(out_dim, -1)
    u = jax.random.normal(key, (out_dim,), dtype=w.dtype)
    u = u / jnp.maximum(jnp.linalg.norm(u), eps)
    v = w_mat.T @ u
    v = v / jnp.maximum(jnp.linalg.norm(v), eps)
    u = w_mat @ v
    u = u / jnp.maximum(jnp.linalg.norm(u), eps)
    sigma = jnp.dot(u, w_mat @ v)
    return w / sigma


def init_params(key, dim, dim_head, heads):
    assert dim == dim_head * heads, "PyTorch forward's reshape requires dim == heads*dim_head"
    ks = jax.random.split(key, 13)

    def dw_weight(kw, ku):
        w = 0.1 * jax.random.normal(kw, (dim, 1, 3, 3), jnp.float32)   # [O, I/g, kh, kw]
        w = _spectral_normalize(w, ku)
        return jnp.transpose(w[:, 0], (1, 2, 0))                       # -> [3, 3, C]

    wq3 = dw_weight(ks[0], ks[1])
    wk3 = dw_weight(ks[2], ks[3])
    wv3 = dw_weight(ks[4], ks[5])
    wp13 = dw_weight(ks[6], ks[7])
    wp23 = dw_weight(ks[8], ks[9])

    # TODO(synk): SNConv2d(dim_head*heads, dim, bias=True) kernel size assumed 1x1.
    proj_w = 0.1 * jax.random.normal(ks[10], (dim, dim, 1, 1), jnp.float32)
    proj_w = _spectral_normalize(proj_w, ks[11])[:, :, 0, 0]           # [C_out, C_in]
    proj_b = 0.05 * jax.random.normal(ks[12], (dim,), jnp.float32)

    rescale = jnp.ones((1, heads), jnp.float32)
    return wq3, wk3, wv3, wp13, wp23, proj_w, proj_b, rescale


# ---------------------------------------------------------------------------
# Pure-JAX reference (mirrors the PyTorch forward op-by-op) for validation
# ---------------------------------------------------------------------------
def reference(x, wq3, wk3, wv3, wp13, wp23, proj_w, proj_b, rescale, heads, dim_head):
    B, H, W, C = x.shape
    N = H * W
    d = dim_head

    def dwconv(xx, w3):
        w = w3[:, :, None, :]                                          # HWIO, I=1 per group
        return lax.conv_general_dilated(
            xx, w, window_strides=(1, 1), padding="SAME",
            dimension_numbers=("NHWC", "HWIO", "NHWC"),
            feature_group_count=C)

    q = dwconv(x, wq3).reshape(B, N, C)
    k = dwconv(x, wk3).reshape(B, N, C)
    v = dwconv(x, wv3).reshape(B, N, C)

    def split_heads(t):                                                # b n (h d) -> b h d n
        return t.reshape(B, N, heads, d).transpose(0, 2, 3, 1)

    qt, kt, vt = split_heads(q), split_heads(k), split_heads(v)

    def l2norm(t):
        return t / jnp.maximum(jnp.linalg.norm(t, axis=-1, keepdims=True), 1e-12)

    qn, kn = l2norm(qt), l2norm(kt)
    attn = jnp.einsum("bhin,bhjn->bhij", kn, qn)
    attn = attn * rescale.reshape(1, heads, 1, 1)
    attn = jax.nn.softmax(attn, axis=-1)
    xo = jnp.einsum("bhij,bhjn->bhin", attn, vt)                       # [B, h, d, N]
    xo = xo.transpose(0, 3, 1, 2).reshape(B, N, C)
    out_c = (xo @ proj_w.T + proj_b.reshape(1, 1, C)).reshape(B, H, W, C)

    vimg = v.reshape(B, H, W, C)
    p1 = dwconv(vimg, wp13)
    g = jax.nn.gelu(p1, approximate=False)
    out_p = dwconv(g, wp23)
    return out_c + out_p


# ---------------------------------------------------------------------------
if __name__ == "__main__":
    B, Himg, Wimg = 2, 8, 8
    heads, dim_head = 4, 8
    dim = heads * dim_head                                             # 32

    key = jax.random.PRNGKey(0)
    kx, kp = jax.random.split(key)
    x = jax.random.normal(kx, (B, Himg, Wimg, dim), jnp.float32)

    wq3, wk3, wv3, wp13, wp23, proj_w, proj_b, rescale = init_params(kp, dim, dim_head, heads)

    out = conv_ms_msa(
        x, wq3, wk3, wv3, wp13, wp23,
        proj_w.T,                    # kernel consumes [C_in, C_out]
        proj_b.reshape(1, dim),
        rescale,
        heads=heads, dim_head=dim_head)
    out = jax.block_until_ready(out)

    ref = reference(x, wq3, wk3, wv3, wp13, wp23, proj_w, proj_b, rescale, heads, dim_head)
    assert out.shape == (B, Himg, Wimg, dim)
    max_err = float(jnp.max(jnp.abs(out - ref)))
    # 2e-3 tolerance: pl.reciprocal(approx=True) is used for the softmax denominator.
    assert jnp.allclose(out, ref, atol=2e-3, rtol=2e-3), f"max abs err = {max_err}"
    print("KERNEL_OK")
</pallas_src>

<mosaic_0001>
module attributes {stable_mosaic.version = 11 : i64} {
  func.func @conv_ms_msa_kernel(%arg0: i32, %arg1: memref<1x10x10x32xf32, #tpu.memory_space<vmem>>, %arg2: memref<3x3x32xf32, #tpu.memory_space<vmem>>, %arg3: memref<3x3x32xf32, #tpu.memory_space<vmem>>, %arg4: memref<3x3x32xf32, #tpu.memory_space<vmem>>, %arg5: memref<3x3x32xf32, #tpu.memory_space<vmem>>, %arg6: memref<3x3x32xf32, #tpu.memory_space<vmem>>, %arg7: memref<32x32xf32, #tpu.memory_space<vmem>>, %arg8: memref<1x32xf32, #tpu.memory_space<vmem>>, %arg9: memref<1x32xf32, #tpu.memory_space<vmem>>, %arg10: memref<32x32xf32, #tpu.memory_space<vmem>>, %arg11: memref<1x8x8x32xf32, #tpu.memory_space<vmem>>, %arg12: memref<10x10x32xf32, #tpu.memory_space<vmem>>) attributes {dimension_semantics = [#tpu.dimension_semantics<parallel>], iteration_bounds = array<i64: 2>, scalar_prefetch = 0 : i64, scratch_operands = 1 : i64, tpu.core_type = #tpu.core_type<tc>, window_params = [{transform_indices = @transform_0, window_bounds = array<i64: 1, 10, 10, 32>}, {pipeline_mode = #tpu.pipeline_mode<synchronous>, transform_indices = @transform_1, window_bounds = array<i64: 3, 3, 32>}, {pipeline_mode = #tpu.pipeline_mode<synchronous>, transform_indices = @transform_2, window_bounds = array<i64: 3, 3, 32>}, {pipeline_mode = #tpu.pipeline_mode<synchronous>, transform_indices = @transform_3, window_bounds = array<i64: 3, 3, 32>}, {pipeline_mode = #tpu.pipeline_mode<synchronous>, transform_indices = @transform_4, window_bounds = array<i64: 3, 3, 32>}, {pipeline_mode = #tpu.pipeline_mode<synchronous>, transform_indices = @transform_5, window_bounds = array<i64: 3, 3, 32>}, {pipeline_mode = #tpu.pipeline_mode<synchronous>, transform_indices = @transform_6, window_bounds = array<i64: 32, 32>}, {pipeline_mode = #tpu.pipeline_mode<synchronous>, transform_indices = @transform_7, window_bounds = array<i64: 1, 32>}, {pipeline_mode = #tpu.pipeline_mode<synchronous>, transform_indices = @transform_8, window_bounds = array<i64: 1, 32>}, {pipeline_mode = #tpu.pipeline_mode<synchronous>, transform_indices = @transform_9, window_bounds = array<i64: 32, 32>}, {transform_indices = @transform_10, window_bounds = array<i64: 1, 8, 8, 32>}]} {
    %c0 = arith.constant 0 : index
    %c0_0 = arith.constant 0 : index
    %c0_1 = arith.constant 0 : index
    %0 = vector.load %arg2[%c0, %c0_0, %c0_1] : memref<3x3x32xf32, #tpu.memory_space<vmem>>, vector<3x3x32xf32>
    %c0_2 = arith.constant 0 : index
    %c0_3 = arith.constant 0 : index
    %c0_4 = arith.constant 0 : index
    %1 = vector.load %arg3[%c0_2, %c0_3, %c0_4] : memref<3x3x32xf32, #tpu.memory_space<vmem>>, vector<3x3x32xf32>
    %c0_5 = arith.constant 0 : index
    %c0_6 = arith.constant 0 : index
    %c0_7 = arith.constant 0 : index
    %2 = vector.load %arg4[%c0_5, %c0_6, %c0_7] : memref<3x3x32xf32, #tpu.memory_space<vmem>>, vector<3x3x32xf32>
    %c0_8 = arith.constant 0 : index
    %c0_9 = arith.constant 0 : index
    %c0_10 = arith.constant 0 : index
    %c0_11 = arith.constant 0 : index
    %3 = vector.load %arg1[%c0_8, %c0_9, %c0_10, %c0_11] : memref<1x10x10x32xf32, #tpu.memory_space<vmem>>, vector<1x8x10x32xf32>
    %4 = vector.shape_cast %3 : vector<1x8x10x32xf32> to vector<8x10x32xf32>
    %5 = vector.extract_strided_slice %4 {offsets = [0, 0, 0], sizes = [8, 8, 32], strides = [1, 1, 1]} : vector<8x10x32xf32> to vector<8x8x32xf32>
    %6 = vector.extract_strided_slice %0 {offsets = [0, 0, 0], sizes = [1, 1, 32], strides = [1, 1, 1]} : vector<3x3x32xf32> to vector<1x1x32xf32>
    %7 = vector.broadcast %6 : vector<1x1x32xf32> to vector<8x8x32xf32>
    %8 = arith.mulf %5, %7 : vector<8x8x32xf32>
    %9 = vector.extract_strided_slice %1 {offsets = [0, 0, 0], sizes = [1, 1, 32], strides = [1, 1, 1]} : vector<3x3x32xf32> to vector<1x1x32xf32>
    %10 = vector.broadcast %9 : vector<1x1x32xf32> to vector<8x8x32xf32>
    %11 = arith.mulf %5, %10 : vector<8x8x32xf32>
    %12 = vector.extract_strided_slice %2 {offsets = [0, 0, 0], sizes = [1, 1, 32], strides = [1, 1, 1]} : vector<3x3x32xf32> to vector<1x1x32xf32>
    %13 = vector.broadcast %12 : vector<1x1x32xf32> to vector<8x8x32xf32>
    %14 = arith.mulf %5, %13 : vector<8x8x32xf32>
    %15 = vector.extract_strided_slice %4 {offsets = [0, 1, 0], sizes = [8, 8, 32], strides = [1, 1, 1]} : vector<8x10x32xf32> to vector<8x8x32xf32>
    %16 = vector.extract_strided_slice %0 {offsets = [0, 1, 0], sizes = [1, 1, 32], strides = [1, 1, 1]} : vector<3x3x32xf32> to vector<1x1x32xf32>
    %17 = vector.broadcast %16 : vector<1x1x32xf32> to vector<8x8x32xf32>
    %18 = arith.mulf %15, %17 : vector<8x8x32xf32>
    %19 = arith.addf %8, %18 : vector<8x8x32xf32>
    %20 = vector.extract_strided_slice %1 {offsets = [0, 1, 0], sizes = [1, 1, 32], strides = [1, 1, 1]} : vector<3x3x32xf32> to vector<1x1x32xf32>
    %21 = vector.broadcast %20 : vector<1x1x32xf32> to vector<8x8x32xf32>
    %22 = arith.mulf %15, %21 : vector<8x8x32xf32>
    %23 = arith.addf %11, %22 : vector<8x8x32xf32>
    %24 = vector.extract_strided_slice %2 {offsets = [0, 1, 0], sizes = [1, 1, 32], strides = [1, 1, 1]} : vector<3x3x32xf32> to vector<1x1x32xf32>
    %25 = vector.broadcast %24 : vector<1x1x32xf32> to vector<8x8x32xf32>
    %26 = arith.mulf %15, %25 : vector<8x8x32xf32>
    %27 = arith.addf %14, %26 : vector<8x8x32xf32>
    %28 = vector.extract_strided_slice %4 {offsets = [0, 2, 0], sizes = [8, 8, 32], strides = [1, 1, 1]} : vector<8x10x32xf32> to vector<8x8x32xf32>
    %29 = vector.extract_strided_slice %0 {offsets = [0, 2, 0], sizes = [1, 1, 32], strides = [1, 1, 1]} : vector<3x3x32xf32> to vector<1x1x32xf32>
    %30 = vector.broadcast %29 : vector<1x1x32xf32> to vector<8x8x32xf32>
    %31 = arith.mulf %28, %30 : vector<8x8x32xf32>
    %32 = arith.addf %19, %31 : vector<8x8x32xf32>
    %33 = vector.extract_strided_slice %1 {offsets = [0, 2, 0], sizes = [1, 1, 32], strides = [1, 1, 1]} : vector<3x3x32xf32> to vector<1x1x32xf32>
    %34 = vector.broadcast %33 : vector<1x1x32xf32> to vector<8x8x32xf32>
    %35 = arith.mulf %28, %34 : vector<8x8x32xf32>
    %36 = arith.addf %23, %35 : vector<8x8x32xf32>
    %37 = vector.extract_strided_slice %2 {offsets = [0, 2, 0], sizes = [1, 1, 32], strides = [1, 1, 1]} : vector<3x3x32xf32> to vector<1x1x32xf32>
    %38 = vector.broadcast %37 : vector<1x1x32xf32> to vector<8x8x32xf32>
    %39 = arith.mulf %28, %38 : vector<8x8x32xf32>
    %40 = arith.addf %27, %39 : vector<8x8x32xf32>
    %c0_12 = arith.constant 0 : index
    %c1 = arith.constant 1 : index
    %c0_13 = arith.constant 0 : index
    %c0_14 = arith.constant 0 : index
    %41 = vector.load %arg1[%c0_12, %c1, %c0_13, %c0_14] : memref<1x10x10x32xf32, #tpu.memory_space<vmem>>, vector<1x8x10x32xf32>
    %42 = vector.shape_cast %41 : vector<1x8x10x32xf32> to vector<8x10x32xf32>
    %43 = vector.extract_strided_slice %42 {offsets = [0, 0, 0], sizes = [8, 8, 32], strides = [1, 1, 1]} : vector<8x10x32xf32> to vector<8x8x32xf32>
    %44 = vector.extract_strided_slice %0 {offsets = [1, 0, 0], sizes = [1, 1, 32], strides = [1, 1, 1]} : vector<3x3x32xf32> to vector<1x1x32xf32>
    %45 = vector.broadcast %44 : vector<1x1x32xf32> to vector<8x8x32xf32>
    %46 = arith.mulf %43, %45 : vector<8x8x32xf32>
    %47 = arith.addf %32, %46 : vector<8x8x32xf32>
    %48 = vector.extract_strided_slice %1 {offsets = [1, 0, 0], sizes = [1, 1, 32], strides = [1, 1, 1]} : vector<3x3x32xf32> to vector<1x1x32xf32>
    %49 = vector.broadcast %48 : vector<1x1x32xf32> to vector<8x8x32xf32>
    %50 = arith.mulf %43, %49 : vector<8x8x32xf32>
    %51 = arith.addf %36, %50 : vector<8x8x32xf32>
    %52 = vector.extract_strided_slice %2 {offsets = [1, 0, 0], sizes = [1, 1, 32], strides = [1, 1, 1]} : vector<3x3x32xf32> to vector<1x1x32xf32>
    %53 = vector.broadcast %52 : vector<1x1x32xf32> to vector<8x8x32xf32>
    %54 = arith.mulf %43, %53 : vector<8x8x32xf32>
    %55 = arith.addf %40, %54 : vector<8x8x32xf32>
    %56 = vector.extract_strided_slice %42 {offsets = [0, 1, 0], sizes = [8, 8, 32], strides = [1, 1, 1]} : vector<8x10x32xf32> to vector<8x8x32xf32>
    %57 = vector.extract_strided_slice %0 {offsets = [1, 1, 0], sizes = [1, 1, 32], strides = [1, 1, 1]} : vector<3x3x32xf32> to vector<1x1x32xf32>
    %58 = vector.broadcast %57 : vector<1x1x32xf32> to vector<8x8x32xf32>
    %59 = arith.mulf %56, %58 : vector<8x8x32xf32>
    %60 = arith.addf %47, %59 : vector<8x8x32xf32>
    %61 = vector.extract_strided_slice %1 {offsets = [1, 1, 0], sizes = [1, 1, 32], strides = [1, 1, 1]} : vector<3x3x32xf32> to vector<1x1x32xf32>
    %62 = vector.broadcast %61 : vector<1x1x32xf32> to vector<8x8x32xf32>
    %63 = arith.mulf %56, %62 : vector<8x8x32xf32>
    %64 = arith.addf %51, %63 : vector<8x8x32xf32>
    %65 = vector.extract_strided_slice %2 {offsets = [1, 1, 0], sizes = [1, 1, 32], strides = [1, 1, 1]} : vector<3x3x32xf32> to vector<1x1x32xf32>
    %66 = vector.broadcast %65 : vector<1x1x32xf32> to vector<8x8x32xf32>
    %67 = arith.mulf %56, %66 : vector<8x8x32xf32>
    %68 = arith.addf %55, %67 : vector<8x8x32xf32>
    %69 = vector.extract_strided_slice %42 {offsets = [0, 2, 0], sizes = [8, 8, 32], strides = [1, 1, 1]} : vector<8x10x32xf32> to vector<8x8x32xf32>
    %70 = vector.extract_strided_slice %0 {offsets = [1, 2, 0], sizes = [1, 1, 32], strides = [1, 1, 1]} : vector<3x3x32xf32> to vector<1x1x32xf32>
    %71 = vector.broadcast %70 : vector<1x1x32xf32> to vector<8x8x32xf32>
    %72 = arith.mulf %69, %71 : vector<8x8x32xf32>
    %73 = arith.addf %60, %72 : vector<8x8x32xf32>
    %74 = vector.extract_strided_slice %1 {offsets = [1, 2, 0], sizes = [1, 1, 32], strides = [1, 1, 1]} : vector<3x3x32xf32> to vector<1x1x32xf32>
    %75 = vector.broadcast %74 : vector<1x1x32xf32> to vector<8x8x32xf32>
    %76 = arith.mulf %69, %75 : vector<8x8x32xf32>
    %77 = arith.addf %64, %76 : vector<8x8x32xf32>
    %78 = vector.extract_strided_slice %2 {offsets = [1, 2, 0], sizes = [1, 1, 32], strides = [1, 1, 1]} : vector<3x3x32xf32> to vector<1x1x32xf32>
    %79 = vector.broadcast %78 : vector<1x1x32xf32> to vector<8x8x32xf32>
    %80 = arith.mulf %69, %79 : vector<8x8x32xf32>
    %81 = arith.addf %68, %80 : vector<8x8x32xf32>
    %c0_15 = arith.constant 0 : index
    %c2 = arith.constant 2 : index
    %c0_16 = arith.constant 0 : index
    %c0_17 = arith.constant 0 : index
    %82 = vector.load %arg1[%c0_15, %c2, %c0_16, %c0_17] : memref<1x10x10x32xf32, #tpu.memory_space<vmem>>, vector<1x8x10x32xf32>
    %83 = vector.shape_cast %82 : vector<1x8x10x32xf32> to vector<8x10x32xf32>
    %84 = vector.extract_strided_slice %83 {offsets = [0, 0, 0], sizes = [8, 8, 32], strides = [1, 1, 1]} : vector<8x10x32xf32> to vector<8x8x32xf32>
    %85 = vector.extract_strided_slice %0 {offsets = [2, 0, 0], sizes = [1, 1, 32], strides = [1, 1, 1]} : vector<3x3x32xf32> to vector<1x1x32xf32>
    %86 = vector.broadcast %85 : vector<1x1x32xf32> to vector<8x8x32xf32>
    %87 = arith.mulf %84, %86 : vector<8x8x32xf32>
    %88 = arith.addf %73, %87 : vector<8x8x32xf32>
    %89 = vector.extract_strided_slice %1 {offsets = [2, 0, 0], sizes = [1, 1, 32], strides = [1, 1, 1]} : vector<3x3x32xf32> to vector<1x1x32xf32>
    %90 = vector.broadcast %89 : vector<1x1x32xf32> to vector<8x8x32xf32>
    %91 = arith.mulf %84, %90 : vector<8x8x32xf32>
    %92 = arith.addf %77, %91 : vector<8x8x32xf32>
    %93 = vector.extract_strided_slice %2 {offsets = [2, 0, 0], sizes = [1, 1, 32], strides = [1, 1, 1]} : vector<3x3x32xf32> to vector<1x1x32xf32>
    %94 = vector.broadcast %93 : vector<1x1x32xf32> to vector<8x8x32xf32>
    %95 = arith.mulf %84, %94 : vector<8x8x32xf32>
    %96 = arith.addf %81, %95 : vector<8x8x32xf32>
    %97 = vector.extract_strided_slice %83 {offsets = [0, 1, 0], sizes = [8, 8, 32], strides = [1, 1, 1]} : vector<8x10x32xf32> to vector<8x8x32xf32>
    %98 = vector.extract_strided_slice %0 {offsets = [2, 1, 0], sizes = [1, 1, 32], strides = [1, 1, 1]} : vector<3x3x32xf32> to vector<1x1x32xf32>
    %99 = vector.broadcast %98 : vector<1x1x32xf32> to vector<8x8x32xf32>
    %100 = arith.mulf %97, %99 : vector<8x8x32xf32>
    %101 = arith.addf %88, %100 : vector<8x8x32xf32>
    %102 = vector.extract_strided_slice %1 {offsets = [2, 1, 0], sizes = [1, 1, 32], strides = [1, 1, 1]} : vector<3x3x32xf32> to vector<1x1x32xf32>
    %103 = vector.broadcast %102 : vector<1x1x32xf32> to vector<8x8x32xf32>
    %104 = arith.mulf %97, %103 : vector<8x8x32xf32>
    %105 = arith.addf %92, %104 : vector<8x8x32xf32>
    %106 = vector.extract_strided_slice %2 {offsets = [2, 1, 0], sizes = [1, 1, 32], strides = [1, 1, 1]} : vector<3x3x32xf32> to vector<1x1x32xf32>
    %107 = vector.broadcast %106 : vector<1x1x32xf32> to vector<8x8x32xf32>
    %108 = arith.mulf %97, %107 : vector<8x8x32xf32>
    %109 = arith.addf %96, %108 : vector<8x8x32xf32>
    %110 = vector.extract_strided_slice %83 {offsets = [0, 2, 0], sizes = [8, 8, 32], strides = [1, 1, 1]} : vector<8x10x32xf32> to vector<8x8x32xf32>
    %111 = vector.extract_strided_slice %0 {offsets = [2, 2, 0], sizes = [1, 1, 32], strides = [1, 1, 1]} : vector<3x3x32xf32> to vector<1x1x32xf32>
    %112 = vector.broadcast %111 : vector<1x1x32xf32> to vector<8x8x32xf32>
    %113 = arith.mulf %110, %112 : vector<8x8x32xf32>
    %114 = arith.addf %101, %113 : vector<8x8x32xf32>
    %115 = vector.extract_strided_slice %1 {offsets = [2, 2, 0], sizes = [1, 1, 32], strides = [1, 1, 1]} : vector<3x3x32xf32> to vector<1x1x32xf32>
    %116 = vector.broadcast %115 : vector<1x1x32xf32> to vector<8x8x32xf32>
    %117 = arith.mulf %110, %116 : vector<8x8x32xf32>
    %118 = arith.addf %105, %117 : vector<8x8x32xf32>
    %119 = vector.extract_strided_slice %2 {offsets = [2, 2, 0], sizes = [1, 1, 32], strides = [1, 1, 1]} : vector<3x3x32xf32> to vector<1x1x32xf32>
    %120 = vector.broadcast %119 : vector<1x1x32xf32> to vector<8x8x32xf32>
    %121 = arith.mulf %110, %120 : vector<8x8x32xf32>
    %122 = arith.addf %109, %121 : vector<8x8x32xf32>
    %123 = vector.shape_cast %114 : vector<8x8x32xf32> to vector<64x32xf32>
    %124 = vector.shape_cast %118 : vector<8x8x32xf32> to vector<64x32xf32>
    %125 = vector.shape_cast %122 : vector<8x8x32xf32> to vector<64x32xf32>
    %126 = arith.mulf %123, %123 : vector<64x32xf32>
    %cst = arith.constant dense<0.000000e+00> : vector<32xf32>
    %127 = vector.multi_reduction <add>, %126, %cst [0] : vector<64x32xf32> to vector<32xf32>
    %128 = vector.shape_cast %127 : vector<32xf32> to vector<1x32xf32>
    %cst_18 = arith.constant 1.000000e-24 : f32
    %129 = vector.broadcast %cst_18 : f32 to vector<1x32xf32>
    %130 = arith.maximumf %128, %129 : vector<1x32xf32>
    %131 = math.rsqrt %130 : vector<1x32xf32>
    %132 = vector.broadcast %131 : vector<1x32xf32> to vector<64x32xf32>
    %133 = arith.mulf %123, %132 : vector<64x32xf32>
    %134 = arith.mulf %124, %124 : vector<64x32xf32>
    %cst_19 = arith.constant dense<0.000000e+00> : vector<32xf32>
    %135 = vector.multi_reduction <add>, %134, %cst_19 [0] : vector<64x32xf32> to vector<32xf32>
    %136 = vector.shape_cast %135 : vector<32xf32> to vector<1x32xf32>
    %cst_20 = arith.constant 1.000000e-24 : f32
    %137 = vector.broadcast %cst_20 : f32 to vector<1x32xf32>
    %138 = arith.maximumf %136, %137 : vector<1x32xf32>
    %139 = math.rsqrt %138 : vector<1x32xf32>
    %140 = vector.broadcast %139 : vector<1x32xf32> to vector<64x32xf32>
    %141 = arith.mulf %124, %140 : vector<64x32xf32>
    %cst_21 = arith.constant dense<0.000000e+00> : vector<32x32xf32>
    %142 = tpu.matmul %141, %133, %cst_21 {dimension_numbers = #tpu.dot_dimension_numbers<[0], [0], [1], [1], [0, 1, 1, 1], [], []>} : vector<64x32xf32>, vector<64x32xf32>, vector<32x32xf32> -> vector<32x32xf32>
    %c0_22 = arith.constant 0 : index
    %c0_23 = arith.constant 0 : index
    %143 = vector.load %arg9[%c0_22, %c0_23] : memref<1x32xf32, #tpu.memory_space<vmem>>, vector<1x32xf32>
    %144 = vector.broadcast %143 : vector<1x32xf32> to vector<32x32xf32>
    %145 = arith.mulf %142, %144 : vector<32x32xf32>
    %c0_24 = arith.constant 0 : index
    %c0_25 = arith.constant 0 : index
    %146 = vector.load %arg10[%c0_24, %c0_25] : memref<32x32xf32, #tpu.memory_space<vmem>>, vector<32x32xf32>
    %147 = arith.addf %145, %146 : vector<32x32xf32>
    %cst_26 = arith.constant dense<0xFF800000> : vector<32xf32>
    %148 = vector.multi_reduction <maximumf>, %147, %cst_26 [1] : vector<32x32xf32> to vector<32xf32>
    %149 = vector.shape_cast %148 : vector<32xf32> to vector<32x1xf32>
    %150 = vector.broadcast %149 : vector<32x1xf32> to vector<32x32xf32>
    %151 = arith.subf %147, %150 : vector<32x32xf32>
    %152 = math.exp %151 : vector<32x32xf32>
    %cst_27 = arith.constant dense<0.000000e+00> : vector<32xf32>
    %153 = vector.multi_reduction <add>, %152, %cst_27 [1] : vector<32x32xf32> to vector<32xf32>
    %154 = vector.shape_cast %153 : vector<32xf32> to vector<32x1xf32>
    %155 = tpu.reciprocal %154 {approx = true} : vector<32x1xf32> -> vector<32x1xf32>
    %156 = vector.broadcast %155 : vector<32x1xf32> to vector<32x32xf32>
    %157 = arith.mulf %152, %156 : vector<32x32xf32>
    %cst_28 = arith.constant dense<0.000000e+00> : vector<64x32xf32>
    %158 = tpu.matmul %125, %157, %cst_28 {dimension_numbers = #tpu.dot_dimension_numbers<[1], [1], [0], [0], [0, 0, 1, 0], [], []>} : vector<64x32xf32>, vector<32x32xf32>, vector<64x32xf32> -> vector<64x32xf32>
    %c0_29 = arith.constant 0 : index
    %c0_30 = arith.constant 0 : index
    %159 = vector.load %arg7[%c0_29, %c0_30] : memref<32x32xf32, #tpu.memory_space<vmem>>, vector<32x32xf32>
    %cst_31 = arith.constant dense<0.000000e+00> : vector<64x32xf32>
    %160 = tpu.matmul %158, %159, %cst_31 {dimension_numbers = #tpu.dot_dimension_numbers<[1], [0], [0], [1], [0, 0, 1, 1], [], []>} : vector<64x32xf32>, vector<32x32xf32>, vector<64x32xf32> -> vector<64x32xf32>
    %c0_32 = arith.constant 0 : index
    %c0_33 = arith.constant 0 : index
    %161 = vector.load %arg8[%c0_32, %c0_33] : memref<1x32xf32, #tpu.memory_space<vmem>>, vector<1x32xf32>
    %162 = vector.broadcast %161 : vector<1x32xf32> to vector<64x32xf32>
    %163 = arith.addf %160, %162 : vector<64x32xf32>
    %164 = vector.shape_cast %163 : vector<64x32xf32> to vector<8x8x32xf32>
    %cst_34 = arith.constant 0.000000e+00 : f32
    %165 = vector.broadcast %cst_34 : f32 to vector<1x10x32xf32>
    %cst_35 = arith.constant 0.000000e+00 : f32
    %166 = vector.broadcast %cst_35 : f32 to vector<8x1x32xf32>
    %c0_36 = arith.constant 0 : index
    %c0_37 = arith.constant 0 : index
    %c0_38 = arith.constant 0 : index
    %167 = vector.load %arg12[%c0_36, %c0_37, %c0_38] : memref<10x10x32xf32, #tpu.memory_space<vmem>>, vector<1x10x32xf32>
    tpu.vector_store %arg12[%c0_36, %c0_37, %c0_38], %165 {strides = array<i32>} : memref<10x10x32xf32, #tpu.memory_space<vmem>>, vector<1x10x32xf32>,
    %c9 = arith.constant 9 : index
    %c0_39 = arith.constant 0 : index
    %c0_40 = arith.constant 0 : index
    %168 = vector.load %arg12[%c9, %c0_39, %c0_40] : memref<10x10x32xf32, #tpu.memory_space<vmem>>, vector<1x10x32xf32>
    tpu.vector_store %arg12[%c9, %c0_39, %c0_40], %165 {strides = array<i32>} : memref<10x10x32xf32, #tpu.memory_space<vmem>>, vector<1x10x32xf32>,
    %c1_41 = arith.constant 1 : index
    %c0_42 = arith.constant 0 : index
    %c0_43 = arith.constant 0 : index
    %169 = vector.load %arg12[%c1_41, %c0_42, %c0_43] : memref<10x10x32xf32, #tpu.memory_space<vmem>>, vector<8x1x32xf32>
    tpu.vector_store %arg12[%c1_41, %c0_42, %c0_43], %166 {strides = array<i32>} : memref<10x10x32xf32, #tpu.memory_space<vmem>>, vector<8x1x32xf32>,
    %c1_44 = arith.constant 1 : index
    %c9_45 = arith.constant 9 : index
    %c0_46 = arith.constant 0 : index
    %170 = vector.load %arg12[%c1_44, %c9_45, %c0_46] : memref<10x10x32xf32, #tpu.memory_space<vmem>>, vector<8x1x32xf32>
    tpu.vector_store %arg12[%c1_44, %c9_45, %c0_46], %166 {strides = array<i32>} : memref<10x10x32xf32, #tpu.memory_space<vmem>>, vector<8x1x32xf32>,
    %c1_47 = arith.constant 1 : index
    %c1_48 = arith.constant 1 : index
    %c0_49 = arith.constant 0 : index
    %171 = vector.load %arg12[%c1_47, %c1_48, %c0_49] : memref<10x10x32xf32, #tpu.memory_space<vmem>>, vector<8x8x32xf32>
    tpu.vector_store %arg12[%c1_47, %c1_48, %c0_49], %122 {strides = array<i32>} : memref<10x10x32xf32, #tpu.memory_space<vmem>>, vector<8x8x32xf32>,
    %c0_50 = arith.constant 0 : index
    %c0_51 = arith.constant 0 : index
    %c0_52 = arith.constant 0 : index
    %172 = vector.load %arg5[%c0_50, %c0_51, %c0_52] : memref<3x3x32xf32, #tpu.memory_space<vmem>>, vector<3x3x32xf32>
    %c0_53 = arith.constant 0 : index
    %c0_54 = arith.constant 0 : index
    %c0_55 = arith.constant 0 : index
    %173 = vector.load %arg12[%c0_53, %c0_54, %c0_55] : memref<10x10x32xf32, #tpu.memory_space<vmem>>, vector<8x10x32xf32>
    %174 = vector.extract_strided_slice %173 {offsets = [0, 0, 0], sizes = [8, 8, 32], strides = [1, 1, 1]} : vector<8x10x32xf32> to vector<8x8x32xf32>
    %175 = vector.extract_strided_slice %172 {offsets = [0, 0, 0], sizes = [1, 1, 32], strides = [1, 1, 1]} : vector<3x3x32xf32> to vector<1x1x32xf32>
    %176 = vector.broadcast %175 : vector<1x1x32xf32> to vector<8x8x32xf32>
    %177 = arith.mulf %174, %176 : vector<8x8x32xf32>
    %178 = vector.extract_strided_slice %173 {offsets = [0, 1, 0], sizes = [8, 8, 32], strides = [1, 1, 1]} : vector<8x10x32xf32> to vector<8x8x32xf32>
    %179 = vector.extract_strided_slice %172 {offsets = [0, 1, 0], sizes = [1, 1, 32], strides = [1, 1, 1]} : vector<3x3x32xf32> to vector<1x1x32xf32>
    %180 = vector.broadcast %179 : vector<1x1x32xf32> to vector<8x8x32xf32>
    %181 = arith.mulf %178, %180 : vector<8x8x32xf32>
    %182 = arith.addf %177, %181 : vector<8x8x32xf32>
    %183 = vector.extract_strided_slice %173 {offsets = [0, 2, 0], sizes = [8, 8, 32], strides = [1, 1, 1]} : vector<8x10x32xf32> to vector<8x8x32xf32>
    %184 = vector.extract_strided_slice %172 {offsets = [0, 2, 0], sizes = [1, 1, 32], strides = [1, 1, 1]} : vector<3x3x32xf32> to vector<1x1x32xf32>
    %185 = vector.broadcast %184 : vector<1x1x32xf32> to vector<8x8x32xf32>
    %186 = arith.mulf %183, %185 : vector<8x8x32xf32>
    %187 = arith.addf %182, %186 : vector<8x8x32xf32>
    %c1_56 = arith.constant 1 : index
    %c0_57 = arith.constant 0 : index
    %c0_58 = arith.constant 0 : index
    %188 = vector.load %arg12[%c1_56, %c0_57, %c0_58] : memref<10x10x32xf32, #tpu.memory_space<vmem>>, vector<8x10x32xf32>
    %189 = vector.extract_strided_slice %188 {offsets = [0, 0, 0], sizes = [8, 8, 32], strides = [1, 1, 1]} : vector<8x10x32xf32> to vector<8x8x32xf32>
    %190 = vector.extract_strided_slice %172 {offsets = [1, 0, 0], sizes = [1, 1, 32], strides = [1, 1, 1]} : vector<3x3x32xf32> to vector<1x1x32xf32>
    %191 = vector.broadcast %190 : vector<1x1x32xf32> to vector<8x8x32xf32>
    %192 = arith.mulf %189, %191 : vector<8x8x32xf32>
    %193 = arith.addf %187, %192 : vector<8x8x32xf32>
    %194 = vector.extract_strided_slice %188 {offsets = [0, 1, 0], sizes = [8, 8, 32], strides = [1, 1, 1]} : vector<8x10x32xf32> to vector<8x8x32xf32>
    %195 = vector.extract_strided_slice %172 {offsets = [1, 1, 0], sizes = [1, 1, 32], strides = [1, 1, 1]} : vector<3x3x32xf32> to vector<1x1x32xf32>
    %196 = vector.broadcast %195 : vector<1x1x32xf32> to vector<8x8x32xf32>
    %197 = arith.mulf %194, %196 : vector<8x8x32xf32>
    %198 = arith.addf %193, %197 : vector<8x8x32xf32>
    %199 = vector.extract_strided_slice %188 {offsets = [0, 2, 0], sizes = [8, 8, 32], strides = [1, 1, 1]} : vector<8x10x32xf32> to vector<8x8x32xf32>
    %200 = vector.extract_strided_slice %172 {offsets = [1, 2, 0], sizes = [1, 1, 32], strides = [1, 1, 1]} : vector<3x3x32xf32> to vector<1x1x32xf32>
    %201 = vector.broadcast %200 : vector<1x1x32xf32> to vector<8x8x32xf32>
    %202 = arith.mulf %199, %201 : vector<8x8x32xf32>
    %203 = arith.addf %198, %202 : vector<8x8x32xf32>
    %c2_59 = arith.constant 2 : index
    %c0_60 = arith.constant 0 : index
    %c0_61 = arith.constant 0 : index
    %204 = vector.load %arg12[%c2_59, %c0_60, %c0_61] : memref<10x10x32xf32, #tpu.memory_space<vmem>>, vector<8x10x32xf32>
    %205 = vector.extract_strided_slice %204 {offsets = [0, 0, 0], sizes = [8, 8, 32], strides = [1, 1, 1]} : vector<8x10x32xf32> to vector<8x8x32xf32>
    %206 = vector.extract_strided_slice %172 {offsets = [2, 0, 0], sizes = [1, 1, 32], strides = [1, 1, 1]} : vector<3x3x32xf32> to vector<1x1x32xf32>
    %207 = vector.broadcast %206 : vector<1x1x32xf32> to vector<8x8x32xf32>
    %208 = arith.mulf %205, %207 : vector<8x8x32xf32>
    %209 = arith.addf %203, %208 : vector<8x8x32xf32>
    %210 = vector.extract_strided_slice %204 {offsets = [0, 1, 0], sizes = [8, 8, 32], strides = [1, 1, 1]} : vector<8x10x32xf32> to vector<8x8x32xf32>
    %211 = vector.extract_strided_slice %172 {offsets = [2, 1, 0], sizes = [1, 1, 32], strides = [1, 1, 1]} : vector<3x3x32xf32> to vector<1x1x32xf32>
    %212 = vector.broadcast %211 : vector<1x1x32xf32> to vector<8x8x32xf32>
    %213 = arith.mulf %210, %212 : vector<8x8x32xf32>
    %214 = arith.addf %209, %213 : vector<8x8x32xf32>
    %215 = vector.extract_strided_slice %204 {offsets = [0, 2, 0], sizes = [8, 8, 32], strides = [1, 1, 1]} : vector<8x10x32xf32> to vector<8x8x32xf32>
    %216 = vector.extract_strided_slice %172 {offsets = [2, 2, 0], sizes = [1, 1, 32], strides = [1, 1, 1]} : vector<3x3x32xf32> to vector<1x1x32xf32>
    %217 = vector.broadcast %216 : vector<1x1x32xf32> to vector<8x8x32xf32>
    %218 = arith.mulf %215, %217 : vector<8x8x32xf32>
    %219 = arith.addf %214, %218 : vector<8x8x32xf32>
    %cst_62 = arith.constant 5.000000e-01 : f32
    %220 = vector.broadcast %cst_62 : f32 to vector<8x8x32xf32>
    %221 = arith.mulf %220, %219 : vector<8x8x32xf32>
    %cst_63 = arith.constant 0.707106769 : f32
    %222 = vector.broadcast %cst_63 : f32 to vector<8x8x32xf32>
    %223 = arith.mulf %219, %222 : vector<8x8x32xf32>
    %224 = math.absf %223 : vector<8x8x32xf32>
    %cst_64 = arith.constant 0.327591091 : f32
    %225 = vector.broadcast %cst_64 : f32 to vector<8x8x32xf32>
    %226 = arith.mulf %225, %224 : vector<8x8x32xf32>
    %cst_65 = arith.constant 1.000000e+00 : f32
    %227 = vector.broadcast %cst_65 : f32 to vector<8x8x32xf32>
    %228 = arith.addf %227, %226 : vector<8x8x32xf32>
    %cst_66 = arith.constant 1.000000e+00 : f32
    %229 = vector.broadcast %cst_66 : f32 to vector<8x8x32xf32>
    %230 = arith.divf %229, %228 : vector<8x8x32xf32>
    %cst_67 = arith.constant 1.06140542 : f32
    %231 = vector.broadcast %cst_67 : f32 to vector<8x8x32xf32>
    %232 = arith.mulf %231, %230 : vector<8x8x32xf32>
    %cst_68 = arith.constant -1.45315206 : f32
    %233 = vector.broadcast %cst_68 : f32 to vector<8x8x32xf32>
    %234 = arith.addf %232, %233 : vector<8x8x32xf32>
    %235 = arith.mulf %234, %230 : vector<8x8x32xf32>
    %cst_69 = arith.constant 1.42141378 : f32
    %236 = vector.broadcast %cst_69 : f32 to vector<8x8x32xf32>
    %237 = arith.addf %235, %236 : vector<8x8x32xf32>
    %238 = arith.mulf %237, %230 : vector<8x8x32xf32>
    %cst_70 = arith.constant -0.284496725 : f32
    %239 = vector.broadcast %cst_70 : f32 to vector<8x8x32xf32>
    %240 = arith.addf %238, %239 : vector<8x8x32xf32>
    %241 = arith.mulf %240, %230 : vector<8x8x32xf32>
    %cst_71 = arith.constant 0.254829586 : f32
    %242 = vector.broadcast %cst_71 : f32 to vector<8x8x32xf32>
    %243 = arith.addf %241, %242 : vector<8x8x32xf32>
    %244 = arith.mulf %243, %230 : vector<8x8x32xf32>
    %cst_72 = arith.constant 0.000000e+00 : f32
    %245 = vector.broadcast %cst_72 : f32 to vector<8x8x32xf32>
    %246 = arith.subf %245, %224 : vector<8x8x32xf32>
    %247 = arith.mulf %246, %224 : vector<8x8x32xf32>
    %248 = math.exp %247 : vector<8x8x32xf32>
    %249 = arith.mulf %244, %248 : vector<8x8x32xf32>
    %cst_73 = arith.constant 1.000000e+00 : f32
    %250 = vector.broadcast %cst_73 : f32 to vector<8x8x32xf32>
    %251 = arith.subf %250, %249 : vector<8x8x32xf32>
    %cst_74 = arith.constant 0.000000e+00 : f32
    %252 = vector.broadcast %cst_74 : f32 to vector<8x8x32xf32>
    %253 = arith.cmpf oge, %223, %252 : vector<8x8x32xf32>
    %cst_75 = arith.constant 0.000000e+00 : f32
    %254 = vector.broadcast %cst_75 : f32 to vector<8x8x32xf32>
    %255 = arith.subf %254, %251 : vector<8x8x32xf32>
    %256 = arith.select %253, %251, %255 : vector<8x8x32xi1>, vector<8x8x32xf32>
    %cst_76 = arith.constant 1.000000e+00 : f32
    %257 = vector.broadcast %cst_76 : f32 to vector<8x8x32xf32>
    %258 = arith.addf %257, %256 : vector<8x8x32xf32>
    %259 = arith.mulf %221, %258 : vector<8x8x32xf32>
    %c1_77 = arith.constant 1 : index
    %c1_78 = arith.constant 1 : index
    %c0_79 = arith.constant 0 : index
    %260 = vector.load %arg12[%c1_77, %c1_78, %c0_79] : memref<10x10x32xf32, #tpu.memory_space<vmem>>, vector<8x8x32xf32>
    tpu.vector_store %arg12[%c1_77, %c1_78, %c0_79], %259 {strides = array<i32>} : memref<10x10x32xf32, #tpu.memory_space<vmem>>, vector<8x8x32xf32>,
    %c0_80 = arith.constant 0 : index
    %c0_81 = arith.constant 0 : index
    %c0_82 = arith.constant 0 : index
    %261 = vector.load %arg6[%c0_80, %c0_81, %c0_82] : memref<3x3x32xf32, #tpu.memory_space<vmem>>, vector<3x3x32xf32>
    %c0_83 = arith.constant 0 : index
    %c0_84 = arith.constant 0 : index
    %c0_85 = arith.constant 0 : index
    %262 = vector.load %arg12[%c0_83, %c0_84, %c0_85] : memref<10x10x32xf32, #tpu.memory_space<vmem>>, vector<8x10x32xf32>
    %263 = vector.extract_strided_slice %262 {offsets = [0, 0, 0], sizes = [8, 8, 32], strides = [1, 1, 1]} : vector<8x10x32xf32> to vector<8x8x32xf32>
    %264 = vector.extract_strided_slice %261 {offsets = [0, 0, 0], sizes = [1, 1, 32], strides = [1, 1, 1]} : vector<3x3x32xf32> to vector<1x1x32xf32>
    %265 = vector.broadcast %264 : vector<1x1x32xf32> to vector<8x8x32xf32>
    %266 = arith.mulf %263, %265 : vector<8x8x32xf32>
    %267 = vector.extract_strided_slice %262 {offsets = [0, 1, 0], sizes = [8, 8, 32], strides = [1, 1, 1]} : vector<8x10x32xf32> to vector<8x8x32xf32>
    %268 = vector.extract_strided_slice %261 {offsets = [0, 1, 0], sizes = [1, 1, 32], strides = [1, 1, 1]} : vector<3x3x32xf32> to vector<1x1x32xf32>
    %269 = vector.broadcast %268 : vector<1x1x32xf32> to vector<8x8x32xf32>
    %270 = arith.mulf %267, %269 : vector<8x8x32xf32>
    %271 = arith.addf %266, %270 : vector<8x8x32xf32>
    %272 = vector.extract_strided_slice %262 {offsets = [0, 2, 0], sizes = [8, 8, 32], strides = [1, 1, 1]} : vector<8x10x32xf32> to vector<8x8x32xf32>
    %273 = vector.extract_strided_slice %261 {offsets = [0, 2, 0], sizes = [1, 1, 32], strides = [1, 1, 1]} : vector<3x3x32xf32> to vector<1x1x32xf32>
    %274 = vector.broadcast %273 : vector<1x1x32xf32> to vector<8x8x32xf32>
    %275 = arith.mulf %272, %274 : vector<8x8x32xf32>
    %276 = arith.addf %271, %275 : vector<8x8x32xf32>
    %c1_86 = arith.constant 1 : index
    %c0_87 = arith.constant 0 : index
    %c0_88 = arith.constant 0 : index
    %277 = vector.load %arg12[%c1_86, %c0_87, %c0_88] : memref<10x10x32xf32, #tpu.memory_space<vmem>>, vector<8x10x32xf32>
    %278 = vector.extract_strided_slice %277 {offsets = [0, 0, 0], sizes = [8, 8, 32], strides = [1, 1, 1]} : vector<8x10x32xf32> to vector<8x8x32xf32>
    %279 = vector.extract_strided_slice %261 {offsets = [1, 0, 0], sizes = [1, 1, 32], strides = [1, 1, 1]} : vector<3x3x32xf32> to vector<1x1x32xf32>
    %280 = vector.broadcast %279 : vector<1x1x32xf32> to vector<8x8x32xf32>
    %281 = arith.mulf %278, %280 : vector<8x8x32xf32>
    %282 = arith.addf %276, %281 : vector<8x8x32xf32>
    %283 = vector.extract_strided_slice %277 {offsets = [0, 1, 0], sizes = [8, 8, 32], strides = [1, 1, 1]} : vector<8x10x32xf32> to vector<8x8x32xf32>
    %284 = vector.extract_strided_slice %261 {offsets = [1, 1, 0], sizes = [1, 1, 32], strides = [1, 1, 1]} : vector<3x3x32xf32> to vector<1x1x32xf32>
    %285 = vector.broadcast %284 : vector<1x1x32xf32> to vector<8x8x32xf32>
    %286 = arith.mulf %283, %285 : vector<8x8x32xf32>
    %287 = arith.addf %282, %286 : vector<8x8x32xf32>
    %288 = vector.extract_strided_slice %277 {offsets = [0, 2, 0], sizes = [8, 8, 32], strides = [1, 1, 1]} : vector<8x10x32xf32> to vector<8x8x32xf32>
    %289 = vector.extract_strided_slice %261 {offsets = [1, 2, 0], sizes = [1, 1, 32], strides = [1, 1, 1]} : vector<3x3x32xf32> to vector<1x1x32xf32>
    %290 = vector.broadcast %289 : vector<1x1x32xf32> to vector<8x8x32xf32>
    %291 = arith.mulf %288, %290 : vector<8x8x32xf32>
    %292 = arith.addf %287, %291 : vector<8x8x32xf32>
    %c2_89 = arith.constant 2 : index
    %c0_90 = arith.constant 0 : index
    %c0_91 = arith.constant 0 : index
    %293 = vector.load %arg12[%c2_89, %c0_90, %c0_91] : memref<10x10x32xf32, #tpu.memory_space<vmem>>, vector<8x10x32xf32>
    %294 = vector.extract_strided_slice %293 {offsets = [0, 0, 0], sizes = [8, 8, 32], strides = [1, 1, 1]} : vector<8x10x32xf32> to vector<8x8x32xf32>
    %295 = vector.extract_strided_slice %261 {offsets = [2, 0, 0], sizes = [1, 1, 32], strides = [1, 1, 1]} : vector<3x3x32xf32> to vector<1x1x32xf32>
    %296 = vector.broadcast %295 : vector<1x1x32xf32> to vector<8x8x32xf32>
    %297 = arith.mulf %294, %296 : vector<8x8x32xf32>
    %298 = arith.addf %292, %297 : vector<8x8x32xf32>
    %299 = vector.extract_strided_slice %293 {offsets = [0, 1, 0], sizes = [8, 8, 32], strides = [1, 1, 1]} : vector<8x10x32xf32> to vector<8x8x32xf32>
    %300 = vector.extract_strided_slice %261 {offsets = [2, 1, 0], sizes = [1, 1, 32], strides = [1, 1, 1]} : vector<3x3x32xf32> to vector<1x1x32xf32>
    %301 = vector.broadcast %300 : vector<1x1x32xf32> to vector<8x8x32xf32>
    %302 = arith.mulf %299, %301 : vector<8x8x32xf32>
    %303 = arith.addf %298, %302 : vector<8x8x32xf32>
    %304 = vector.extract_strided_slice %293 {offsets = [0, 2, 0], sizes = [8, 8, 32], strides = [1, 1, 1]} : vector<8x10x32xf32> to vector<8x8x32xf32>
    %305 = vector.extract_strided_slice %261 {offsets = [2, 2, 0], sizes = [1, 1, 32], strides = [1, 1, 1]} : vector<3x3x32xf32> to vector<1x1x32xf32>
    %306 = vector.broadcast %305 : vector<1x1x32xf32> to vector<8x8x32xf32>
    %307 = arith.mulf %304, %306 : vector<8x8x32xf32>
    %308 = arith.addf %303, %307 : vector<8x8x32xf32>
    %309 = arith.addf %164, %308 : vector<8x8x32xf32>
    %c0_92 = arith.constant 0 : index
    %c0_93 = arith.constant 0 : index
    %c0_94 = arith.constant 0 : index
    %c0_95 = arith.constant 0 : index
    %310 = vector.load %arg11[%c0_92, %c0_93, %c0_94, %c0_95] : memref<1x8x8x32xf32, #tpu.memory_space<vmem>>, vector<1x8x8x32xf32>
    %311 = vector.shape_cast %310 : vector<1x8x8x32xf32> to vector<8x8x32xf32>
    %312 = vector.shape_cast %309 : vector<8x8x32xf32> to vector<1x8x8x32xf32>
    tpu.vector_store %arg11[%c0_92, %c0_93, %c0_94, %c0_95], %312 {strides = array<i32>} : memref<1x8x8x32xf32, #tpu.memory_space<vmem>>, vector<1x8x8x32xf32>,
    return
  }
  func.func @transform_0(%arg0: i32) -> (i32, i32, i32, i32) {
    %c0_i32 = arith.constant 0 : i32
    %c0_i32_0 = arith.constant 0 : i32
    %c0_i32_1 = arith.constant 0 : i32
    %c0_i32_2 = arith.constant 0 : i32
    return %arg0, %c0_i32, %c0_i32_0, %c0_i32_1 : i32, i32, i32, i32
  }
  func.func @transform_1(%arg0: i32) -> (i32, i32, i32) {
    %c0_i32 = arith.constant 0 : i32
    %c0_i32_0 = arith.constant 0 : i32
    %c0_i32_1 = arith.constant 0 : i32
    %c0_i32_2 = arith.constant 0 : i32
    return %c0_i32, %c0_i32_0, %c0_i32_1 : i32, i32, i32
  }
  func.func @transform_2(%arg0: i32) -> (i32, i32, i32) {
    %c0_i32 = arith.constant 0 : i32
    %c0_i32_0 = arith.constant 0 : i32
    %c0_i32_1 = arith.constant 0 : i32
    %c0_i32_2 = arith.constant 0 : i32
    return %c0_i32, %c0_i32_0, %c0_i32_1 : i32, i32, i32
  }
  func.func @transform_3(%arg0: i32) -> (i32, i32, i32) {
    %c0_i32 = arith.constant 0 : i32
    %c0_i32_0 = arith.constant 0 : i32
    %c0_i32_1 = arith.constant 0 : i32
    %c0_i32_2 = arith.constant 0 : i32
    return %c0_i32, %c0_i32_0, %c0_i32_1 : i32, i32, i32
  }
  func.func @transform_4(%arg0: i32) -> (i32, i32, i32) {
    %c0_i32 = arith.constant 0 : i32
    %c0_i32_0 = arith.constant 0 : i32
    %c0_i32_1 = arith.constant 0 : i32
    %c0_i32_2 = arith.constant 0 : i32
    return %c0_i32, %c0_i32_0, %c0_i32_1 : i32, i32, i32
  }
  func.func @transform_5(%arg0: i32) -> (i32, i32, i32) {
    %c0_i32 = arith.constant 0 : i32
    %c0_i32_0 = arith.constant 0 : i32
    %c0_i32_1 = arith.constant 0 : i32
    %c0_i32_2 = arith.constant 0 : i32
    return %c0_i32, %c0_i32_0, %c0_i32_1 : i32, i32, i32
  }
  func.func @transform_6(%arg0: i32) -> (i32, i32) {
    %c0_i32 = arith.constant 0 : i32
    %c0_i32_0 = arith.constant 0 : i32
    %c0_i32_1 = arith.constant 0 : i32
    return %c0_i32, %c0_i32_0 : i32, i32
  }
  func.func @transform_7(%arg0: i32) -> (i32, i32) {
    %c0_i32 = arith.constant 0 : i32
    %c0_i32_0 = arith.constant 0 : i32
    %c0_i32_1 = arith.constant 0 : i32
    return %c0_i32, %c0_i32_0 : i32, i32
  }
  func.func @transform_8(%arg0: i32) -> (i32, i32) {
    %c0_i32 = arith.constant 0 : i32
    %c0_i32_0 = arith.constant 0 : i32
    %c0_i32_1 = arith.constant 0 : i32
    return %c0_i32, %c0_i32_0 : i32, i32
  }
  func.func @transform_9(%arg0: i32) -> (i32, i32) {
    %c0_i32 = arith.constant 0 : i32
    %c0_i32_0 = arith.constant 0 : i32
    %c0_i32_1 = arith.constant 0 : i32
    return %c0_i32, %c0_i32_0 : i32, i32
  }
  func.func @transform_10(%arg0: i32) -> (i32, i32, i32, i32) {
    %c0_i32 = arith.constant 0 : i32
    %c0_i32_0 = arith.constant 0 : i32
    %c0_i32_1 = arith.constant 0 : i32
    %c0_i32_2 = arith.constant 0 : i32
    return %arg0, %c0_i32, %c0_i32_0, %c0_i32_1 : i32, i32, i32, i32
  }
}

</mosaic_0001>

<llo_original>
// kernel: tpu_custom_call.1
$region0: #{tpu_custom_call.1}
  #allocation0 [shape = 'u32[]', space=smem, size = 0x4, offset = 0x4, fixed_abs, tag = 'smem constant byte address 0x4 - core index']
  #allocation1 [shape = 'u32[72,128]{1,0:T(1,128)}', space=vmem, size = 0x9000, scoped, tag = 'internal scratch']
  #allocation2 [shape = 'f32[10,10,32]{2,1,0:T(8,128)}', space=vmem, size = 0x14000, scoped, tag = 'scratch operand']
  %s0 = inlined_call_operand.vmem [shape: f32[2,10,10,32], index: 0, kind: input, shape index: {}]
  %s1 = inlined_call_operand.vmem [shape: f32[3,3,32], index: 1, kind: input, shape index: {}]
  %s2 = inlined_call_operand.vmem [shape: f32[3,3,32], index: 2, kind: input, shape index: {}]
  %s3 = inlined_call_operand.vmem [shape: f32[3,3,32], index: 3, kind: input, shape index: {}]
  %s4 = inlined_call_operand.vmem [shape: f32[3,3,32], index: 4, kind: input, shape index: {}]
  %s5 = inlined_call_operand.vmem [shape: f32[3,3,32], index: 5, kind: input, shape index: {}]
  %s6 = inlined_call_operand.vmem [shape: f32[32,32], index: 6, kind: input, shape index: {}]
  %s7 = inlined_call_operand.vmem [shape: f32[1,32], index: 7, kind: input, shape index: {}]
  %s8 = inlined_call_operand.vmem [shape: f32[1,32], index: 8, kind: input, shape index: {}]
  %s9 = inlined_call_operand.vmem [shape: f32[32,32], index: 9, kind: input, shape index: {}]
  %s10 = inlined_call_operand.hbm [shape: f32[2,8,8,32], index: 10, kind: output, shape index: {}]
  %s11 = sld [smem:[#allocation0]]
  $region73: #{tpu_custom_call.1} parent=0
    _
  %s13 = ssub.s32 1, %s11
  %s14 = scalar_select 0, %s13, %s11
  $region1: #{tpu_custom_call.1} parent=0
    #allocation3 [shape = 'u8[65536]{0}', space=vmem, size = 0x10000, scoped, tag = 'output window, operand 0']
    #allocation4 [shape = 's32[2]{0}', space=sflag, size = 0x8, scoped, tag = 'scoped memory for tpu_custom_call.1']
    %15 = vsyncpa [#allocation4], 0
    %s16 = scalar_lea.sflag [#allocation4], 1
    %17 = vsyncpa %s16, 0
    loop: start=0, step=1, limit=4
    $region2: #{tpu_custom_call.1} parent=1 // loop_pre_header
      _
    $region3: #{tpu_custom_call.1} parent=1 // loop_header
      %s19 = sphi 0, %s23
      %p20 = scmp.ge.s32.totalorder %s19, 4
      %s29 = sphi 0, %s31
      %s32 = sphi 0, %s29
      %s33 = sphi 0, %s32
      %s49 = sphi 0, %s33
      %s53 = sphi 0, %s53
      %s55 = sphi 0, %s53
      %s56 = sphi 0, %s55
      %s70 = sphi 0, %s56
      %s74 = sphi 0, %s74
      %s76 = sphi 0, %s74
      %s77 = sphi 0, %s76
      %s91 = sphi 0, %s77
      %s95 = sphi 0, %s95
      %s97 = sphi 0, %s95
      %s98 = sphi 0, %s97
      %s112 = sphi 0, %s98
      %s116 = sphi 0, %s116
      %s118 = sphi 0, %s116
      %s119 = sphi 0, %s118
      %s133 = sphi 0, %s119
      %s137 = sphi 0, %s137
      %s139 = sphi 0, %s137
      %s140 = sphi 0, %s139
      %s154 = sphi 0, %s140
      %s158 = sphi 0, %s158
      %s160 = sphi 0, %s158
      %s161 = sphi 0, %s160
      %s175 = sphi 0, %s161
      %s179 = sphi 0, %s179
      %s181 = sphi 0, %s179
      %s182 = sphi 0, %s181
      %s196 = sphi 0, %s182
      %s200 = sphi 0, %s200
      %s202 = sphi 0, %s200
      %s203 = sphi 0, %s202
      %s217 = sphi 0, %s203
      %s221 = sphi 0, %s221
      %s223 = sphi 0, %s221
      %s224 = sphi 0, %s223
      %s238 = sphi 0, %s224
      %s244 = sphi 0, %s246
      %s247 = sphi 0, %s244
      %s248 = sphi 0, %s247
      %s264 = sphi 0, %s248
    $region4: #{tpu_custom_call.1} parent=1 // loop_header_branch
      %22 = sbr.rel (%p20) target = $region8
    $region5: #{tpu_custom_call.1} parent=1 // loop_body
      %s24 = ssub.s32 %s19, 1
      %s25 = ssub.s32 %s19, 2
      %s26 = sadd.s32 %s19, 1
      %s27 = ssub.s32 %s19, %s26
      %p28 = scmp.eq.s32.totalorder %s27, 0
      %s30 = sadd.s32 %s29, 1
      %s31 = scalar_select %p28, %s29, %s30
      %p34 = pneg %p28
      %p35 = scmp.eq.s32.totalorder %s19, 1
      %p36 = por %p34, %p35
      %p37 = scmp.ne.s32.totalorder %s29, %s32
      %p38 = scmp.eq.s32.totalorder %s19, 0
      %p39 = por %p37, %p38
      %p40 = scmp.ne.s32.totalorder %s29, %s32
      %p41 = scmp.eq.s32.totalorder %s24, 1
      %p42 = por %p40, %p41
      %p43 = scmp.ne.s32.totalorder %s32, %s33
      %p44 = scmp.eq.s32.totalorder %s24, 0
      %p45 = por %p43, %p44
      %p46 = scmp.ne.s32.totalorder %s32, %s33
      %p47 = scmp.eq.s32.totalorder %s25, 1
      %p48 = por %p46, %p47
      %p50 = scmp.ne.s32.totalorder %s33, %s49
      %p51 = scmp.eq.s32.totalorder %s25, 0
      %p52 = por %p50, %p51
      %s54 = sadd.s32 %s53, 1
      %p57 = scmp.eq.s32.totalorder %s19, 1
      %p58 = scmp.ne.s32.totalorder %s53, %s55
      %p59 = scmp.eq.s32.totalorder %s19, 0
      %p60 = por %p58, %p59
      %p61 = scmp.ne.s32.totalorder %s53, %s55
      %p62 = scmp.eq.s32.totalorder %s24, 1
      %p63 = por %p61, %p62
      %p64 = scmp.ne.s32.totalorder %s55, %s56
      %p65 = scmp.eq.s32.totalorder %s24, 0
      %p66 = por %p64, %p65
      %p67 = scmp.ne.s32.totalorder %s55, %s56
      %p68 = scmp.eq.s32.totalorder %s25, 1
      %p69 = por %p67, %p68
      %p71 = scmp.ne.s32.totalorder %s56, %s70
      %p72 = scmp.eq.s32.totalorder %s25, 0
      %p73 = por %p71, %p72
      %s75 = sadd.s32 %s74, 1
      %p78 = scmp.eq.s32.totalorder %s19, 1
      %p79 = scmp.ne.s32.totalorder %s74, %s76
      %p80 = scmp.eq.s32.totalorder %s19, 0
      %p81 = por %p79, %p80
      %p82 = scmp.ne.s32.totalorder %s74, %s76
      %p83 = scmp.eq.s32.totalorder %s24, 1
      %p84 = por %p82, %p83
      %p85 = scmp.ne.s32.totalorder %s76, %s77
      %p86 = scmp.eq.s32.totalorder %s24, 0
      %p87 = por %p85, %p86
      %p88 = scmp.ne.s32.totalorder %s76, %s77
      %p89 = scmp.eq.s32.totalorder %s25, 1
      %p90 = por %p88, %p89
      %p92 = scmp.ne.s32.totalorder %s77, %s91
      %p93 = scmp.eq.s32.totalorder %s25, 0
      %p94 = por %p92, %p93
      %s96 = sadd.s32 %s95, 1
      %p99 = scmp.eq.s32.totalorder %s19, 1
      %p100 = scmp.ne.s32.totalorder %s95, %s97
      %p101 = scmp.eq.s32.totalorder %s19, 0
      %p102 = por %p100, %p101
      %p103 = scmp.ne.s32.totalorder %s95, %s97
      %p104 = scmp.eq.s32.totalorder %s24, 1
      %p105 = por %p103, %p104
      %p106 = scmp.ne.s32.totalorder %s97, %s98
      %p107 = scmp.eq.s32.totalorder %s24, 0
      %p108 = por %p106, %p107
      %p109 = scmp.ne.s32.totalorder %s97, %s98
      %p110 = scmp.eq.s32.totalorder %s25, 1
      %p111 = por %p109, %p110
      %p113 = scmp.ne.s32.totalorder %s98, %s112
      %p114 = scmp.eq.s32.totalorder %s25, 0
      %p115 = por %p113, %p114
      %s117 = sadd.s32 %s116, 1
      %p120 = scmp.eq.s32.totalorder %s19, 1
      %p121 = scmp.ne.s32.totalorder %s116, %s118
      %p122 = scmp.eq.s32.totalorder %s19, 0
      %p123 = por %p121, %p122
      %p124 = scmp.ne.s32.totalorder %s116, %s118
      %p125 = scmp.eq.s32.totalorder %s24, 1
      %p126 = por %p124, %p125
      %p127 = scmp.ne.s32.totalorder %s118, %s119
      %p128 = scmp.eq.s32.totalorder %s24, 0
      %p129 = por %p127, %p128
      %p130 = scmp.ne.s32.totalorder %s118, %s119
      %p131 = scmp.eq.s32.totalorder %s25, 1
      %p132 = por %p130, %p131
      %p134 = scmp.ne.s32.totalorder %s119, %s133
      %p135 = scmp.eq.s32.totalorder %s25, 0
      %p136 = por %p134, %p135
      %s138 = sadd.s32 %s137, 1
      %p141 = scmp.eq.s32.totalorder %s19, 1
      %p142 = scmp.ne.s32.totalorder %s137, %s139
      %p143 = scmp.eq.s32.totalorder %s19, 0
      %p144 = por %p142, %p143
      %p145 = scmp.ne.s32.totalorder %s137, %s139
      %p146 = scmp.eq.s32.totalorder %s24, 1
      %p147 = por %p145, %p146
      %p148 = scmp.ne.s32.totalorder %s139, %s140
      %p149 = scmp.eq.s32.totalorder %s24, 0
      %p150 = por %p148, %p149
      %p151 = scmp.ne.s32.totalorder %s139, %s140
      %p152 = scmp.eq.s32.totalorder %s25, 1
      %p153 = por %p151, %p152
      %p155 = scmp.ne.s32.totalorder %s140, %s154
      %p156 = scmp.eq.s32.totalorder %s25, 0
      %p157 = por %p155, %p156
      %s159 = sadd.s32 %s158, 1
      %p162 = scmp.eq.s32.totalorder %s19, 1
      %p163 = scmp.ne.s32.totalorder %s158, %s160
      %p164 = scmp.eq.s32.totalorder %s19, 0
      %p165 = por %p163, %p164
      %p166 = scmp.ne.s32.totalorder %s158, %s160
      %p167 = scmp.eq.s32.totalorder %s24, 1
      %p168 = por %p166, %p167
      %p169 = scmp.ne.s32.totalorder %s160, %s161
      %p170 = scmp.eq.s32.totalorder %s24, 0
      %p171 = por %p169, %p170
      %p172 = scmp.ne.s32.totalorder %s160, %s161
      %p173 = scmp.eq.s32.totalorder %s25, 1
      %p174 = por %p172, %p173
      %p176 = scmp.ne.s32.totalorder %s161, %s175
      %p177 = scmp.eq.s32.totalorder %s25, 0
      %p178 = por %p176, %p177
      %s180 = sadd.s32 %s179, 1
      %p183 = scmp.eq.s32.totalorder %s19, 1
      %p184 = scmp.ne.s32.totalorder %s179, %s181
      %p185 = scmp.eq.s32.totalorder %s19, 0
      %p186 = por %p184, %p185
      %p187 = scmp.ne.s32.totalorder %s179, %s181
      %p188 = scmp.eq.s32.totalorder %s24, 1
      %p189 = por %p187, %p188
      %p190 = scmp.ne.s32.totalorder %s181, %s182
      %p191 = scmp.eq.s32.totalorder %s24, 0
      %p192 = por %p190, %p191
      %p193 = scmp.ne.s32.totalorder %s181, %s182
      %p194 = scmp.eq.s32.totalorder %s25, 1
      %p195 = por %p193, %p194
      %p197 = scmp.ne.s32.totalorder %s182, %s196
      %p198 = scmp.eq.s32.totalorder %s25, 0
      %p199 = por %p197, %p198
      %s201 = sadd.s32 %s200, 1
      %p204 = scmp.eq.s32.totalorder %s19, 1
      %p205 = scmp.ne.s32.totalorder %s200, %s202
      %p206 = scmp.eq.s32.totalorder %s19, 0
      %p207 = por %p205, %p206
      %p208 = scmp.ne.s32.totalorder %s200, %s202
      %p209 = scmp.eq.s32.totalorder %s24, 1
      %p210 = por %p208, %p209
      %p211 = scmp.ne.s32.totalorder %s202, %s203
      %p212 = scmp.eq.s32.totalorder %s24, 0
      %p213 = por %p211, %p212
      %p214 = scmp.ne.s32.totalorder %s202, %s203
      %p215 = scmp.eq.s32.totalorder %s25, 1
      %p216 = por %p214, %p215
      %p218 = scmp.ne.s32.totalorder %s203, %s217
      %p219 = scmp.eq.s32.totalorder %s25, 0
      %p220 = por %p218, %p219
      %s222 = sadd.s32 %s221, 1
      %p225 = scmp.eq.s32.totalorder %s19, 1
      %p226 = scmp.ne.s32.totalorder %s221, %s223
      %p227 = scmp.eq.s32.totalorder %s19, 0
      %p228 = por %p226, %p227
      %p229 = scmp.ne.s32.totalorder %s221, %s223
      %p230 = scmp.eq.s32.totalorder %s24, 1
      %p231 = por %p229, %p230
      %p232 = scmp.ne.s32.totalorder %s223, %s224
      %p233 = scmp.eq.s32.totalorder %s24, 0
      %p234 = por %p232, %p233
      %p235 = scmp.ne.s32.totalorder %s223, %s224
      %p236 = scmp.eq.s32.totalorder %s25, 1
      %p237 = por %p235, %p236
      %p239 = scmp.ne.s32.totalorder %s224, %s238
      %p240 = scmp.eq.s32.totalorder %s25, 0
      %p241 = por %p239, %p240
      %s242 = ssub.s32 %s19, %s26
      %p243 = scmp.eq.s32.totalorder %s242, 0
      %s245 = sadd.s32 %s244, 1
      %s246 = scalar_select %p243, %s244, %s245
      %p249 = pneg %p243
      %p250 = scmp.eq.s32.totalorder %s19, 1
      %p251 = por %p249, %p250
      %p252 = scmp.ne.s32.totalorder %s244, %s247
      %p253 = scmp.eq.s32.totalorder %s19, 0
      %p254 = por %p252, %p253
      %p255 = scmp.ne.s32.totalorder %s244, %s247
      %p256 = scmp.eq.s32.totalorder %s24, 1
      %p257 = por %p255, %p256
      %p258 = scmp.ne.s32.totalorder %s247, %s248
      %p259 = scmp.eq.s32.totalorder %s24, 0
      %p260 = por %p258, %p259
      %p261 = scmp.ne.s32.totalorder %s247, %s248
      %p262 = scmp.eq.s32.totalorder %s25, 1
      %p263 = por %p261, %p262
      %p265 = scmp.ne.s32.totalorder %s248, %s264
      %p266 = scmp.eq.s32.totalorder %s25, 0
      %p267 = por %p265, %p266
      %p268 = scmp.le.s32.totalorder 1, %s19
      %p269 = scmp.lt.s32.totalorder %s19, 3
      %p270 = pnand %p268, %p269
      %p271 = pneg %p270
      // Predicated region
      $region9: #{tpu_custom_call.1} parent=5 // pred_check
        _
      $region10: #{tpu_custom_call.1} parent=5 // pred_check_branch
        %273 = sbr.rel (%p270) target = $region12
      $region11: #{tpu_custom_call.1} parent=5 // pred_region
        %s274 = ssub.s32 %s19, 1
        // Predicated region
        $region13: #{tpu_custom_call.1} parent=11 // pred_check
          %p275 = pneg %p66
        $region14: #{tpu_custom_call.1} parent=11 // pred_check_branch
          %277 = sbr.rel (%p275) target = $region16
        $region15: #{tpu_custom_call.1} parent=11 // pred_region
          _
        $region16: #{tpu_custom_call.1} parent=11 // pred_fallthru
          _
        // Predicated region
        $region17: #{tpu_custom_call.1} parent=11 // pred_check
          %p278 = pneg %p87
        $region18: #{tpu_custom_call.1} parent=11 // pred_check_branch
          %280 = sbr.rel (%p278) target = $region20
        $region19: #{tpu_custom_call.1} parent=11 // pred_region
          _
        $region20: #{tpu_custom_call.1} parent=11 // pred_fallthru
          _
        // Predicated region
        $region21: #{tpu_custom_call.1} parent=11 // pred_check
          %p281 = pneg %p108
        $region22: #{tpu_custom_call.1} parent=11 // pred_check_branch
          %283 = sbr.rel (%p281) target = $region24
        $region23: #{tpu_custom_call.1} parent=11 // pred_region
          _
        $region24: #{tpu_custom_call.1} parent=11 // pred_fallthru
          _
        // Predicated region
        $region25: #{tpu_custom_call.1} parent=11 // pred_check
          %p284 = pneg %p129
        $region26: #{tpu_custom_call.1} parent=11 // pred_check_branch
          %286 = sbr.rel (%p284) target = $region28
        $region27: #{tpu_custom_call.1} parent=11 // pred_region
          _
        $region28: #{tpu_custom_call.1} parent=11 // pred_fallthru
          _
        // Predicated region
        $region29: #{tpu_custom_call.1} parent=11 // pred_check
          %p287 = pneg %p150
        $region30: #{tpu_custom_call.1} parent=11 // pred_check_branch
          %289 = sbr.rel (%p287) target = $region32
        $region31: #{tpu_custom_call.1} parent=11 // pred_region
          _
        $region32: #{tpu_custom_call.1} parent=11 // pred_fallthru
          _
        // Predicated region
        $region33: #{tpu_custom_call.1} parent=11 // pred_check
          %p290 = pneg %p171
        $region34: #{tpu_custom_call.1} parent=11 // pred_check_branch
          %292 = sbr.rel (%p290) target = $region36
        $region35: #{tpu_custom_call.1} parent=11 // pred_region
          _
        $region36: #{tpu_custom_call.1} parent=11 // pred_fallthru
          _
        // Predicated region
        $region37: #{tpu_custom_call.1} parent=11 // pred_check
          %p293 = pneg %p192
        $region38: #{tpu_custom_call.1} parent=11 // pred_check_branch
          %295 = sbr.rel (%p293) target = $region40
        $region39: #{tpu_custom_call.1} parent=11 // pred_region
          _
        $region40: #{tpu_custom_call.1} parent=11 // pred_fallthru
          _
        // Predicated region
        $region41: #{tpu_custom_call.1} parent=11 // pred_check
          %p296 = pneg %p213
        $region42: #{tpu_custom_call.1} parent=11 // pred_check_branch
          %298 = sbr.rel (%p296) target = $region44
        $region43: #{tpu_custom_call.1} parent=11 // pred_region
          _
        $region44: #{tpu_custom_call.1} parent=11 // pred_fallthru
          _
        // Predicated region
        $region45: #{tpu_custom_call.1} parent=11 // pred_check
          %p299 = pneg %p234
        $region46: #{tpu_custom_call.1} parent=11 // pred_check_branch
          %301 = sbr.rel (%p299) target = $region48
        $region47: #{tpu_custom_call.1} parent=11 // pred_region
          _
        $region48: #{tpu_custom_call.1} parent=11 // pred_fallthru
          _
      $region12: #{tpu_custom_call.1} parent=5 // pred_fallthru
        _
      %p302 = scmp.lt.s32.totalorder %s19, 2
      // Predicated region
      $region49: #{tpu_custom_call.1} parent=5 // pred_check
        %p303 = pneg %p302
      $region50: #{tpu_custom_call.1} parent=5 // pred_check_branch
        %305 = sbr.rel (%p303) target = $region52
      $region51: #{tpu_custom_call.1} parent=5 // pred_region
        // Predicated region
        $region53: #{tpu_custom_call.1} parent=51 // pred_check
          %p306 = pneg %p39
        $region54: #{tpu_custom_call.1} parent=51 // pred_check_branch
          %308 = sbr.rel (%p306) target = $region56
        $region55: #{tpu_custom_call.1} parent=51 // pred_region
          %p309 = scmp.lt.s32.totalorder %s19, 1
          %s310 = scalar_select %p309, %s19, 1
          %s311 = smul.addr %s310, 20
          %s312 = smul.addr %s311, 8
          %s313 = scalar_lea.vmem %s0, %s312
        $region56: #{tpu_custom_call.1} parent=51 // pred_fallthru
          _
      $region52: #{tpu_custom_call.1} parent=5 // pred_fallthru
        _
      %p314 = scmp.le.s32.totalorder 1, %s19
      %p315 = scmp.lt.s32.totalorder %s19, 3
      %p316 = pnand %p314, %p315
      %p317 = pneg %p316
      // Predicated region
      $region57: #{tpu_custom_call.1} parent=5 // pred_check
        _
      $region58: #{tpu_custom_call.1} parent=5 // pred_check_branch
        %319 = sbr.rel (%p316) target = $region60
      $region59: #{tpu_custom_call.1} parent=5 // pred_region
        %s320 = ssub.s32 %s19, 1
        %p321 = scmp.lt.s32.totalorder %s24, 1
        %s322 = scalar_select %p321, %s24, 1
        %s323 = smul.addr %s322, 20
        %s324 = smul.addr %s323, 8
        %s325 = scalar_lea.vmem %s0, %s324
        %p326 = pneg %p45
        %p327 = pneg %p42
        %p328 = pneg %p66
        %p329 = pneg %p63
        %p330 = pneg %p87
        %p331 = pneg %p84
        %p332 = pneg %p108
        %p333 = pneg %p105
        %p334 = pneg %p129
        %p335 = pneg %p126
        %p336 = pneg %p150
        %p337 = pneg %p147
        %p338 = pneg %p171
        %p339 = pneg %p168
        %p340 = pneg %p192
        %p341 = pneg %p189
        %p342 = pneg %p213
        %p343 = pneg %p210
        %p344 = pneg %p234
        %p345 = pneg %p231
        %p346 = pneg %p260
        %p347 = pneg %p257
        %s348 = sand.u32 %s247, 1
        %s349 = scalar_lea.sflag [#allocation4], %s348
        %s350 = sand.u32 %s247, 1
        %s351 = smul.addr %s350, 64
        %s352 = scalar_lea.vmem [#allocation3], %s351
        %p353 = scmp.lt.s32.totalorder %s24, 1
        %s354 = scalar_select %p353, %s24, 1
        %s355 = smul.addr %s354, 20
        %s356 = smul.addr %s355, 8
        %s357 = scalar_lea.vmem %s0, %s356
        %v358 = vld [vmem:[%s1] sm:$0x7]
        %v359 = vld [vmem:[%s1 + $0x4] sm:$0x7]
        %v360 = vld [vmem:[%s1 + $0x8] sm:$0x7]
        %v361 = vld [vmem:[%s2] sm:$0x7]
        %v362 = vld [vmem:[%s2 + $0x4] sm:$0x7]
        %v363 = vld [vmem:[%s2 + $0x8] sm:$0x7]
        %v364 = vld [vmem:[%s3] sm:$0x7]
        %v365 = vld [vmem:[%s3 + $0x4] sm:$0x7]
        %v366 = vld [vmem:[%s3 + $0x8] sm:$0x7]
        %v367 = vld [vmem:[%s357] sm:$0xff]
        %v368 = vld [vmem:[%s357 + $0x8] sm:$0x3]
        %v369 = vld [vmem:[%s357 + $0x10] sm:$0xff]
        %v370 = vld [vmem:[%s357 + $0x18] sm:$0x3]
        %v371 = vld [vmem:[%s357 + $0x20] sm:$0xff]
        %v372 = vld [vmem:[%s357 + $0x28] sm:$0x3]
        %v373 = vld [vmem:[%s357 + $0x30] sm:$0xff]
        %v374 = vld [vmem:[%s357 + $0x38] sm:$0x3]
        %v375 = vld [vmem:[%s357 + $0x40] sm:$0xff]
        %v376 = vld [vmem:[%s357 + $0x48] sm:$0x3]
        %v377 = vld [vmem:[%s357 + $0x50] sm:$0xff]
        %v378 = vld [vmem:[%s357 + $0x58] sm:$0x3]
        %v379 = vld [vmem:[%s357 + $0x60] sm:$0xff]
        %v380 = vld [vmem:[%s357 + $0x68] sm:$0x3]
        %v381 = vld [vmem:[%s357 + $0x70] sm:$0xff]
        %v382 = vld [vmem:[%s357 + $0x78] sm:$0x3]
        %v383 = vperm.slane %v358, 0
        %v384 = vmul.f32 %v367, %v383
        %v385 = vmul.f32 %v369, %v383
        %v386 = vmul.f32 %v371, %v383
        %v387 = vmul.f32 %v373, %v383
        %v388 = vmul.f32 %v375, %v383
        %v389 = vmul.f32 %v377, %v383
        %v390 = vmul.f32 %v379, %v383
        %v391 = vmul.f32 %v381, %v383
        %v392 = vperm.slane %v361, 0
        %v393 = vmul.f32 %v367, %v392
        %v394 = vmul.f32 %v369, %v392
        %v395 = vmul.f32 %v371, %v392
        %v396 = vmul.f32 %v373, %v392
        %v397 = vmul.f32 %v375, %v392
        %v398 = vmul.f32 %v377, %v392
        %v399 = vmul.f32 %v379, %v392
        %v400 = vmul.f32 %v381, %v392
        %v401 = vperm.slane %v364, 0
        %v402 = vmul.f32 %v367, %v401
        %v403 = vmul.f32 %v369, %v401
        %v404 = vmul.f32 %v371, %v401
        %v405 = vmul.f32 %v373, %v401
        %v406 = vmul.f32 %v375, %v401
        %v407 = vmul.f32 %v377, %v401
        %v408 = vmul.f32 %v379, %v401
        %v409 = vmul.f32 %v381, %v401
        %v410 = vperm.slane %v358, 1
        %v411 = vmul.f32 %v367, %v410
        %v412 = vmul.f32 %v368, %v410
        %v413 = vmul.f32 %v369, %v410
        %v414 = vmul.f32 %v370, %v410
        %v415 = vmul.f32 %v371, %v410
        %v416 = vmul.f32 %v372, %v410
        %v417 = vmul.f32 %v373, %v410
        %v418 = vmul.f32 %v374, %v410
        %v419 = vmul.f32 %v375, %v410
        %v420 = vmul.f32 %v376, %v410
        %v421 = vmul.f32 %v377, %v410
        %v422 = vmul.f32 %v378, %v410
        %v423 = vmul.f32 %v379, %v410
        %v424 = vmul.f32 %v380, %v410
        %v425 = vmul.f32 %v381, %v410
        %v426 = vmul.f32 %v382, %v410
        %vm443 = vcmask 1046528
        %v444 = vrot.slane %v411, 1
        %v445 = vrot.slane %v412, 1
        %v446 = vsel %vm443, %v444, %v445
        %v447 = vrot.slane %v413, 1
        %v448 = vrot.slane %v414, 1
        %v449 = vsel %vm443, %v447, %v448
        %v450 = vrot.slane %v415, 1
        %v451 = vrot.slane %v416, 1
        %v452 = vsel %vm443, %v450, %v451
        %v453 = vrot.slane %v417, 1
        %v454 = vrot.slane %v418, 1
        %v455 = vsel %vm443, %v453, %v454
        %v456 = vrot.slane %v419, 1
        %v457 = vrot.slane %v420, 1
        %v458 = vsel %vm443, %v456, %v457
        %v459 = vrot.slane %v421, 1
        %v460 = vrot.slane %v422, 1
        %v461 = vsel %vm443, %v459, %v460
        %v462 = vrot.slane %v423, 1
        %v463 = vrot.slane %v424, 1
        %v464 = vsel %vm443, %v462, %v463
        %v465 = vrot.slane %v425, 1
        %v466 = vrot.slane %v426, 1
        %v467 = vsel %vm443, %v465, %v466
        %v476 = vadd.f32 %v384, %v446
        %v477 = vadd.f32 %v385, %v449
        %v478 = vadd.f32 %v386, %v452
        %v479 = vadd.f32 %v387, %v455
        %v480 = vadd.f32 %v388, %v458
        %v481 = vadd.f32 %v389, %v461
        %v482 = vadd.f32 %v390, %v464
        %v483 = vadd.f32 %v391, %v467
        %v484 = vperm.slane %v361, 1
        %v485 = vmul.f32 %v367, %v484
        %v486 = vmul.f32 %v368, %v484
        %v487 = vmul.f32 %v369, %v484
        %v488 = vmul.f32 %v370, %v484
        %v489 = vmul.f32 %v371, %v484
        %v490 = vmul.f32 %v372, %v484
        %v491 = vmul.f32 %v373, %v484
        %v492 = vmul.f32 %v374, %v484
        %v493 = vmul.f32 %v375, %v484
        %v494 = vmul.f32 %v376, %v484
        %v495 = vmul.f32 %v377, %v484
        %v496 = vmul.f32 %v378, %v484
        %v497 = vmul.f32 %v379, %v484
        %v498 = vmul.f32 %v380, %v484
        %v499 = vmul.f32 %v381, %v484
        %v500 = vmul.f32 %v382, %v484
        %v517 = vrot.slane %v485, 1
        %v518 = vrot.slane %v486, 1
        %v519 = vsel %vm443, %v517, %v518
        %v520 = vrot.slane %v487, 1
        %v521 = vrot.slane %v488, 1
        %v522 = vsel %vm443, %v520, %v521
        %v523 = vrot.slane %v489, 1
        %v524 = vrot.slane %v490, 1
        %v525 = vsel %vm443, %v523, %v524
        %v526 = vrot.slane %v491, 1
        %v527 = vrot.slane %v492, 1
        %v528 = vsel %vm443, %v526, %v527
        %v529 = vrot.slane %v493, 1
        %v530 = vrot.slane %v494, 1
        %v531 = vsel %vm443, %v529, %v530
        %v532 = vrot.slane %v495, 1
        %v533 = vrot.slane %v496, 1
        %v534 = vsel %vm443, %v532, %v533
        %v535 = vrot.slane %v497, 1
        %v536 = vrot.slane %v498, 1
        %v537 = vsel %vm443, %v535, %v536
        %v538 = vrot.slane %v499, 1
        %v539 = vrot.slane %v500, 1
        %v540 = vsel %vm443, %v538, %v539
        %v549 = vadd.f32 %v393, %v519
        %v550 = vadd.f32 %v394, %v522
        %v551 = vadd.f32 %v395, %v525
        %v552 = vadd.f32 %v396, %v528
        %v553 = vadd.f32 %v397, %v531
        %v554 = vadd.f32 %v398, %v534
        %v555 = vadd.f32 %v399, %v537
        %v556 = vadd.f32 %v400, %v540
        %v557 = vperm.slane %v364, 1
        %v558 = vmul.f32 %v367, %v557
        %v559 = vmul.f32 %v368, %v557
        %v560 = vmul.f32 %v369, %v557
        %v561 = vmul.f32 %v370, %v557
        %v562 = vmul.f32 %v371, %v557
        %v563 = vmul.f32 %v372, %v557
        %v564 = vmul.f32 %v373, %v557
        %v565 = vmul.f32 %v374, %v557
        %v566 = vmul.f32 %v375, %v557
        %v567 = vmul.f32 %v376, %v557
        %v568 = vmul.f32 %v377, %v557
        %v569 = vmul.f32 %v378, %v557
        %v570 = vmul.f32 %v379, %v557
        %v571 = vmul.f32 %v380, %v557
        %v572 = vmul.f32 %v381, %v557
        %v573 = vmul.f32 %v382, %v557
        %v590 = vrot.slane %v558, 1
        %v591 = vrot.slane %v559, 1
        %v592 = vsel %vm443, %v590, %v591
        %v593 = vrot.slane %v560, 1
        %v594 = vrot.slane %v561, 1
        %v595 = vsel %vm443, %v593, %v594
        %v596 = vrot.slane %v562, 1
        %v597 = vrot.slane %v563, 1
        %v598 = vsel %vm443, %v596, %v597
        %v599 = vrot.slane %v564, 1
        %v600 = vrot.slane %v565, 1
        %v601 = vsel %vm443, %v599, %v600
        %v602 = vrot.slane %v566, 1
        %v603 = vrot.slane %v567, 1
        %v604 = vsel %vm443, %v602, %v603
        %v605 = vrot.slane %v568, 1
        %v606 = vrot.slane %v569, 1
        %v607 = vsel %vm443, %v605, %v606
        %v608 = vrot.slane %v570, 1
        %v609 = vrot.slane %v571, 1
        %v610 = vsel %vm443, %v608, %v609
        %v611 = vrot.slane %v572, 1
        %v612 = vrot.slane %v573, 1
        %v613 = vsel %vm443, %v611, %v612
        %v622 = vadd.f32 %v402, %v592
        %v623 = vadd.f32 %v403, %v595
        %v624 = vadd.f32 %v404, %v598
        %v625 = vadd.f32 %v405, %v601
        %v626 = vadd.f32 %v406, %v604
        %v627 = vadd.f32 %v407, %v607
        %v628 = vadd.f32 %v408, %v610
        %v629 = vadd.f32 %v409, %v613
        %v630 = vperm.slane %v358, 2
        %v631 = vmul.f32 %v367, %v630
        %v632 = vmul.f32 %v368, %v630
        %v633 = vmul.f32 %v369, %v630
        %v634 = vmul.f32 %v370, %v630
        %v635 = vmul.f32 %v371, %v630
        %v636 = vmul.f32 %v372, %v630
        %v637 = vmul.f32 %v373, %v630
        %v638 = vmul.f32 %v374, %v630
        %v639 = vmul.f32 %v375, %v630
        %v640 = vmul.f32 %v376, %v630
        %v641 = vmul.f32 %v377, %v630
        %v642 = vmul.f32 %v378, %v630
        %v643 = vmul.f32 %v379, %v630
        %v644 = vmul.f32 %v380, %v630
        %v645 = vmul.f32 %v381, %v630
        %v646 = vmul.f32 %v382, %v630
        %vm663 = vcmask 1045504
        %v664 = vrot.slane %v631, 2
        %v665 = vrot.slane %v632, 2
        %v666 = vsel %vm663, %v664, %v665
        %v667 = vrot.slane %v633, 2
        %v668 = vrot.slane %v634, 2
        %v669 = vsel %vm663, %v667, %v668
        %v670 = vrot.slane %v635, 2
        %v671 = vrot.slane %v636, 2
        %v672 = vsel %vm663, %v670, %v671
        %v673 = vrot.slane %v637, 2
        %v674 = vrot.slane %v638, 2
        %v675 = vsel %vm663, %v673, %v674
        %v676 = vrot.slane %v639, 2
        %v677 = vrot.slane %v640, 2
        %v678 = vsel %vm663, %v676, %v677
        %v679 = vrot.slane %v641, 2
        %v680 = vrot.slane %v642, 2
        %v681 = vsel %vm663, %v679, %v680
        %v682 = vrot.slane %v643, 2
        %v683 = vrot.slane %v644, 2
        %v684 = vsel %vm663, %v682, %v683
        %v685 = vrot.slane %v645, 2
        %v686 = vrot.slane %v646, 2
        %v687 = vsel %vm663, %v685, %v686
        %v696 = vadd.f32 %v476, %v666
        %v697 = vadd.f32 %v477, %v669
        %v698 = vadd.f32 %v478, %v672
        %v699 = vadd.f32 %v479, %v675
        %v700 = vadd.f32 %v480, %v678
        %v701 = vadd.f32 %v481, %v681
        %v702 = vadd.f32 %v482, %v684
        %v703 = vadd.f32 %v483, %v687
        %v704 = vperm.slane %v361, 2
        %v705 = vmul.f32 %v367, %v704
        %v706 = vmul.f32 %v368, %v704
        %v707 = vmul.f32 %v369, %v704
        %v708 = vmul.f32 %v370, %v704
        %v709 = vmul.f32 %v371, %v704
        %v710 = vmul.f32 %v372, %v704
        %v711 = vmul.f32 %v373, %v704
        %v712 = vmul.f32 %v374, %v704
        %v713 = vmul.f32 %v375, %v704
        %v714 = vmul.f32 %v376, %v704
        %v715 = vmul.f32 %v377, %v704
        %v716 = vmul.f32 %v378, %v704
        %v717 = vmul.f32 %v379, %v704
        %v718 = vmul.f32 %v380, %v704
        %v719 = vmul.f32 %v381, %v704
        %v720 = vmul.f32 %v382, %v704
        %v737 = vrot.slane %v705, 2
        %v738 = vrot.slane %v706, 2
        %v739 = vsel %vm663, %v737, %v738
        %v740 = vrot.slane %v707, 2
        %v741 = vrot.slane %v708, 2
        %v742 = vsel %vm663, %v740, %v741
        %v743 = vrot.slane %v709, 2
        %v744 = vrot.slane %v710, 2
        %v745 = vsel %vm663, %v743, %v744
        %v746 = vrot.slane %v711, 2
        %v747 = vrot.slane %v712, 2
        %v748 = vsel %vm663, %v746, %v747
        %v749 = vrot.slane %v713, 2
        %v750 = vrot.slane %v714, 2
        %v751 = vsel %vm663, %v749, %v750
        %v752 = vrot.slane %v715, 2
        %v753 = vrot.slane %v716, 2
        %v754 = vsel %vm663, %v752, %v753
        %v755 = vrot.slane %v717, 2
        %v756 = vrot.slane %v718, 2
        %v757 = vsel %vm663, %v755, %v756
        %v758 = vrot.slane %v719, 2
        %v759 = vrot.slane %v720, 2
        %v760 = vsel %vm663, %v758, %v759
        %v769 = vadd.f32 %v549, %v739
        %v770 = vadd.f32 %v550, %v742
        %v771 = vadd.f32 %v551, %v745
        %v772 = vadd.f32 %v552, %v748
        %v773 = vadd.f32 %v553, %v751
        %v774 = vadd.f32 %v554, %v754
        %v775 = vadd.f32 %v555, %v757
        %v776 = vadd.f32 %v556, %v760
        %v777 = vperm.slane %v364, 2
        %v778 = vmul.f32 %v367, %v777
        %v779 = vmul.f32 %v368, %v777
        %v780 = vmul.f32 %v369, %v777
        %v781 = vmul.f32 %v370, %v777
        %v782 = vmul.f32 %v371, %v777
        %v783 = vmul.f32 %v372, %v777
        %v784 = vmul.f32 %v373, %v777
        %v785 = vmul.f32 %v374, %v777
        %v786 = vmul.f32 %v375, %v777
        %v787 = vmul.f32 %v376, %v777
        %v788 = vmul.f32 %v377, %v777
        %v789 = vmul.f32 %v378, %v777
        %v790 = vmul.f32 %v379, %v777
        %v791 = vmul.f32 %v380, %v777
        %v792 = vmul.f32 %v381, %v777
        %v793 = vmul.f32 %v382, %v777
        %v810 = vrot.slane %v778, 2
        %v811 = vrot.slane %v779, 2
        %v812 = vsel %vm663, %v810, %v811
        %v813 = vrot.slane %v780, 2
        %v814 = vrot.slane %v781, 2
        %v815 = vsel %vm663, %v813, %v814
        %v816 = vrot.slane %v782, 2
        %v817 = vrot.slane %v783, 2
        %v818 = vsel %vm663, %v816, %v817
        %v819 = vrot.slane %v784, 2
        %v820 = vrot.slane %v785, 2
        %v821 = vsel %vm663, %v819, %v820
        %v822 = vrot.slane %v786, 2
        %v823 = vrot.slane %v787, 2
        %v824 = vsel %vm663, %v822, %v823
        %v825 = vrot.slane %v788, 2
        %v826 = vrot.slane %v789, 2
        %v827 = vsel %vm663, %v825, %v826
        %v828 = vrot.slane %v790, 2
        %v829 = vrot.slane %v791, 2
        %v830 = vsel %vm663, %v828, %v829
        %v831 = vrot.slane %v792, 2
        %v832 = vrot.slane %v793, 2
        %v833 = vsel %vm663, %v831, %v832
        %v842 = vadd.f32 %v622, %v812
        %v843 = vadd.f32 %v623, %v815
        %v844 = vadd.f32 %v624, %v818
        %v845 = vadd.f32 %v625, %v821
        %v846 = vadd.f32 %v626, %v824
        %v847 = vadd.f32 %v627, %v827
        %v848 = vadd.f32 %v628, %v830
        %v849 = vadd.f32 %v629, %v833
        %s850 = scalar_lea.vmem %s357, 16
        %v851 = vld [vmem:[%s850] sm:$0xff]
        %v852 = vld [vmem:[%s850 + $0x8] sm:$0x3]
        %v853 = vld [vmem:[%s850 + $0x10] sm:$0xff]
        %v854 = vld [vmem:[%s850 + $0x18] sm:$0x3]
        %v855 = vld [vmem:[%s850 + $0x20] sm:$0xff]
        %v856 = vld [vmem:[%s850 + $0x28] sm:$0x3]
        %v857 = vld [vmem:[%s850 + $0x30] sm:$0xff]
        %v858 = vld [vmem:[%s850 + $0x38] sm:$0x3]
        %v859 = vld [vmem:[%s850 + $0x40] sm:$0xff]
        %v860 = vld [vmem:[%s850 + $0x48] sm:$0x3]
        %v861 = vld [vmem:[%s850 + $0x50] sm:$0xff]
        %v862 = vld [vmem:[%s850 + $0x58] sm:$0x3]
        %v863 = vld [vmem:[%s850 + $0x60] sm:$0xff]
        %v864 = vld [vmem:[%s850 + $0x68] sm:$0x3]
        %v865 = vld [vmem:[%s850 + $0x70] sm:$0xff]
        %v866 = vld [vmem:[%s850 + $0x78] sm:$0x3]
        %v867 = vperm.slane %v359, 0
        %v868 = vmul.f32 %v851, %v867
        %v869 = vmul.f32 %v853, %v867
        %v870 = vmul.f32 %v855, %v867
        %v871 = vmul.f32 %v857, %v867
        %v872 = vmul.f32 %v859, %v867
        %v873 = vmul.f32 %v861, %v867
        %v874 = vmul.f32 %v863, %v867
        %v875 = vmul.f32 %v865, %v867
        %v876 = vadd.f32 %v696, %v868
        %v877 = vadd.f32 %v697, %v869
        %v878 = vadd.f32 %v698, %v870
        %v879 = vadd.f32 %v699, %v871
        %v880 = vadd.f32 %v700, %v872
        %v881 = vadd.f32 %v701, %v873
        %v882 = vadd.f32 %v702, %v874
        %v883 = vadd.f32 %v703, %v875
        %v884 = vperm.slane %v362, 0
        %v885 = vmul.f32 %v851, %v884
        %v886 = vmul.f32 %v853, %v884
        %v887 = vmul.f32 %v855, %v884
        %v888 = vmul.f32 %v857, %v884
        %v889 = vmul.f32 %v859, %v884
        %v890 = vmul.f32 %v861, %v884
        %v891 = vmul.f32 %v863, %v884
        %v892 = vmul.f32 %v865, %v884
        %v893 = vadd.f32 %v769, %v885
        %v894 = vadd.f32 %v770, %v886
        %v895 = vadd.f32 %v771, %v887
        %v896 = vadd.f32 %v772, %v888
        %v897 = vadd.f32 %v773, %v889
        %v898 = vadd.f32 %v774, %v890
        %v899 = vadd.f32 %v775, %v891
        %v900 = vadd.f32 %v776, %v892
        %v901 = vperm.slane %v365, 0
        %v902 = vmul.f32 %v851, %v901
        %v903 = vmul.f32 %v853, %v901
        %v904 = vmul.f32 %v855, %v901
        %v905 = vmul.f32 %v857, %v901
        %v906 = vmul.f32 %v859, %v901
        %v907 = vmul.f32 %v861, %v901
        %v908 = vmul.f32 %v863, %v901
        %v909 = vmul.f32 %v865, %v901
        %v910 = vadd.f32 %v842, %v902
        %v911 = vadd.f32 %v843, %v903
        %v912 = vadd.f32 %v844, %v904
        %v913 = vadd.f32 %v845, %v905
        %v914 = vadd.f32 %v846, %v906
        %v915 = vadd.f32 %v847, %v907
        %v916 = vadd.f32 %v848, %v908
        %v917 = vadd.f32 %v849, %v909
        %v918 = vperm.slane %v359, 1
        %v919 = vmul.f32 %v851, %v918
        %v920 = vmul.f32 %v852, %v918
        %v921 = vmul.f32 %v853, %v918
        %v922 = vmul.f32 %v854, %v918
        %v923 = vmul.f32 %v855, %v918
        %v924 = vmul.f32 %v856, %v918
        %v925 = vmul.f32 %v857, %v918
        %v926 = vmul.f32 %v858, %v918
        %v927 = vmul.f32 %v859, %v918
        %v928 = vmul.f32 %v860, %v918
        %v929 = vmul.f32 %v861, %v918
        %v930 = vmul.f32 %v862, %v918
        %v931 = vmul.f32 %v863, %v918
        %v932 = vmul.f32 %v864, %v918
        %v933 = vmul.f32 %v865, %v918
        %v934 = vmul.f32 %v866, %v918
        %v951 = vrot.slane %v919, 1
        %v952 = vrot.slane %v920, 1
        %v953 = vsel %vm443, %v951, %v952
        %v954 = vrot.slane %v921, 1
        %v955 = vrot.slane %v922, 1
        %v956 = vsel %vm443, %v954, %v955
        %v957 = vrot.slane %v923, 1
        %v958 = vrot.slane %v924, 1
        %v959 = vsel %vm443, %v957, %v958
        %v960 = vrot.slane %v925, 1
        %v961 = vrot.slane %v926, 1
        %v962 = vsel %vm443, %v960, %v961
        %v963 = vrot.slane %v927, 1
        %v964 = vrot.slane %v928, 1
        %v965 = vsel %vm443, %v963, %v964
        %v966 = vrot.slane %v929, 1
        %v967 = vrot.slane %v930, 1
        %v968 = vsel %vm443, %v966, %v967
        %v969 = vrot.slane %v931, 1
        %v970 = vrot.slane %v932, 1
        %v971 = vsel %vm443, %v969, %v970
        %v972 = vrot.slane %v933, 1
        %v973 = vrot.slane %v934, 1
        %v974 = vsel %vm443, %v972, %v973
        %v983 = vadd.f32 %v876, %v953
        %v984 = vadd.f32 %v877, %v956
        %v985 = vadd.f32 %v878, %v959
        %v986 = vadd.f32 %v879, %v962
        %v987 = vadd.f32 %v880, %v965
        %v988 = vadd.f32 %v881, %v968
        %v989 = vadd.f32 %v882, %v971
        %v990 = vadd.f32 %v883, %v974
        %v991 = vperm.slane %v362, 1
        %v992 = vmul.f32 %v851, %v991
        %v993 = vmul.f32 %v852, %v991
        %v994 = vmul.f32 %v853, %v991
        %v995 = vmul.f32 %v854, %v991
        %v996 = vmul.f32 %v855, %v991
        %v997 = vmul.f32 %v856, %v991
        %v998 = vmul.f32 %v857, %v991
        %v999 = vmul.f32 %v858, %v991
        %v1000 = vmul.f32 %v859, %v991
        %v1001 = vmul.f32 %v860, %v991
        %v1002 = vmul.f32 %v861, %v991
        %v1003 = vmul.f32 %v862, %v991
        %v1004 = vmul.f32 %v863, %v991
        %v1005 = vmul.f32 %v864, %v991
        %v1006 = vmul.f32 %v865, %v991
        %v1007 = vmul.f32 %v866, %v991
        %v1024 = vrot.slane %v992, 1
        %v1025 = vrot.slane %v993, 1
        %v1026 = vsel %vm443, %v1024, %v1025
        %v1027 = vrot.slane %v994, 1
        %v1028 = vrot.slane %v995, 1
        %v1029 = vsel %vm443, %v1027, %v1028
        %v1030 = vrot.slane %v996, 1
        %v1031 = vrot.slane %v997, 1
        %v1032 = vsel %vm443, %v1030, %v1031
        %v1033 = vrot.slane %v998, 1
        %v1034 = vrot.slane %v999, 1
        %v1035 = vsel %vm443, %v1033, %v1034
        %v1036 = vrot.slane %v1000, 1
        %v1037 = vrot.slane %v1001, 1
        %v1038 = vsel %vm443, %v1036, %v1037
        %v1039 = vrot.slane %v1002, 1
        %v1040 = vrot.slane %v1003, 1
        %v1041 = vsel %vm443, %v1039, %v1040
        %v1042 = vrot.slane %v1004, 1
        %v1043 = vrot.slane %v1005, 1
        %v1044 = vsel %vm443, %v1042, %v1043
        %v1045 = vrot.slane %v1006, 1
        %v1046 = vrot.slane %v1007, 1
        %v1047 = vsel %vm443, %v1045, %v1046
        %v1056 = vadd.f32 %v893, %v1026
        %v1057 = vadd.f32 %v894, %v1029
        %v1058 = vadd.f32 %v895, %v1032
        %v1059 = vadd.f32 %v896, %v1035
        %v1060 = vadd.f32 %v897, %v1038
        %v1061 = vadd.f32 %v898, %v1041
        %v1062 = vadd.f32 %v899, %v1044
        %v1063 = vadd.f32 %v900, %v1047
        %v1064 = vperm.slane %v365, 1
        %v1065 = vmul.f32 %v851, %v1064
        %v1066 = vmul.f32 %v852, %v1064
        %v1067 = vmul.f32 %v853, %v1064
        %v1068 = vmul.f32 %v854, %v1064
        %v1069 = vmul.f32 %v855, %v1064
        %v1070 = vmul.f32 %v856, %v1064
        %v1071 = vmul.f32 %v857, %v1064
        %v1072 = vmul.f32 %v858, %v1064
        %v1073 = vmul.f32 %v859, %v1064
        %v1074 = vmul.f32 %v860, %v1064
        %v1075 = vmul.f32 %v861, %v1064
        %v1076 = vmul.f32 %v862, %v1064
        %v1077 = vmul.f32 %v863, %v1064
        %v1078 = vmul.f32 %v864, %v1064
        %v1079 = vmul.f32 %v865, %v1064
        %v1080 = vmul.f32 %v866, %v1064
        %v1097 = vrot.slane %v1065, 1
        %v1098 = vrot.slane %v1066, 1
        %v1099 = vsel %vm443, %v1097, %v1098
        %v1100 = vrot.slane %v1067, 1
        %v1101 = vrot.slane %v1068, 1
        %v1102 = vsel %vm443, %v1100, %v1101
        %v1103 = vrot.slane %v1069, 1
        %v1104 = vrot.slane %v1070, 1
        %v1105 = vsel %vm443, %v1103, %v1104
        %v1106 = vrot.slane %v1071, 1
        %v1107 = vrot.slane %v1072, 1
        %v1108 = vsel %vm443, %v1106, %v1107
        %v1109 = vrot.slane %v1073, 1
        %v1110 = vrot.slane %v1074, 1
        %v1111 = vsel %vm443, %v1109, %v1110
        %v1112 = vrot.slane %v1075, 1
        %v1113 = vrot.slane %v1076, 1
        %v1114 = vsel %vm443, %v1112, %v1113
        %v1115 = vrot.slane %v1077, 1
        %v1116 = vrot.slane %v1078, 1
        %v1117 = vsel %vm443, %v1115, %v1116
        %v1118 = vrot.slane %v1079, 1
        %v1119 = vrot.slane %v1080, 1
        %v1120 = vsel %vm443, %v1118, %v1119
        %v1129 = vadd.f32 %v910, %v1099
        %v1130 = vadd.f32 %v911, %v1102
        %v1131 = vadd.f32 %v912, %v1105
        %v1132 = vadd.f32 %v913, %v1108
        %v1133 = vadd.f32 %v914, %v1111
        %v1134 = vadd.f32 %v915, %v1114
        %v1135 = vadd.f32 %v916, %v1117
        %v1136 = vadd.f32 %v917, %v1120
        %v1137 = vperm.slane %v359, 2
        %v1138 = vmul.f32 %v851, %v1137
        %v1139 = vmul.f32 %v852, %v1137
        %v1140 = vmul.f32 %v853, %v1137
        %v1141 = vmul.f32 %v854, %v1137
        %v1142 = vmul.f32 %v855, %v1137
        %v1143 = vmul.f32 %v856, %v1137
        %v1144 = vmul.f32 %v857, %v1137
        %v1145 = vmul.f32 %v858, %v1137
        %v1146 = vmul.f32 %v859, %v1137
        %v1147 = vmul.f32 %v860, %v1137
        %v1148 = vmul.f32 %v861, %v1137
        %v1149 = vmul.f32 %v862, %v1137
        %v1150 = vmul.f32 %v863, %v1137
        %v1151 = vmul.f32 %v864, %v1137
        %v1152 = vmul.f32 %v865, %v1137
        %v1153 = vmul.f32 %v866, %v1137
        %v1170 = vrot.slane %v1138, 2
        %v1171 = vrot.slane %v1139, 2
        %v1172 = vsel %vm663, %v1170, %v1171
        %v1173 = vrot.slane %v1140, 2
        %v1174 = vrot.slane %v1141, 2
        %v1175 = vsel %vm663, %v1173, %v1174
        %v1176 = vrot.slane %v1142, 2
        %v1177 = vrot.slane %v1143, 2
        %v1178 = vsel %vm663, %v1176, %v1177
        %v1179 = vrot.slane %v1144, 2
        %v1180 = vrot.slane %v1145, 2
        %v1181 = vsel %vm663, %v1179, %v1180
        %v1182 = vrot.slane %v1146, 2
        %v1183 = vrot.slane %v1147, 2
        %v1184 = vsel %vm663, %v1182, %v1183
        %v1185 = vrot.slane %v1148, 2
        %v1186 = vrot.slane %v1149, 2
        %v1187 = vsel %vm663, %v1185, %v1186
        %v1188 = vrot.slane %v1150, 2
        %v1189 = vrot.slane %v1151, 2
        %v1190 = vsel %vm663, %v1188, %v1189
        %v1191 = vrot.slane %v1152, 2
        %v1192 = vrot.slane %v1153, 2
        %v1193 = vsel %vm663, %v1191, %v1192
        %v1202 = vadd.f32 %v983, %v1172
        %v1203 = vadd.f32 %v984, %v1175
        %v1204 = vadd.f32 %v985, %v1178
        %v1205 = vadd.f32 %v986, %v1181
        %v1206 = vadd.f32 %v987, %v1184
        %v1207 = vadd.f32 %v988, %v1187
        %v1208 = vadd.f32 %v989, %v1190
        %v1209 = vadd.f32 %v990, %v1193
        %v1210 = vperm.slane %v362, 2
        %v1211 = vmul.f32 %v851, %v1210
        %v1212 = vmul.f32 %v852, %v1210
        %v1213 = vmul.f32 %v853, %v1210
        %v1214 = vmul.f32 %v854, %v1210
        %v1215 = vmul.f32 %v855, %v1210
        %v1216 = vmul.f32 %v856, %v1210
        %v1217 = vmul.f32 %v857, %v1210
        %v1218 = vmul.f32 %v858, %v1210
        %v1219 = vmul.f32 %v859, %v1210
        %v1220 = vmul.f32 %v860, %v1210
        %v1221 = vmul.f32 %v861, %v1210
        %v1222 = vmul.f32 %v862, %v1210
        %v1223 = vmul.f32 %v863, %v1210
        %v1224 = vmul.f32 %v864, %v1210
        %v1225 = vmul.f32 %v865, %v1210
        %v1226 = vmul.f32 %v866, %v1210
        %v1243 = vrot.slane %v1211, 2
        %v1244 = vrot.slane %v1212, 2
        %v1245 = vsel %vm663, %v1243, %v1244
        %v1246 = vrot.slane %v1213, 2
        %v1247 = vrot.slane %v1214, 2
        %v1248 = vsel %vm663, %v1246, %v1247
        %v1249 = vrot.slane %v1215, 2
        %v1250 = vrot.slane %v1216, 2
        %v1251 = vsel %vm663, %v1249, %v1250
        %v1252 = vrot.slane %v1217, 2
        %v1253 = vrot.slane %v1218, 2
        %v1254 = vsel %vm663, %v1252, %v1253
        %v1255 = vrot.slane %v1219, 2
        %v1256 = vrot.slane %v1220, 2
        %v1257 = vsel %vm663, %v1255, %v1256
        %v1258 = vrot.slane %v1221, 2
        %v1259 = vrot.slane %v1222, 2
        %v1260 = vsel %vm663, %v1258, %v1259
        %v1261 = vrot.slane %v1223, 2
        %v1262 = vrot.slane %v1224, 2
        %v1263 = vsel %vm663, %v1261, %v1262
        %v1264 = vrot.slane %v1225, 2
        %v1265 = vrot.slane %v1226, 2
        %v1266 = vsel %vm663, %v1264, %v1265
        %v1275 = vadd.f32 %v1056, %v1245
        %v1276 = vadd.f32 %v1057, %v1248
        %v1277 = vadd.f32 %v1058, %v1251
        %v1278 = vadd.f32 %v1059, %v1254
        %v1279 = vadd.f32 %v1060, %v1257
        %v1280 = vadd.f32 %v1061, %v1260
        %v1281 = vadd.f32 %v1062, %v1263
        %v1282 = vadd.f32 %v1063, %v1266
        %v1283 = vperm.slane %v365, 2
        %v1284 = vmul.f32 %v851, %v1283
        %v1285 = vmul.f32 %v852, %v1283
        %v1286 = vmul.f32 %v853, %v1283
        %v1287 = vmul.f32 %v854, %v1283
        %v1288 = vmul.f32 %v855, %v1283
        %v1289 = vmul.f32 %v856, %v1283
        %v1290 = vmul.f32 %v857, %v1283
        %v1291 = vmul.f32 %v858, %v1283
        %v1292 = vmul.f32 %v859, %v1283
        %v1293 = vmul.f32 %v860, %v1283
        %v1294 = vmul.f32 %v861, %v1283
        %v1295 = vmul.f32 %v862, %v1283
        %v1296 = vmul.f32 %v863, %v1283
        %v1297 = vmul.f32 %v864, %v1283
        %v1298 = vmul.f32 %v865, %v1283
        %v1299 = vmul.f32 %v866, %v1283
        %v1316 = vrot.slane %v1284, 2
        %v1317 = vrot.slane %v1285, 2
        %v1318 = vsel %vm663, %v1316, %v1317
        %v1319 = vrot.slane %v1286, 2
        %v1320 = vrot.slane %v1287, 2
        %v1321 = vsel %vm663, %v1319, %v1320
        %v1322 = vrot.slane %v1288, 2
        %v1323 = vrot.slane %v1289, 2
        %v1324 = vsel %vm663, %v1322, %v1323
        %v1325 = vrot.slane %v1290, 2
        %v1326 = vrot.slane %v1291, 2
        %v1327 = vsel %vm663, %v1325, %v1326
        %v1328 = vrot.slane %v1292, 2
        %v1329 = vrot.slane %v1293, 2
        %v1330 = vsel %vm663, %v1328, %v1329
        %v1331 = vrot.slane %v1294, 2
        %v1332 = vrot.slane %v1295, 2
        %v1333 = vsel %vm663, %v1331, %v1332
        %v1334 = vrot.slane %v1296, 2
        %v1335 = vrot.slane %v1297, 2
        %v1336 = vsel %vm663, %v1334, %v1335
        %v1337 = vrot.slane %v1298, 2
        %v1338 = vrot.slane %v1299, 2
        %v1339 = vsel %vm663, %v1337, %v1338
        %v1348 = vadd.f32 %v1129, %v1318
        %v1349 = vadd.f32 %v1130, %v1321
        %v1350 = vadd.f32 %v1131, %v1324
        %v1351 = vadd.f32 %v1132, %v1327
        %v1352 = vadd.f32 %v1133, %v1330
        %v1353 = vadd.f32 %v1134, %v1333
        %v1354 = vadd.f32 %v1135, %v1336
        %v1355 = vadd.f32 %v1136, %v1339
        %s1356 = scalar_lea.vmem %s357, 32
        %v1357 = vld [vmem:[%s1356] sm:$0xff]
        %v1358 = vld [vmem:[%s1356 + $0x8] sm:$0x3]
        %v1359 = vld [vmem:[%s1356 + $0x10] sm:$0xff]
        %v1360 = vld [vmem:[%s1356 + $0x18] sm:$0x3]
        %v1361 = vld [vmem:[%s1356 + $0x20] sm:$0xff]
        %v1362 = vld [vmem:[%s1356 + $0x28] sm:$0x3]
        %v1363 = vld [vmem:[%s1356 + $0x30] sm:$0xff]
        %v1364 = vld [vmem:[%s1356 + $0x38] sm:$0x3]
        %v1365 = vld [vmem:[%s1356 + $0x40] sm:$0xff]
        %v1366 = vld [vmem:[%s1356 + $0x48] sm:$0x3]
        %v1367 = vld [vmem:[%s1356 + $0x50] sm:$0xff]
        %v1368 = vld [vmem:[%s1356 + $0x58] sm:$0x3]
        %v1369 = vld [vmem:[%s1356 + $0x60] sm:$0xff]
        %v1370 = vld [vmem:[%s1356 + $0x68] sm:$0x3]
        %v1371 = vld [vmem:[%s1356 + $0x70] sm:$0xff]
        %v1372 = vld [vmem:[%s1356 + $0x78] sm:$0x3]
        %v1373 = vperm.slane %v360, 0
        %v1374 = vmul.f32 %v1357, %v1373
        %v1375 = vmul.f32 %v1359, %v1373
        %v1376 = vmul.f32 %v1361, %v1373
        %v1377 = vmul.f32 %v1363, %v1373
        %v1378 = vmul.f32 %v1365, %v1373
        %v1379 = vmul.f32 %v1367, %v1373
        %v1380 = vmul.f32 %v1369, %v1373
        %v1381 = vmul.f32 %v1371, %v1373
        %v1382 = vadd.f32 %v1202, %v1374
        %v1383 = vadd.f32 %v1203, %v1375
        %v1384 = vadd.f32 %v1204, %v1376
        %v1385 = vadd.f32 %v1205, %v1377
        %v1386 = vadd.f32 %v1206, %v1378
        %v1387 = vadd.f32 %v1207, %v1379
        %v1388 = vadd.f32 %v1208, %v1380
        %v1389 = vadd.f32 %v1209, %v1381
        %v1390 = vperm.slane %v363, 0
        %v1391 = vmul.f32 %v1357, %v1390
        %v1392 = vmul.f32 %v1359, %v1390
        %v1393 = vmul.f32 %v1361, %v1390
        %v1394 = vmul.f32 %v1363, %v1390
        %v1395 = vmul.f32 %v1365, %v1390
        %v1396 = vmul.f32 %v1367, %v1390
        %v1397 = vmul.f32 %v1369, %v1390
        %v1398 = vmul.f32 %v1371, %v1390
        %v1399 = vadd.f32 %v1275, %v1391
        %v1400 = vadd.f32 %v1276, %v1392
        %v1401 = vadd.f32 %v1277, %v1393
        %v1402 = vadd.f32 %v1278, %v1394
        %v1403 = vadd.f32 %v1279, %v1395
        %v1404 = vadd.f32 %v1280, %v1396
        %v1405 = vadd.f32 %v1281, %v1397
        %v1406 = vadd.f32 %v1282, %v1398
        %v1407 = vperm.slane %v366, 0
        %v1408 = vmul.f32 %v1357, %v1407
        %v1409 = vmul.f32 %v1359, %v1407
        %v1410 = vmul.f32 %v1361, %v1407
        %v1411 = vmul.f32 %v1363, %v1407
        %v1412 = vmul.f32 %v1365, %v1407
        %v1413 = vmul.f32 %v1367, %v1407
        %v1414 = vmul.f32 %v1369, %v1407
        %v1415 = vmul.f32 %v1371, %v1407
        %v1416 = vadd.f32 %v1348, %v1408
        %v1417 = vadd.f32 %v1349, %v1409
        %v1418 = vadd.f32 %v1350, %v1410
        %v1419 = vadd.f32 %v1351, %v1411
        %v1420 = vadd.f32 %v1352, %v1412
        %v1421 = vadd.f32 %v1353, %v1413
        %v1422 = vadd.f32 %v1354, %v1414
        %v1423 = vadd.f32 %v1355, %v1415
        %v1424 = vperm.slane %v360, 1
        %v1425 = vmul.f32 %v1357, %v1424
        %v1426 = vmul.f32 %v1358, %v1424
        %v1427 = vmul.f32 %v1359, %v1424
        %v1428 = vmul.f32 %v1360, %v1424
        %v1429 = vmul.f32 %v1361, %v1424
        %v1430 = vmul.f32 %v1362, %v1424
        %v1431 = vmul.f32 %v1363, %v1424
        %v1432 = vmul.f32 %v1364, %v1424
        %v1433 = vmul.f32 %v1365, %v1424
        %v1434 = vmul.f32 %v1366, %v1424
        %v1435 = vmul.f32 %v1367, %v1424
        %v1436 = vmul.f32 %v1368, %v1424
        %v1437 = vmul.f32 %v1369, %v1424
        %v1438 = vmul.f32 %v1370, %v1424
        %v1439 = vmul.f32 %v1371, %v1424
        %v1440 = vmul.f32 %v1372, %v1424
        %v1457 = vrot.slane %v1425, 1
        %v1458 = vrot.slane %v1426, 1
        %v1459 = vsel %vm443, %v1457, %v1458
        %v1460 = vrot.slane %v1427, 1
        %v1461 = vrot.slane %v1428, 1
        %v1462 = vsel %vm443, %v1460, %v1461
        %v1463 = vrot.slane %v1429, 1
        %v1464 = vrot.slane %v1430, 1
        %v1465 = vsel %vm443, %v1463, %v1464
        %v1466 = vrot.slane %v1431, 1
        %v1467 = vrot.slane %v1432, 1
        %v1468 = vsel %vm443, %v1466, %v1467
        %v1469 = vrot.slane %v1433, 1
        %v1470 = vrot.slane %v1434, 1
        %v1471 = vsel %vm443, %v1469, %v1470
        %v1472 = vrot.slane %v1435, 1
        %v1473 = vrot.slane %v1436, 1
        %v1474 = vsel %vm443, %v1472, %v1473
        %v1475 = vrot.slane %v1437, 1
        %v1476 = vrot.slane %v1438, 1
        %v1477 = vsel %vm443, %v1475, %v1476
        %v1478 = vrot.slane %v1439, 1
        %v1479 = vrot.slane %v1440, 1
        %v1480 = vsel %vm443, %v1478, %v1479
        %v1489 = vadd.f32 %v1382, %v1459
        %v1490 = vadd.f32 %v1383, %v1462
        %v1491 = vadd.f32 %v1384, %v1465
        %v1492 = vadd.f32 %v1385, %v1468
        %v1493 = vadd.f32 %v1386, %v1471
        %v1494 = vadd.f32 %v1387, %v1474
        %v1495 = vadd.f32 %v1388, %v1477
        %v1496 = vadd.f32 %v1389, %v1480
        %v1497 = vperm.slane %v363, 1
        %v1498 = vmul.f32 %v1357, %v1497
        %v1499 = vmul.f32 %v1358, %v1497
        %v1500 = vmul.f32 %v1359, %v1497
        %v1501 = vmul.f32 %v1360, %v1497
        %v1502 = vmul.f32 %v1361, %v1497
        %v1503 = vmul.f32 %v1362, %v1497
        %v1504 = vmul.f32 %v1363, %v1497
        %v1505 = vmul.f32 %v1364, %v1497
        %v1506 = vmul.f32 %v1365, %v1497
        %v1507 = vmul.f32 %v1366, %v1497
        %v1508 = vmul.f32 %v1367, %v1497
        %v1509 = vmul.f32 %v1368, %v1497
        %v1510 = vmul.f32 %v1369, %v1497
        %v1511 = vmul.f32 %v1370, %v1497
        %v1512 = vmul.f32 %v1371, %v1497
        %v1513 = vmul.f32 %v1372, %v1497
        %v1530 = vrot.slane %v1498, 1
        %v1531 = vrot.slane %v1499, 1
        %v1532 = vsel %vm443, %v1530, %v1531
        %v1533 = vrot.slane %v1500, 1
        %v1534 = vrot.slane %v1501, 1
        %v1535 = vsel %vm443, %v1533, %v1534
        %v1536 = vrot.slane %v1502, 1
        %v1537 = vrot.slane %v1503, 1
        %v1538 = vsel %vm443, %v1536, %v1537
        %v1539 = vrot.slane %v1504, 1
        %v1540 = vrot.slane %v1505, 1
        %v1541 = vsel %vm443, %v1539, %v1540
        %v1542 = vrot.slane %v1506, 1
        %v1543 = vrot.slane %v1507, 1
        %v1544 = vsel %vm443, %v1542, %v1543
        %v1545 = vrot.slane %v1508, 1
        %v1546 = vrot.slane %v1509, 1
        %v1547 = vsel %vm443, %v1545, %v1546
        %v1548 = vrot.slane %v1510, 1
        %v1549 = vrot.slane %v1511, 1
        %v1550 = vsel %vm443, %v1548, %v1549
        %v1551 = vrot.slane %v1512, 1
        %v1552 = vrot.slane %v1513, 1
        %v1553 = vsel %vm443, %v1551, %v1552
        %v1562 = vadd.f32 %v1399, %v1532
        %v1563 = vadd.f32 %v1400, %v1535
        %v1564 = vadd.f32 %v1401, %v1538
        %v1565 = vadd.f32 %v1402, %v1541
        %v1566 = vadd.f32 %v1403, %v1544
        %v1567 = vadd.f32 %v1404, %v1547
        %v1568 = vadd.f32 %v1405, %v1550
        %v1569 = vadd.f32 %v1406, %v1553
        %v1570 = vperm.slane %v366, 1
        %v1571 = vmul.f32 %v1357, %v1570
        %v1572 = vmul.f32 %v1358, %v1570
        %v1573 = vmul.f32 %v1359, %v1570
        %v1574 = vmul.f32 %v1360, %v1570
        %v1575 = vmul.f32 %v1361, %v1570
        %v1576 = vmul.f32 %v1362, %v1570
        %v1577 = vmul.f32 %v1363, %v1570
        %v1578 = vmul.f32 %v1364, %v1570
        %v1579 = vmul.f32 %v1365, %v1570
        %v1580 = vmul.f32 %v1366, %v1570
        %v1581 = vmul.f32 %v1367, %v1570
        %v1582 = vmul.f32 %v1368, %v1570
        %v1583 = vmul.f32 %v1369, %v1570
        %v1584 = vmul.f32 %v1370, %v1570
        %v1585 = vmul.f32 %v1371, %v1570
        %v1586 = vmul.f32 %v1372, %v1570
        %v1603 = vrot.slane %v1571, 1
        %v1604 = vrot.slane %v1572, 1
        %v1605 = vsel %vm443, %v1603, %v1604
        %v1606 = vrot.slane %v1573, 1
        %v1607 = vrot.slane %v1574, 1
        %v1608 = vsel %vm443, %v1606, %v1607
        %v1609 = vrot.slane %v1575, 1
        %v1610 = vrot.slane %v1576, 1
        %v1611 = vsel %vm443, %v1609, %v1610
        %v1612 = vrot.slane %v1577, 1
        %v1613 = vrot.slane %v1578, 1
        %v1614 = vsel %vm443, %v1612, %v1613
        %v1615 = vrot.slane %v1579, 1
        %v1616 = vrot.slane %v1580, 1
        %v1617 = vsel %vm443, %v1615, %v1616
        %v1618 = vrot.slane %v1581, 1
        %v1619 = vrot.slane %v1582, 1
        %v1620 = vsel %vm443, %v1618, %v1619
        %v1621 = vrot.slane %v1583, 1
        %v1622 = vrot.slane %v1584, 1
        %v1623 = vsel %vm443, %v1621, %v1622
        %v1624 = vrot.slane %v1585, 1
        %v1625 = vrot.slane %v1586, 1
        %v1626 = vsel %vm443, %v1624, %v1625
        %v1635 = vadd.f32 %v1416, %v1605
        %v1636 = vadd.f32 %v1417, %v1608
        %v1637 = vadd.f32 %v1418, %v1611
        %v1638 = vadd.f32 %v1419, %v1614
        %v1639 = vadd.f32 %v1420, %v1617
        %v1640 = vadd.f32 %v1421, %v1620
        %v1641 = vadd.f32 %v1422, %v1623
        %v1642 = vadd.f32 %v1423, %v1626
        %v1643 = vperm.slane %v360, 2
        %v1644 = vmul.f32 %v1357, %v1643
        %v1645 = vmul.f32 %v1358, %v1643
        %v1646 = vmul.f32 %v1359, %v1643
        %v1647 = vmul.f32 %v1360, %v1643
        %v1648 = vmul.f32 %v1361, %v1643
        %v1649 = vmul.f32 %v1362, %v1643
        %v1650 = vmul.f32 %v1363, %v1643
        %v1651 = vmul.f32 %v1364, %v1643
        %v1652 = vmul.f32 %v1365, %v1643
        %v1653 = vmul.f32 %v1366, %v1643
        %v1654 = vmul.f32 %v1367, %v1643
        %v1655 = vmul.f32 %v1368, %v1643
        %v1656 = vmul.f32 %v1369, %v1643
        %v1657 = vmul.f32 %v1370, %v1643
        %v1658 = vmul.f32 %v1371, %v1643
        %v1659 = vmul.f32 %v1372, %v1643
        %v1676 = vrot.slane %v1644, 2
        %v1677 = vrot.slane %v1645, 2
        %v1678 = vsel %vm663, %v1676, %v1677
        %v1679 = vrot.slane %v1646, 2
        %v1680 = vrot.slane %v1647, 2
        %v1681 = vsel %vm663, %v1679, %v1680
        %v1682 = vrot.slane %v1648, 2
        %v1683 = vrot.slane %v1649, 2
        %v1684 = vsel %vm663, %v1682, %v1683
        %v1685 = vrot.slane %v1650, 2
        %v1686 = vrot.slane %v1651, 2
        %v1687 = vsel %vm663, %v1685, %v1686
        %v1688 = vrot.slane %v1652, 2
        %v1689 = vrot.slane %v1653, 2
        %v1690 = vsel %vm663, %v1688, %v1689
        %v1691 = vrot.slane %v1654, 2
        %v1692 = vrot.slane %v1655, 2
        %v1693 = vsel %vm663, %v1691, %v1692
        %v1694 = vrot.slane %v1656, 2
        %v1695 = vrot.slane %v1657, 2
        %v1696 = vsel %vm663, %v1694, %v1695
        %v1697 = vrot.slane %v1658, 2
        %v1698 = vrot.slane %v1659, 2
        %v1699 = vsel %vm663, %v1697, %v1698
        %v1708 = vadd.f32 %v1489, %v1678
        %v1709 = vadd.f32 %v1490, %v1681
        %v1710 = vadd.f32 %v1491, %v1684
        %v1711 = vadd.f32 %v1492, %v1687
        %v1712 = vadd.f32 %v1493, %v1690
        %v1713 = vadd.f32 %v1494, %v1693
        %v1714 = vadd.f32 %v1495, %v1696
        %v1715 = vadd.f32 %v1496, %v1699
        %v1716 = vperm.slane %v363, 2
        %v1717 = vmul.f32 %v1357, %v1716
        %v1718 = vmul.f32 %v1358, %v1716
        %v1719 = vmul.f32 %v1359, %v1716
        %v1720 = vmul.f32 %v1360, %v1716
        %v1721 = vmul.f32 %v1361, %v1716
        %v1722 = vmul.f32 %v1362, %v1716
        %v1723 = vmul.f32 %v1363, %v1716
        %v1724 = vmul.f32 %v1364, %v1716
        %v1725 = vmul.f32 %v1365, %v1716
        %v1726 = vmul.f32 %v1366, %v1716
        %v1727 = vmul.f32 %v1367, %v1716
        %v1728 = vmul.f32 %v1368, %v1716
        %v1729 = vmul.f32 %v1369, %v1716
        %v1730 = vmul.f32 %v1370, %v1716
        %v1731 = vmul.f32 %v1371, %v1716
        %v1732 = vmul.f32 %v1372, %v1716
        %v1749 = vrot.slane %v1717, 2
        %v1750 = vrot.slane %v1718, 2
        %v1751 = vsel %vm663, %v1749, %v1750
        %v1752 = vrot.slane %v1719, 2
        %v1753 = vrot.slane %v1720, 2
        %v1754 = vsel %vm663, %v1752, %v1753
        %v1755 = vrot.slane %v1721, 2
        %v1756 = vrot.slane %v1722, 2
        %v1757 = vsel %vm663, %v1755, %v1756
        %v1758 = vrot.slane %v1723, 2
        %v1759 = vrot.slane %v1724, 2
        %v1760 = vsel %vm663, %v1758, %v1759
        %v1761 = vrot.slane %v1725, 2
        %v1762 = vrot.slane %v1726, 2
        %v1763 = vsel %vm663, %v1761, %v1762
        %v1764 = vrot.slane %v1727, 2
        %v1765 = vrot.slane %v1728, 2
        %v1766 = vsel %vm663, %v1764, %v1765
        %v1767 = vrot.slane %v1729, 2
        %v1768 = vrot.slane %v1730, 2
        %v1769 = vsel %vm663, %v1767, %v1768
        %v1770 = vrot.slane %v1731, 2
        %v1771 = vrot.slane %v1732, 2
        %v1772 = vsel %vm663, %v1770, %v1771
        %v1781 = vadd.f32 %v1562, %v1751
        %v1782 = vadd.f32 %v1563, %v1754
        %v1783 = vadd.f32 %v1564, %v1757
        %v1784 = vadd.f32 %v1565, %v1760
        %v1785 = vadd.f32 %v1566, %v1763
        %v1786 = vadd.f32 %v1567, %v1766
        %v1787 = vadd.f32 %v1568, %v1769
        %v1788 = vadd.f32 %v1569, %v1772
        %v1789 = vperm.slane %v366, 2
        %v1790 = vmul.f32 %v1357, %v1789
        %v1791 = vmul.f32 %v1358, %v1789
        %v1792 = vmul.f32 %v1359, %v1789
        %v1793 = vmul.f32 %v1360, %v1789
        %v1794 = vmul.f32 %v1361, %v1789
        %v1795 = vmul.f32 %v1362, %v1789
        %v1796 = vmul.f32 %v1363, %v1789
        %v1797 = vmul.f32 %v1364, %v1789
        %v1798 = vmul.f32 %v1365, %v1789
        %v1799 = vmul.f32 %v1366, %v1789
        %v1800 = vmul.f32 %v1367, %v1789
        %v1801 = vmul.f32 %v1368, %v1789
        %v1802 = vmul.f32 %v1369, %v1789
        %v1803 = vmul.f32 %v1370, %v1789
        %v1804 = vmul.f32 %v1371, %v1789
        %v1805 = vmul.f32 %v1372, %v1789
        %v1822 = vrot.slane %v1790, 2
        %v1823 = vrot.slane %v1791, 2
        %v1824 = vsel %vm663, %v1822, %v1823
        %v1825 = vrot.slane %v1792, 2
        %v1826 = vrot.slane %v1793, 2
        %v1827 = vsel %vm663, %v1825, %v1826
        %v1828 = vrot.slane %v1794, 2
        %v1829 = vrot.slane %v1795, 2
        %v1830 = vsel %vm663, %v1828, %v1829
        %v1831 = vrot.slane %v1796, 2
        %v1832 = vrot.slane %v1797, 2
        %v1833 = vsel %vm663, %v1831, %v1832
        %v1834 = vrot.slane %v1798, 2
        %v1835 = vrot.slane %v1799, 2
        %v1836 = vsel %vm663, %v1834, %v1835
        %v1837 = vrot.slane %v1800, 2
        %v1838 = vrot.slane %v1801, 2
        %v1839 = vsel %vm663, %v1837, %v1838
        %v1840 = vrot.slane %v1802, 2
        %v1841 = vrot.slane %v1803, 2
        %v1842 = vsel %vm663, %v1840, %v1841
        %v1843 = vrot.slane %v1804, 2
        %v1844 = vrot.slane %v1805, 2
        %v1845 = vsel %vm663, %v1843, %v1844
        %v1854 = vadd.f32 %v1635, %v1824
        %v1855 = vadd.f32 %v1636, %v1827
        %v1856 = vadd.f32 %v1637, %v1830
        %v1857 = vadd.f32 %v1638, %v1833
        %v1858 = vadd.f32 %v1639, %v1836
        %v1859 = vadd.f32 %v1640, %v1839
        %v1860 = vadd.f32 %v1641, %v1842
        %v1861 = vadd.f32 %v1642, %v1845
        %v1862 = vmul.f32 %v1708, %v1708
        %v1863 = vmul.f32 %v1709, %v1709
        %v1864 = vmul.f32 %v1710, %v1710
        %v1865 = vmul.f32 %v1711, %v1711
        %v1866 = vmul.f32 %v1712, %v1712
        %v1867 = vmul.f32 %v1713, %v1713
        %v1868 = vmul.f32 %v1714, %v1714
        %v1869 = vmul.f32 %v1715, %v1715
        %vm1870 = vcmask 261120
        %v1871 = vsel %vm1870, %v1862, 0.0
        %v1872 = vsel %vm1870, %v1863, 0.0
        %v1873 = vadd.f32 %v1871, %v1872
        %v1874 = vsel %vm1870, %v1864, 0.0
        %v1875 = vadd.f32 %v1873, %v1874
        %v1876 = vsel %vm1870, %v1865, 0.0
        %v1877 = vadd.f32 %v1875, %v1876
        %v1878 = vsel %vm1870, %v1866, 0.0
        %v1879 = vadd.f32 %v1877, %v1878
        %v1880 = vsel %vm1870, %v1867, 0.0
        %v1881 = vadd.f32 %v1879, %v1880
        %v1882 = vsel %vm1870, %v1868, 0.0
        %v1883 = vadd.f32 %v1881, %v1882
        %v1884 = vsel %vm1870, %v1869, 0.0
        %v1885 = vadd.f32 %v1883, %v1884
        %v1886 = vrot.slane %v1885, 4
        %v1887 = vadd.f32 %v1885, %v1886
        %v1888 = vrot.slane %v1887, 2
        %v1889 = vadd.f32 %v1887, %v1888
        %v1890 = vrot.slane %v1889, 1
        %v1891 = vadd.f32 %v1889, %v1890
        %v1892 = vmax.f32 %v1891, 1e-24
        %v1893 = vrsqrt.pop %v1892
        %v1894 = vmul.f32 %v1893, %v1892
        %v1895 = vmul.f32 %v1894, %v1893
        %v1896 = vmul.f32 0.5, %v1895
        %v1897 = vsub.f32 1.5, %v1896
        %v1898 = vmul.f32 %v1893, %v1897
        %vm1899 = vweird.f32 %v1892
        %vm1900 = vweird.f32 %v1893
        %vm1901 = vmor %vm1899, %vm1900
        %v1902 = vsel %vm1901, %v1893, %v1898
        %v1903 = vmul.f32 %v1708, %v1902
        %v1904 = vmul.f32 %v1709, %v1902
        %v1905 = vmul.f32 %v1710, %v1902
        %v1906 = vmul.f32 %v1711, %v1902
        %v1907 = vmul.f32 %v1712, %v1902
        %v1908 = vmul.f32 %v1713, %v1902
        %v1909 = vmul.f32 %v1714, %v1902
        %v1910 = vmul.f32 %v1715, %v1902
        %v1911 = vmul.f32 %v1781, %v1781
        %v1912 = vmul.f32 %v1782, %v1782
        %v1913 = vmul.f32 %v1783, %v1783
        %v1914 = vmul.f32 %v1784, %v1784
        %v1915 = vmul.f32 %v1785, %v1785
        %v1916 = vmul.f32 %v1786, %v1786
        %v1917 = vmul.f32 %v1787, %v1787
        %v1918 = vmul.f32 %v1788, %v1788
        %v1919 = vsel %vm1870, %v1911, 0.0
        %v1920 = vsel %vm1870, %v1912, 0.0
        %v1921 = vadd.f32 %v1919, %v1920
        %v1922 = vsel %vm1870, %v1913, 0.0
        %v1923 = vadd.f32 %v1921, %v1922
        %v1924 = vsel %vm1870, %v1914, 0.0
        %v1925 = vadd.f32 %v1923, %v1924
        %v1926 = vsel %vm1870, %v1915, 0.0
        %v1927 = vadd.f32 %v1925, %v1926
        %v1928 = vsel %vm1870, %v1916, 0.0
        %v1929 = vadd.f32 %v1927, %v1928
        %v1930 = vsel %vm1870, %v1917, 0.0
        %v1931 = vadd.f32 %v1929, %v1930
        %v1932 = vsel %vm1870, %v1918, 0.0
        %v1933 = vadd.f32 %v1931, %v1932
        %v1934 = vrot.slane %v1933, 4
        %v1935 = vadd.f32 %v1933, %v1934
        %v1936 = vrot.slane %v1935, 2
        %v1937 = vadd.f32 %v1935, %v1936
        %v1938 = vrot.slane %v1937, 1
        %v1939 = vadd.f32 %v1937, %v1938
        %v1940 = vmax.f32 %v1939, 1e-24
        %v1941 = vrsqrt.pop %v1940
        %v1942 = vmul.f32 %v1941, %v1940
        %v1943 = vmul.f32 %v1942, %v1941
        %v1944 = vmul.f32 0.5, %v1943
        %v1945 = vsub.f32 1.5, %v1944
        %v1946 = vmul.f32 %v1941, %v1945
        %vm1947 = vweird.f32 %v1940
        %vm1948 = vweird.f32 %v1941
        %vm1949 = vmor %vm1947, %vm1948
        %v1950 = vsel %vm1949, %v1941, %v1946
        %v1951 = vmul.f32 %v1781, %v1950
        %v1952 = vmul.f32 %v1782, %v1950
        %v1953 = vmul.f32 %v1783, %v1950
        %v1954 = vmul.f32 %v1784, %v1950
        %v1955 = vmul.f32 %v1785, %v1950
        %v1956 = vmul.f32 %v1786, %v1950
        %v1957 = vmul.f32 %v1787, %v1950
        %v1958 = vmul.f32 %v1788, %v1950
        %1959 = vxpose.xlu0.b32.start [1/16] %v1951, 128
        %1960 = vxpose.xlu0.b32.cont [2/16] %v1952, 128
        %1961 = vxpose.xlu0.b32.cont [3/16] %v1953, 128
        %1962 = vxpose.xlu0.b32.cont [4/16] %v1954, 128
        %1963 = vxpose.xlu0.b32.cont [5/16] %v1955, 128
        %1964 = vxpose.xlu0.b32.cont [6/16] %v1956, 128
        %1965 = vxpose.xlu0.b32.cont [7/16] %v1957, 128
        %1966 = vxpose.xlu0.b32.cont [8/16] %v1958, 128
        %1967 = vxpose.xlu0.b32.cont [9/16] 0.0, 128
        %1968 = vxpose.xlu0.b32.cont [10/16] 0.0, 128
        %1969 = vxpose.xlu0.b32.cont [11/16] 0.0, 128
        %1970 = vxpose.xlu0.b32.cont [12/16] 0.0, 128
        %1971 = vxpose.xlu0.b32.cont [13/16] 0.0, 128
        %1972 = vxpose.xlu0.b32.cont [14/16] 0.0, 128
        %1973 = vxpose.xlu0.b32.cont [15/16] 0.0, 128
        %1974 = vxpose.xlu0.b32.end [16/16] 0.0, 128
        %v1975 = vpop.trf.xlu0
        %v1976 = vpop.trf.xlu0
        %v1977 = vpop.trf.xlu0
        %v1978 = vpop.trf.xlu0
        %v1979 = vpop.trf.xlu0
        %v1980 = vpop.trf.xlu0
        %v1981 = vpop.trf.xlu0
        %v1982 = vpop.trf.xlu0
        %v1983 = vpop.trf.xlu0
        %v1984 = vpop.trf.xlu0
        %v1985 = vpop.trf.xlu0
        %v1986 = vpop.trf.xlu0
        %v1987 = vpop.trf.xlu0
        %v1988 = vpop.trf.xlu0
        %v1989 = vpop.trf.xlu0
        %v1990 = vpop.trf.xlu0
        %vm1991 = vcmask 523264
        %v1993 = vsel %vm1991, %v1975, 0
        %v1996 = vsel %vm1991, %v1976, 0
        %v1999 = vsel %vm1991, %v1977, 0
        %v2002 = vsel %vm1991, %v1978, 0
        %2004 = vmatpush.msra.mxu0 0.0
        %2005 = vmatpush.msra.mxu0 0.0
        %2006 = vmatpush.msra.mxu0 0.0
        %2007 = vmatpush.msra.mxu0 0.0
        %2008 = vmatpush.msra.mxu0 0.0
        %2009 = vmatpush.msra.mxu0 0.0
        %2010 = vmatpush.msra.mxu0 0.0
        %2011 = vmatpush.msra.mxu0 0.0
        %2012 = vmatpush.msra.mxu0 %v1910
        %2013 = vmatpush.msra.mxu0 %v1909
        %2014 = vmatpush.msra.mxu0 %v1908
        %2015 = vmatpush.msra.mxu0 %v1907
        %2016 = vmatpush.msra.mxu0 %v1906
        %2017 = vmatpush.msra.mxu0 %v1905
        %2018 = vmatpush.msra.mxu0 %v1904
        %2019 = vmatpush.msra.mxu0 %v1903
        %2020 = vmatmul.f32.gmra.mxu0 %v1993
        %v2021 = vpop.f32.mrf.mxu0
        %v2022 = vadd.f32 0.0, %v2021
        %2023 = vmatmul.f32.gmra.mxu0 %v1996
        %v2024 = vpop.f32.mrf.mxu0
        %v2025 = vadd.f32 0.0, %v2024
        %2026 = vmatmul.f32.gmra.mxu0 %v1999
        %v2027 = vpop.f32.mrf.mxu0
        %v2028 = vadd.f32 0.0, %v2027
        %2029 = vmatmul.f32.gmra.mxu0 %v2002
        %v2030 = vpop.f32.mrf.mxu0
        %v2031 = vadd.f32 0.0, %v2030
        %2032 = vdwg.mxu0
        %v2033 = vld [vmem:[%s8] sm:$0x1]
        %v2035 = vperm.slane %v2033, 0
        %v2037 = vmul.f32 %v2022, %v2035
        %v2038 = vmul.f32 %v2025, %v2035
        %v2039 = vmul.f32 %v2028, %v2035
        %v2040 = vmul.f32 %v2031, %v2035
        %v2041 = vld [vmem:[%s9] sm:$0xff]
        %v2042 = vld [vmem:[%s9 + $0x8] sm:$0xff]
        %v2043 = vld [vmem:[%s9 + $0x10] sm:$0xff]
        %v2044 = vld [vmem:[%s9 + $0x18] sm:$0xff]
        %v2045 = vadd.f32 %v2037, %v2041
        %v2046 = vadd.f32 %v2038, %v2042
        %v2047 = vadd.f32 %v2039, %v2043
        %v2048 = vadd.f32 %v2040, %v2044
        %v2049 = vsel %vm1870, %v2045, -inf
        %2050 = vmax.xlane.f32.xlu0 %v2049
        %v2051 = vpop.xlane.xlu0 %2050
        %v2052 = vsel %vm1870, %v2046, -inf
        %2053 = vmax.xlane.f32.xlu0 %v2052
        %v2054 = vpop.xlane.xlu0 %2053
        %v2055 = vsel %vm1870, %v2047, -inf
        %2056 = vmax.xlane.f32.xlu0 %v2055
        %v2057 = vpop.xlane.xlu0 %2056
        %v2058 = vsel %vm1870, %v2048, -inf
        %2059 = vmax.xlane.f32.xlu0 %v2058
        %v2060 = vpop.xlane.xlu0 %2059
        %v2061 = vsub.f32 %v2045, %v2051
        %v2062 = vsub.f32 %v2046, %v2054
        %v2063 = vsub.f32 %v2047, %v2057
        %v2064 = vsub.f32 %v2048, %v2060
        %v2065 = vmul.f32 %v2061, 1.442695
        %v2066 = vpow.pop %v2065
        %v2067 = vmul.f32 %v2062, 1.442695
        %v2068 = vpow.pop %v2067
        %v2069 = vmul.f32 %v2063, 1.442695
        %v2070 = vpow.pop %v2069
        %v2071 = vmul.f32 %v2064, 1.442695
        %v2072 = vpow.pop %v2071
        %v2073 = vsel %vm1870, %v2066, 0.0
        %2074 = vadd.xlane.f32.xlu0 %v2073
        %v2075 = vpop.xlane.xlu0 %2074
        %v2076 = vsel %vm1870, %v2068, 0.0
        %2077 = vadd.xlane.f32.xlu0 %v2076
        %v2078 = vpop.xlane.xlu0 %2077
        %v2079 = vsel %vm1870, %v2070, 0.0
        %2080 = vadd.xlane.f32.xlu0 %v2079
        %v2081 = vpop.xlane.xlu0 %2080
        %v2082 = vsel %vm1870, %v2072, 0.0
        %2083 = vadd.xlane.f32.xlu0 %v2082
        %v2084 = vpop.xlane.xlu0 %2083
        %v2085 = vrcp.pop %v2075
        %v2086 = vrcp.pop %v2078
        %v2087 = vrcp.pop %v2081
        %v2088 = vrcp.pop %v2084
        %v2089 = vmul.f32 %v2066, %v2085
        %v2090 = vmul.f32 %v2068, %v2086
        %v2091 = vmul.f32 %v2070, %v2087
        %v2092 = vmul.f32 %v2072, %v2088
        %v2094 = vsel %vm1870, %v1854, 0
        %v2097 = vsel %vm1870, %v1855, 0
        %v2100 = vsel %vm1870, %v1856, 0
        %v2103 = vsel %vm1870, %v1857, 0
        %v2106 = vsel %vm1870, %v1858, 0
        %v2109 = vsel %vm1870, %v1859, 0
        %v2112 = vsel %vm1870, %v1860, 0
        %v2115 = vsel %vm1870, %v1861, 0
        %v2118 = vsel %vm1870, %v2089, 0
        %v2121 = vsel %vm1870, %v2090, 0
        %v2124 = vsel %vm1870, %v2091, 0
        %v2127 = vsel %vm1870, %v2092, 0
        %2129 = vmatpush.xpose.msra.mxu0 0.0
        %2130 = vmatpush.xpose.msra.mxu0 0.0
        %2131 = vmatpush.xpose.msra.mxu0 0.0
        %2132 = vmatpush.xpose.msra.mxu0 0.0
        %2133 = vmatpush.xpose.msra.mxu0 0.0
        %2134 = vmatpush.xpose.msra.mxu0 0.0
        %2135 = vmatpush.xpose.msra.mxu0 0.0
        %2136 = vmatpush.xpose.msra.mxu0 0.0
        %2137 = vmatpush.xpose.msra.mxu0 0.0
        %2138 = vmatpush.xpose.msra.mxu0 0.0
        %2139 = vmatpush.xpose.msra.mxu0 0.0
        %2140 = vmatpush.xpose.msra.mxu0 0.0
        %2141 = vmatpush.xpose.msra.mxu0 %v2127
        %2142 = vmatpush.xpose.msra.mxu0 %v2124
        %2143 = vmatpush.xpose.msra.mxu0 %v2121
        %2144 = vmatpush.xpose.msra.mxu0 %v2118
        %2145 = vmatmul.f32.gmra.mxu0 %v2094
        %v2146 = vpop.f32.mrf.mxu0
        %v2147 = vadd.f32 0.0, %v2146
        %2148 = vmatmul.f32.gmra.mxu0 %v2097
        %v2149 = vpop.f32.mrf.mxu0
        %v2150 = vadd.f32 0.0, %v2149
        %2151 = vmatmul.f32.gmra.mxu0 %v2100
        %v2152 = vpop.f32.mrf.mxu0
        %v2153 = vadd.f32 0.0, %v2152
        %2154 = vmatmul.f32.gmra.mxu0 %v2103
        %v2155 = vpop.f32.mrf.mxu0
        %v2156 = vadd.f32 0.0, %v2155
        %2157 = vmatmul.f32.gmra.mxu0 %v2106
        %v2158 = vpop.f32.mrf.mxu0
        %v2159 = vadd.f32 0.0, %v2158
        %2160 = vmatmul.f32.gmra.mxu0 %v2109
        %v2161 = vpop.f32.mrf.mxu0
        %v2162 = vadd.f32 0.0, %v2161
        %2163 = vmatmul.f32.gmra.mxu0 %v2112
        %v2164 = vpop.f32.mrf.mxu0
        %v2165 = vadd.f32 0.0, %v2164
        %2166 = vmatmul.f32.gmra.mxu0 %v2115
        %v2167 = vpop.f32.mrf.mxu0
        %v2168 = vadd.f32 0.0, %v2167
        %2169 = vdwg.mxu0
        %v2170 = vld [vmem:[%s6] sm:$0xff]
        %v2171 = vld [vmem:[%s6 + $0x8] sm:$0xff]
        %v2172 = vld [vmem:[%s6 + $0x10] sm:$0xff]
        %v2173 = vld [vmem:[%s6 + $0x18] sm:$0xff]
        %v2174 = vld [vmem:[%s7] sm:$0x1]
        %v2176 = vperm.slane %v2174, 0
        %v2179 = vsel %vm1870, %v2147, 0
        %v2182 = vsel %vm1870, %v2150, 0
        %v2185 = vsel %vm1870, %v2153, 0
        %v2188 = vsel %vm1870, %v2156, 0
        %v2191 = vsel %vm1870, %v2159, 0
        %v2194 = vsel %vm1870, %v2162, 0
        %v2197 = vsel %vm1870, %v2165, 0
        %v2200 = vsel %vm1870, %v2168, 0
        %2202 = vmatpush.msra.mxu0 0.0
        %2203 = vmatpush.msra.mxu0 0.0
        %2204 = vmatpush.msra.mxu0 0.0
        %2205 = vmatpush.msra.mxu0 0.0
        %2206 = vmatpush.msra.mxu0 0.0
        %2207 = vmatpush.msra.mxu0 0.0
        %2208 = vmatpush.msra.mxu0 0.0
        %2209 = vmatpush.msra.mxu0 0.0
        %2210 = vmatpush.msra.mxu0 0.0
        %2211 = vmatpush.msra.mxu0 0.0
        %2212 = vmatpush.msra.mxu0 0.0
        %2213 = vmatpush.msra.mxu0 0.0
        %2214 = vmatpush.msra.mxu0 %v2173
        %2215 = vmatpush.msra.mxu0 %v2172
        %2216 = vmatpush.msra.mxu0 %v2171
        %2217 = vmatpush.msra.mxu0 %v2170
        %2218 = vmatmul.f32.gmra.mxu0 %v2179
        %v2219 = vpop.f32.mrf.mxu0
        %v2220 = vadd.f32 %v2176, %v2219
        %2221 = vmatmul.f32.gmra.mxu0 %v2182
        %v2222 = vpop.f32.mrf.mxu0
        %v2223 = vadd.f32 %v2176, %v2222
        %2224 = vmatmul.f32.gmra.mxu0 %v2185
        %v2225 = vpop.f32.mrf.mxu0
        %v2226 = vadd.f32 %v2176, %v2225
        %2227 = vmatmul.f32.gmra.mxu0 %v2188
        %v2228 = vpop.f32.mrf.mxu0
        %v2229 = vadd.f32 %v2176, %v2228
        %2230 = vmatmul.f32.gmra.mxu0 %v2191
        %v2231 = vpop.f32.mrf.mxu0
        %v2232 = vadd.f32 %v2176, %v2231
        %2233 = vmatmul.f32.gmra.mxu0 %v2194
        %v2234 = vpop.f32.mrf.mxu0
        %v2235 = vadd.f32 %v2176, %v2234
        %2236 = vmatmul.f32.gmra.mxu0 %v2197
        %v2237 = vpop.f32.mrf.mxu0
        %v2238 = vadd.f32 %v2176, %v2237
        %2239 = vmatmul.f32.gmra.mxu0 %v2200
        %v2240 = vpop.f32.mrf.mxu0
        %v2241 = vadd.f32 %v2176, %v2240
        %2242 = vdwg.mxu0
        %2243 = vst.msk [vmem:[#allocation2] sm:$0xff] %vm1870, 0.0
        %vm2244 = vcmask 254976
        %2245 = vst.msk [vmem:[#allocation2 + $0x8] sm:$0x3] %vm2244, 0.0
        %s2246 = scalar_lea.vmem [#allocation2], 144
        %2247 = vst.msk [vmem:[%s2246] sm:$0xff] %vm1870, 0.0
        %2248 = vst.msk [vmem:[%s2246 + $0x8] sm:$0x3] %vm2244, 0.0
        %s2249 = scalar_lea.vmem [#allocation2], 16
        %vm2250 = vcmask 253952
        %2251 = vst.msk [vmem:[%s2249] sm:$0x1] %vm2250, 0.0
        %2252 = vst.msk [vmem:[%s2249 + $0x10] sm:$0x1] %vm2250, 0.0
        %2253 = vst.msk [vmem:[%s2249 + $0x20] sm:$0x1] %vm2250, 0.0
        %2254 = vst.msk [vmem:[%s2249 + $0x30] sm:$0x1] %vm2250, 0.0
        %2255 = vst.msk [vmem:[%s2249 + $0x40] sm:$0x1] %vm2250, 0.0
        %2256 = vst.msk [vmem:[%s2249 + $0x50] sm:$0x1] %vm2250, 0.0
        %2257 = vst.msk [vmem:[%s2249 + $0x60] sm:$0x1] %vm2250, 0.0
        %2258 = vst.msk [vmem:[%s2249 + $0x70] sm:$0x1] %vm2250, 0.0
        %2259 = vst.msk [vmem:[%s2249 + $0x9] sm:$0x1] %vm2250, 0.0
        %2260 = vst.msk [vmem:[%s2249 + $0x19] sm:$0x1] %vm2250, 0.0
        %2261 = vst.msk [vmem:[%s2249 + $0x29] sm:$0x1] %vm2250, 0.0
        %2262 = vst.msk [vmem:[%s2249 + $0x39] sm:$0x1] %vm2250, 0.0
        %2263 = vst.msk [vmem:[%s2249 + $0x49] sm:$0x1] %vm2250, 0.0
        %2264 = vst.msk [vmem:[%s2249 + $0x59] sm:$0x1] %vm2250, 0.0
        %2265 = vst.msk [vmem:[%s2249 + $0x69] sm:$0x1] %vm2250, 0.0
        %2266 = vst.msk [vmem:[%s2249 + $0x79] sm:$0x1] %vm2250, 0.0
        %2267 = vst.msk [vmem:[%s2249 + $0x1] sm:$0xff] %vm1870, %v1854
        %2268 = vst.msk [vmem:[%s2249 + $0x11] sm:$0xff] %vm1870, %v1855
        %2269 = vst.msk [vmem:[%s2249 + $0x21] sm:$0xff] %vm1870, %v1856
        %2270 = vst.msk [vmem:[%s2249 + $0x31] sm:$0xff] %vm1870, %v1857
        %2271 = vst.msk [vmem:[%s2249 + $0x41] sm:$0xff] %vm1870, %v1858
        %2272 = vst.msk [vmem:[%s2249 + $0x51] sm:$0xff] %vm1870, %v1859
        %2273 = vst.msk [vmem:[%s2249 + $0x61] sm:$0xff] %vm1870, %v1860
        %2274 = vst.msk [vmem:[%s2249 + $0x71] sm:$0xff] %vm1870, %v1861
        %v2275 = vld [vmem:[%s4] sm:$0x7]
        %v2276 = vld [vmem:[%s4 + $0x4] sm:$0x7]
        %v2277 = vld [vmem:[%s4 + $0x8] sm:$0x7]
        %v2278 = vld [vmem:[#allocation2] sm:$0xff]
        %v2279 = vld [vmem:[#allocation2 + $0x8] sm:$0x3]
        %v2280 = vld [vmem:[#allocation2 + $0x10] sm:$0xff]
        %v2281 = vld [vmem:[#allocation2 + $0x18] sm:$0x3]
        %v2282 = vld [vmem:[#allocation2 + $0x20] sm:$0xff]
        %v2283 = vld [vmem:[#allocation2 + $0x28] sm:$0x3]
        %v2284 = vld [vmem:[#allocation2 + $0x30] sm:$0xff]
        %v2285 = vld [vmem:[#allocation2 + $0x38] sm:$0x3]
        %v2286 = vld [vmem:[#allocation2 + $0x40] sm:$0xff]
        %v2287 = vld [vmem:[#allocation2 + $0x48] sm:$0x3]
        %v2288 = vld [vmem:[#allocation2 + $0x50] sm:$0xff]
        %v2289 = vld [vmem:[#allocation2 + $0x58] sm:$0x3]
        %v2290 = vld [vmem:[#allocation2 + $0x60] sm:$0xff]
        %v2291 = vld [vmem:[#allocation2 + $0x68] sm:$0x3]
        %v2292 = vld [vmem:[#allocation2 + $0x70] sm:$0xff]
        %v2293 = vld [vmem:[#allocation2 + $0x78] sm:$0x3]
        %v2294 = vperm.slane %v2275, 0
        %v2295 = vmul.f32 %v2278, %v2294
        %v2296 = vmul.f32 %v2280, %v2294
        %v2297 = vmul.f32 %v2282, %v2294
        %v2298 = vmul.f32 %v2284, %v2294
        %v2299 = vmul.f32 %v2286, %v2294
        %v2300 = vmul.f32 %v2288, %v2294
        %v2301 = vmul.f32 %v2290, %v2294
        %v2302 = vmul.f32 %v2292, %v2294
        %v2303 = vperm.slane %v2275, 1
        %v2304 = vmul.f32 %v2278, %v2303
        %v2305 = vmul.f32 %v2279, %v2303
        %v2306 = vmul.f32 %v2280, %v2303
        %v2307 = vmul.f32 %v2281, %v2303
        %v2308 = vmul.f32 %v2282, %v2303
        %v2309 = vmul.f32 %v2283, %v2303
        %v2310 = vmul.f32 %v2284, %v2303
        %v2311 = vmul.f32 %v2285, %v2303
        %v2312 = vmul.f32 %v2286, %v2303
        %v2313 = vmul.f32 %v2287, %v2303
        %v2314 = vmul.f32 %v2288, %v2303
        %v2315 = vmul.f32 %v2289, %v2303
        %v2316 = vmul.f32 %v2290, %v2303
        %v2317 = vmul.f32 %v2291, %v2303
        %v2318 = vmul.f32 %v2292, %v2303
        %v2319 = vmul.f32 %v2293, %v2303
        %v2336 = vrot.slane %v2304, 1
        %v2337 = vrot.slane %v2305, 1
        %v2338 = vsel %vm443, %v2336, %v2337
        %v2339 = vrot.slane %v2306, 1
        %v2340 = vrot.slane %v2307, 1
        %v2341 = vsel %vm443, %v2339, %v2340
        %v2342 = vrot.slane %v2308, 1
        %v2343 = vrot.slane %v2309, 1
        %v2344 = vsel %vm443, %v2342, %v2343
        %v2345 = vrot.slane %v2310, 1
        %v2346 = vrot.slane %v2311, 1
        %v2347 = vsel %vm443, %v2345, %v2346
        %v2348 = vrot.slane %v2312, 1
        %v2349 = vrot.slane %v2313, 1
        %v2350 = vsel %vm443, %v2348, %v2349
        %v2351 = vrot.slane %v2314, 1
        %v2352 = vrot.slane %v2315, 1
        %v2353 = vsel %vm443, %v2351, %v2352
        %v2354 = vrot.slane %v2316, 1
        %v2355 = vrot.slane %v2317, 1
        %v2356 = vsel %vm443, %v2354, %v2355
        %v2357 = vrot.slane %v2318, 1
        %v2358 = vrot.slane %v2319, 1
        %v2359 = vsel %vm443, %v2357, %v2358
        %v2368 = vadd.f32 %v2295, %v2338
        %v2369 = vadd.f32 %v2296, %v2341
        %v2370 = vadd.f32 %v2297, %v2344
        %v2371 = vadd.f32 %v2298, %v2347
        %v2372 = vadd.f32 %v2299, %v2350
        %v2373 = vadd.f32 %v2300, %v2353
        %v2374 = vadd.f32 %v2301, %v2356
        %v2375 = vadd.f32 %v2302, %v2359
        %v2376 = vperm.slane %v2275, 2
        %v2377 = vmul.f32 %v2278, %v2376
        %v2378 = vmul.f32 %v2279, %v2376
        %v2379 = vmul.f32 %v2280, %v2376
        %v2380 = vmul.f32 %v2281, %v2376
        %v2381 = vmul.f32 %v2282, %v2376
        %v2382 = vmul.f32 %v2283, %v2376
        %v2383 = vmul.f32 %v2284, %v2376
        %v2384 = vmul.f32 %v2285, %v2376
        %v2385 = vmul.f32 %v2286, %v2376
        %v2386 = vmul.f32 %v2287, %v2376
        %v2387 = vmul.f32 %v2288, %v2376
        %v2388 = vmul.f32 %v2289, %v2376
        %v2389 = vmul.f32 %v2290, %v2376
        %v2390 = vmul.f32 %v2291, %v2376
        %v2391 = vmul.f32 %v2292, %v2376
        %v2392 = vmul.f32 %v2293, %v2376
        %v2409 = vrot.slane %v2377, 2
        %v2410 = vrot.slane %v2378, 2
        %v2411 = vsel %vm663, %v2409, %v2410
        %v2412 = vrot.slane %v2379, 2
        %v2413 = vrot.slane %v2380, 2
        %v2414 = vsel %vm663, %v2412, %v2413
        %v2415 = vrot.slane %v2381, 2
        %v2416 = vrot.slane %v2382, 2
        %v2417 = vsel %vm663, %v2415, %v2416
        %v2418 = vrot.slane %v2383, 2
        %v2419 = vrot.slane %v2384, 2
        %v2420 = vsel %vm663, %v2418, %v2419
        %v2421 = vrot.slane %v2385, 2
        %v2422 = vrot.slane %v2386, 2
        %v2423 = vsel %vm663, %v2421, %v2422
        %v2424 = vrot.slane %v2387, 2
        %v2425 = vrot.slane %v2388, 2
        %v2426 = vsel %vm663, %v2424, %v2425
        %v2427 = vrot.slane %v2389, 2
        %v2428 = vrot.slane %v2390, 2
        %v2429 = vsel %vm663, %v2427, %v2428
        %v2430 = vrot.slane %v2391, 2
        %v2431 = vrot.slane %v2392, 2
        %v2432 = vsel %vm663, %v2430, %v2431
        %v2441 = vadd.f32 %v2368, %v2411
        %v2442 = vadd.f32 %v2369, %v2414
        %v2443 = vadd.f32 %v2370, %v2417
        %v2444 = vadd.f32 %v2371, %v2420
        %v2445 = vadd.f32 %v2372, %v2423
        %v2446 = vadd.f32 %v2373, %v2426
        %v2447 = vadd.f32 %v2374, %v2429
        %v2448 = vadd.f32 %v2375, %v2432
        %v2449 = vld [vmem:[%s2249] sm:$0xff]
        %v2450 = vld [vmem:[%s2249 + $0x8] sm:$0x3]
        %v2451 = vld [vmem:[%s2249 + $0x10] sm:$0xff]
        %v2452 = vld [vmem:[%s2249 + $0x18] sm:$0x3]
        %v2453 = vld [vmem:[%s2249 + $0x20] sm:$0xff]
        %v2454 = vld [vmem:[%s2249 + $0x28] sm:$0x3]
        %v2455 = vld [vmem:[%s2249 + $0x30] sm:$0xff]
        %v2456 = vld [vmem:[%s2249 + $0x38] sm:$0x3]
        %v2457 = vld [vmem:[%s2249 + $0x40] sm:$0xff]
        %v2458 = vld [vmem:[%s2249 + $0x48] sm:$0x3]
        %v2459 = vld [vmem:[%s2249 + $0x50] sm:$0xff]
        %v2460 = vld [vmem:[%s2249 + $0x58] sm:$0x3]
        %v2461 = vld [vmem:[%s2249 + $0x60] sm:$0xff]
        %v2462 = vld [vmem:[%s2249 + $0x68] sm:$0x3]
        %v2463 = vld [vmem:[%s2249 + $0x70] sm:$0xff]
        %v2464 = vld [vmem:[%s2249 + $0x78] sm:$0x3]
        %v2465 = vperm.slane %v2276, 0
        %v2466 = vmul.f32 %v2449, %v2465
        %v2467 = vmul.f32 %v2451, %v2465
        %v2468 = vmul.f32 %v2453, %v2465
        %v2469 = vmul.f32 %v2455, %v2465
        %v2470 = vmul.f32 %v2457, %v2465
        %v2471 = vmul.f32 %v2459, %v2465
        %v2472 = vmul.f32 %v2461, %v2465
        %v2473 = vmul.f32 %v2463, %v2465
        %v2474 = vadd.f32 %v2441, %v2466
        %v2475 = vadd.f32 %v2442, %v2467
        %v2476 = vadd.f32 %v2443, %v2468
        %v2477 = vadd.f32 %v2444, %v2469
        %v2478 = vadd.f32 %v2445, %v2470
        %v2479 = vadd.f32 %v2446, %v2471
        %v2480 = vadd.f32 %v2447, %v2472
        %v2481 = vadd.f32 %v2448, %v2473
        %v2482 = vperm.slane %v2276, 1
        %v2483 = vmul.f32 %v2449, %v2482
        %v2484 = vmul.f32 %v2450, %v2482
        %v2485 = vmul.f32 %v2451, %v2482
        %v2486 = vmul.f32 %v2452, %v2482
        %v2487 = vmul.f32 %v2453, %v2482
        %v2488 = vmul.f32 %v2454, %v2482
        %v2489 = vmul.f32 %v2455, %v2482
        %v2490 = vmul.f32 %v2456, %v2482
        %v2491 = vmul.f32 %v2457, %v2482
        %v2492 = vmul.f32 %v2458, %v2482
        %v2493 = vmul.f32 %v2459, %v2482
        %v2494 = vmul.f32 %v2460, %v2482
        %v2495 = vmul.f32 %v2461, %v2482
        %v2496 = vmul.f32 %v2462, %v2482
        %v2497 = vmul.f32 %v2463, %v2482
        %v2498 = vmul.f32 %v2464, %v2482
        %v2515 = vrot.slane %v2483, 1
        %v2516 = vrot.slane %v2484, 1
        %v2517 = vsel %vm443, %v2515, %v2516
        %v2518 = vrot.slane %v2485, 1
        %v2519 = vrot.slane %v2486, 1
        %v2520 = vsel %vm443, %v2518, %v2519
        %v2521 = vrot.slane %v2487, 1
        %v2522 = vrot.slane %v2488, 1
        %v2523 = vsel %vm443, %v2521, %v2522
        %v2524 = vrot.slane %v2489, 1
        %v2525 = vrot.slane %v2490, 1
        %v2526 = vsel %vm443, %v2524, %v2525
        %v2527 = vrot.slane %v2491, 1
        %v2528 = vrot.slane %v2492, 1
        %v2529 = vsel %vm443, %v2527, %v2528
        %v2530 = vrot.slane %v2493, 1
        %v2531 = vrot.slane %v2494, 1
        %v2532 = vsel %vm443, %v2530, %v2531
        %v2533 = vrot.slane %v2495, 1
        %v2534 = vrot.slane %v2496, 1
        %v2535 = vsel %vm443, %v2533, %v2534
        %v2536 = vrot.slane %v2497, 1
        %v2537 = vrot.slane %v2498, 1
        %v2538 = vsel %vm443, %v2536, %v2537
        %v2547 = vadd.f32 %v2474, %v2517
        %v2548 = vadd.f32 %v2475, %v2520
        %v2549 = vadd.f32 %v2476, %v2523
        %v2550 = vadd.f32 %v2477, %v2526
        %v2551 = vadd.f32 %v2478, %v2529
        %v2552 = vadd.f32 %v2479, %v2532
        %v2553 = vadd.f32 %v2480, %v2535
        %v2554 = vadd.f32 %v2481, %v2538
        %v2555 = vperm.slane %v2276, 2
        %v2556 = vmul.f32 %v2449, %v2555
        %v2557 = vmul.f32 %v2450, %v2555
        %v2558 = vmul.f32 %v2451, %v2555
        %v2559 = vmul.f32 %v2452, %v2555
        %v2560 = vmul.f32 %v2453, %v2555
        %v2561 = vmul.f32 %v2454, %v2555
        %v2562 = vmul.f32 %v2455, %v2555
        %v2563 = vmul.f32 %v2456, %v2555
        %v2564 = vmul.f32 %v2457, %v2555
        %v2565 = vmul.f32 %v2458, %v2555
        %v2566 = vmul.f32 %v2459, %v2555
        %v2567 = vmul.f32 %v2460, %v2555
        %v2568 = vmul.f32 %v2461, %v2555
        %v2569 = vmul.f32 %v2462, %v2555
        %v2570 = vmul.f32 %v2463, %v2555
        %v2571 = vmul.f32 %v2464, %v2555
        %v2588 = vrot.slane %v2556, 2
        %v2589 = vrot.slane %v2557, 2
        %v2590 = vsel %vm663, %v2588, %v2589
        %v2591 = vrot.slane %v2558, 2
        %v2592 = vrot.slane %v2559, 2
        %v2593 = vsel %vm663, %v2591, %v2592
        %v2594 = vrot.slane %v2560, 2
        %v2595 = vrot.slane %v2561, 2
        %v2596 = vsel %vm663, %v2594, %v2595
        %v2597 = vrot.slane %v2562, 2
        %v2598 = vrot.slane %v2563, 2
        %v2599 = vsel %vm663, %v2597, %v2598
        %v2600 = vrot.slane %v2564, 2
        %v2601 = vrot.slane %v2565, 2
        %v2602 = vsel %vm663, %v2600, %v2601
        %v2603 = vrot.slane %v2566, 2
        %v2604 = vrot.slane %v2567, 2
        %v2605 = vsel %vm663, %v2603, %v2604
        %v2606 = vrot.slane %v2568, 2
        %v2607 = vrot.slane %v2569, 2
        %v2608 = vsel %vm663, %v2606, %v2607
        %v2609 = vrot.slane %v2570, 2
        %v2610 = vrot.slane %v2571, 2
        %v2611 = vsel %vm663, %v2609, %v2610
        %v2620 = vadd.f32 %v2547, %v2590
        %v2621 = vadd.f32 %v2548, %v2593
        %v2622 = vadd.f32 %v2549, %v2596
        %v2623 = vadd.f32 %v2550, %v2599
        %v2624 = vadd.f32 %v2551, %v2602
        %v2625 = vadd.f32 %v2552, %v2605
        %v2626 = vadd.f32 %v2553, %v2608
        %v2627 = vadd.f32 %v2554, %v2611
        %s2628 = scalar_lea.vmem [#allocation2], 32
        %v2629 = vld [vmem:[%s2628] sm:$0xff]
        %v2630 = vld [vmem:[%s2628 + $0x8] sm:$0x3]
        %v2631 = vld [vmem:[%s2628 + $0x10] sm:$0xff]
        %v2632 = vld [vmem:[%s2628 + $0x18] sm:$0x3]
        %v2633 = vld [vmem:[%s2628 + $0x20] sm:$0xff]
        %v2634 = vld [vmem:[%s2628 + $0x28] sm:$0x3]
        %v2635 = vld [vmem:[%s2628 + $0x30] sm:$0xff]
        %v2636 = vld [vmem:[%s2628 + $0x38] sm:$0x3]
        %v2637 = vld [vmem:[%s2628 + $0x40] sm:$0xff]
        %v2638 = vld [vmem:[%s2628 + $0x48] sm:$0x3]
        %v2639 = vld [vmem:[%s2628 + $0x50] sm:$0xff]
        %v2640 = vld [vmem:[%s2628 + $0x58] sm:$0x3]
        %v2641 = vld [vmem:[%s2628 + $0x60] sm:$0xff]
        %v2642 = vld [vmem:[%s2628 + $0x68] sm:$0x3]
        %v2643 = vld [vmem:[%s2628 + $0x70] sm:$0xff]
        %v2644 = vld [vmem:[%s2628 + $0x78] sm:$0x3]
        %v2645 = vperm.slane %v2277, 0
        %v2646 = vmul.f32 %v2629, %v2645
        %v2647 = vmul.f32 %v2631, %v2645
        %v2648 = vmul.f32 %v2633, %v2645
        %v2649 = vmul.f32 %v2635, %v2645
        %v2650 = vmul.f32 %v2637, %v2645
        %v2651 = vmul.f32 %v2639, %v2645
        %v2652 = vmul.f32 %v2641, %v2645
        %v2653 = vmul.f32 %v2643, %v2645
        %v2654 = vadd.f32 %v2620, %v2646
        %v2655 = vadd.f32 %v2621, %v2647
        %v2656 = vadd.f32 %v2622, %v2648
        %v2657 = vadd.f32 %v2623, %v2649
        %v2658 = vadd.f32 %v2624, %v2650
        %v2659 = vadd.f32 %v2625, %v2651
        %v2660 = vadd.f32 %v2626, %v2652
        %v2661 = vadd.f32 %v2627, %v2653
        %v2662 = vperm.slane %v2277, 1
        %v2663 = vmul.f32 %v2629, %v2662
        %v2664 = vmul.f32 %v2630, %v2662
        %v2665 = vmul.f32 %v2631, %v2662
        %v2666 = vmul.f32 %v2632, %v2662
        %v2667 = vmul.f32 %v2633, %v2662
        %v2668 = vmul.f32 %v2634, %v2662
        %v2669 = vmul.f32 %v2635, %v2662
        %v2670 = vmul.f32 %v2636, %v2662
        %v2671 = vmul.f32 %v2637, %v2662
        %v2672 = vmul.f32 %v2638, %v2662
        %v2673 = vmul.f32 %v2639, %v2662
        %v2674 = vmul.f32 %v2640, %v2662
        %v2675 = vmul.f32 %v2641, %v2662
        %v2676 = vmul.f32 %v2642, %v2662
        %v2677 = vmul.f32 %v2643, %v2662
        %v2678 = vmul.f32 %v2644, %v2662
        %v2695 = vrot.slane %v2663, 1
        %v2696 = vrot.slane %v2664, 1
        %v2697 = vsel %vm443, %v2695, %v2696
        %v2698 = vrot.slane %v2665, 1
        %v2699 = vrot.slane %v2666, 1
        %v2700 = vsel %vm443, %v2698, %v2699
        %v2701 = vrot.slane %v2667, 1
        %v2702 = vrot.slane %v2668, 1
        %v2703 = vsel %vm443, %v2701, %v2702
        %v2704 = vrot.slane %v2669, 1
        %v2705 = vrot.slane %v2670, 1
        %v2706 = vsel %vm443, %v2704, %v2705
        %v2707 = vrot.slane %v2671, 1
        %v2708 = vrot.slane %v2672, 1
        %v2709 = vsel %vm443, %v2707, %v2708
        %v2710 = vrot.slane %v2673, 1
        %v2711 = vrot.slane %v2674, 1
        %v2712 = vsel %vm443, %v2710, %v2711
        %v2713 = vrot.slane %v2675, 1
        %v2714 = vrot.slane %v2676, 1
        %v2715 = vsel %vm443, %v2713, %v2714
        %v2716 = vrot.slane %v2677, 1
        %v2717 = vrot.slane %v2678, 1
        %v2718 = vsel %vm443, %v2716, %v2717
        %v2727 = vadd.f32 %v2654, %v2697
        %v2728 = vadd.f32 %v2655, %v2700
        %v2729 = vadd.f32 %v2656, %v2703
        %v2730 = vadd.f32 %v2657, %v2706
        %v2731 = vadd.f32 %v2658, %v2709
        %v2732 = vadd.f32 %v2659, %v2712
        %v2733 = vadd.f32 %v2660, %v2715
        %v2734 = vadd.f32 %v2661, %v2718
        %v2735 = vperm.slane %v2277, 2
        %v2736 = vmul.f32 %v2629, %v2735
        %v2737 = vmul.f32 %v2630, %v2735
        %v2738 = vmul.f32 %v2631, %v2735
        %v2739 = vmul.f32 %v2632, %v2735
        %v2740 = vmul.f32 %v2633, %v2735
        %v2741 = vmul.f32 %v2634, %v2735
        %v2742 = vmul.f32 %v2635, %v2735
        %v2743 = vmul.f32 %v2636, %v2735
        %v2744 = vmul.f32 %v2637, %v2735
        %v2745 = vmul.f32 %v2638, %v2735
        %v2746 = vmul.f32 %v2639, %v2735
        %v2747 = vmul.f32 %v2640, %v2735
        %v2748 = vmul.f32 %v2641, %v2735
        %v2749 = vmul.f32 %v2642, %v2735
        %v2750 = vmul.f32 %v2643, %v2735
        %v2751 = vmul.f32 %v2644, %v2735
        %v2768 = vrot.slane %v2736, 2
        %v2769 = vrot.slane %v2737, 2
        %v2770 = vsel %vm663, %v2768, %v2769
        %v2771 = vrot.slane %v2738, 2
        %v2772 = vrot.slane %v2739, 2
        %v2773 = vsel %vm663, %v2771, %v2772
        %v2774 = vrot.slane %v2740, 2
        %v2775 = vrot.slane %v2741, 2
        %v2776 = vsel %vm663, %v2774, %v2775
        %v2777 = vrot.slane %v2742, 2
        %v2778 = vrot.slane %v2743, 2
        %v2779 = vsel %vm663, %v2777, %v2778
        %v2780 = vrot.slane %v2744, 2
        %v2781 = vrot.slane %v2745, 2
        %v2782 = vsel %vm663, %v2780, %v2781
        %v2783 = vrot.slane %v2746, 2
        %v2784 = vrot.slane %v2747, 2
        %v2785 = vsel %vm663, %v2783, %v2784
        %v2786 = vrot.slane %v2748, 2
        %v2787 = vrot.slane %v2749, 2
        %v2788 = vsel %vm663, %v2786, %v2787
        %v2789 = vrot.slane %v2750, 2
        %v2790 = vrot.slane %v2751, 2
        %v2791 = vsel %vm663, %v2789, %v2790
        %v2800 = vadd.f32 %v2727, %v2770
        %v2801 = vadd.f32 %v2728, %v2773
        %v2802 = vadd.f32 %v2729, %v2776
        %v2803 = vadd.f32 %v2730, %v2779
        %v2804 = vadd.f32 %v2731, %v2782
        %v2805 = vadd.f32 %v2732, %v2785
        %v2806 = vadd.f32 %v2733, %v2788
        %v2807 = vadd.f32 %v2734, %v2791
        %v2808 = vmul.f32 %v2800, 0.5
        %v2809 = vmul.f32 %v2801, 0.5
        %v2810 = vmul.f32 %v2802, 0.5
        %v2811 = vmul.f32 %v2803, 0.5
        %v2812 = vmul.f32 %v2804, 0.5
        %v2813 = vmul.f32 %v2805, 0.5
        %v2814 = vmul.f32 %v2806, 0.5
        %v2815 = vmul.f32 %v2807, 0.5
        %v2816 = vmul.f32 %v2800, 0.70710677
        %v2817 = vmul.f32 %v2801, 0.70710677
        %v2818 = vmul.f32 %v2802, 0.70710677
        %v2819 = vmul.f32 %v2803, 0.70710677
        %v2820 = vmul.f32 %v2804, 0.70710677
        %v2821 = vmul.f32 %v2805, 0.70710677
        %v2822 = vmul.f32 %v2806, 0.70710677
        %v2823 = vmul.f32 %v2807, 0.70710677
        %v2824 = vand.u32 2147483647, %v2816
        %v2825 = vand.u32 2147483647, %v2817
        %v2826 = vand.u32 2147483647, %v2818
        %v2827 = vand.u32 2147483647, %v2819
        %v2828 = vand.u32 2147483647, %v2820
        %v2829 = vand.u32 2147483647, %v2821
        %v2830 = vand.u32 2147483647, %v2822
        %v2831 = vand.u32 2147483647, %v2823
        %v2832 = vmul.f32 %v2824, 0.3275911
        %v2833 = vmul.f32 %v2825, 0.3275911
        %v2834 = vmul.f32 %v2826, 0.3275911
        %v2835 = vmul.f32 %v2827, 0.3275911
        %v2836 = vmul.f32 %v2828, 0.3275911
        %v2837 = vmul.f32 %v2829, 0.3275911
        %v2838 = vmul.f32 %v2830, 0.3275911
        %v2839 = vmul.f32 %v2831, 0.3275911
        %v2840 = vadd.f32 %v2832, 1.0
        %v2841 = vadd.f32 %v2833, 1.0
        %v2842 = vadd.f32 %v2834, 1.0
        %v2843 = vadd.f32 %v2835, 1.0
        %v2844 = vadd.f32 %v2836, 1.0
        %v2845 = vadd.f32 %v2837, 1.0
        %v2846 = vadd.f32 %v2838, 1.0
        %v2847 = vadd.f32 %v2839, 1.0
        %v2848 = vrcp.pop %v2840
        %v2849 = vmul.f32 %v2840, %v2848
        %v2850 = vsub.f32 1.0, %v2849
        %v2851 = vmul.f32 %v2848, %v2850
        %v2852 = vadd.f32 %v2848, %v2851
        %vm2853 = vweird.f32 %v2840
        %vm2854 = vweird.f32 %v2848
        %vm2855 = vmor %vm2853, %vm2854
        %v2856 = vsel %vm2855, %v2848, %v2852
        %v2857 = vand.u32 2147483647, %v2840
        %vm2858 = vcmp.eq.f32.partialorder %v2857, 8.507059e+37
        %v2859 = vand.u32 %v2840, 2147483648
        %v2860 = vor.u32 1.1754944e-38, %v2859
        %v2861 = vsel %vm2858, %v2860, %v2856
        %v2862 = vmul.f32 1.0, %v2861
        %v2863 = vrcp.pop %v2841
        %v2864 = vmul.f32 %v2841, %v2863
        %v2865 = vsub.f32 1.0, %v2864
        %v2866 = vmul.f32 %v2863, %v2865
        %v2867 = vadd.f32 %v2863, %v2866
        %vm2868 = vweird.f32 %v2841
        %vm2869 = vweird.f32 %v2863
        %vm2870 = vmor %vm2868, %vm2869
        %v2871 = vsel %vm2870, %v2863, %v2867
        %v2872 = vand.u32 2147483647, %v2841
        %vm2873 = vcmp.eq.f32.partialorder %v2872, 8.507059e+37
        %v2874 = vand.u32 %v2841, 2147483648
        %v2875 = vor.u32 1.1754944e-38, %v2874
        %v2876 = vsel %vm2873, %v2875, %v2871
        %v2877 = vmul.f32 1.0, %v2876
        %v2878 = vrcp.pop %v2842
        %v2879 = vmul.f32 %v2842, %v2878
        %v2880 = vsub.f32 1.0, %v2879
        %v2881 = vmul.f32 %v2878, %v2880
        %v2882 = vadd.f32 %v2878, %v2881
        %vm2883 = vweird.f32 %v2842
        %vm2884 = vweird.f32 %v2878
        %vm2885 = vmor %vm2883, %vm2884
        %v2886 = vsel %vm2885, %v2878, %v2882
        %v2887 = vand.u32 2147483647, %v2842
        %vm2888 = vcmp.eq.f32.partialorder %v2887, 8.507059e+37
        %v2889 = vand.u32 %v2842, 2147483648
        %v2890 = vor.u32 1.1754944e-38, %v2889
        %v2891 = vsel %vm2888, %v2890, %v2886
        %v2892 = vmul.f32 1.0, %v2891
        %v2893 = vrcp.pop %v2843
        %v2894 = vmul.f32 %v2843, %v2893
        %v2895 = vsub.f32 1.0, %v2894
        %v2896 = vmul.f32 %v2893, %v2895
        %v2897 = vadd.f32 %v2893, %v2896
        %vm2898 = vweird.f32 %v2843
        %vm2899 = vweird.f32 %v2893
        %vm2900 = vmor %vm2898, %vm2899
        %v2901 = vsel %vm2900, %v2893, %v2897
        %v2902 = vand.u32 2147483647, %v2843
        %vm2903 = vcmp.eq.f32.partialorder %v2902, 8.507059e+37
        %v2904 = vand.u32 %v2843, 2147483648
        %v2905 = vor.u32 1.1754944e-38, %v2904
        %v2906 = vsel %vm2903, %v2905, %v2901
        %v2907 = vmul.f32 1.0, %v2906
        %v2908 = vrcp.pop %v2844
        %v2909 = vmul.f32 %v2844, %v2908
        %v2910 = vsub.f32 1.0, %v2909
        %v2911 = vmul.f32 %v2908, %v2910
        %v2912 = vadd.f32 %v2908, %v2911
        %vm2913 = vweird.f32 %v2844
        %vm2914 = vweird.f32 %v2908
        %vm2915 = vmor %vm2913, %vm2914
        %v2916 = vsel %vm2915, %v2908, %v2912
        %v2917 = vand.u32 2147483647, %v2844
        %vm2918 = vcmp.eq.f32.partialorder %v2917, 8.507059e+37
        %v2919 = vand.u32 %v2844, 2147483648
        %v2920 = vor.u32 1.1754944e-38, %v2919
        %v2921 = vsel %vm2918, %v2920, %v2916
        %v2922 = vmul.f32 1.0, %v2921
        %v2923 = vrcp.pop %v2845
        %v2924 = vmul.f32 %v2845, %v2923
        %v2925 = vsub.f32 1.0, %v2924
        %v2926 = vmul.f32 %v2923, %v2925
        %v2927 = vadd.f32 %v2923, %v2926
        %vm2928 = vweird.f32 %v2845
        %vm2929 = vweird.f32 %v2923
        %vm2930 = vmor %vm2928, %vm2929
        %v2931 = vsel %vm2930, %v2923, %v2927
        %v2932 = vand.u32 2147483647, %v2845
        %vm2933 = vcmp.eq.f32.partialorder %v2932, 8.507059e+37
        %v2934 = vand.u32 %v2845, 2147483648
        %v2935 = vor.u32 1.1754944e-38, %v2934
        %v2936 = vsel %vm2933, %v2935, %v2931
        %v2937 = vmul.f32 1.0, %v2936
        %v2938 = vrcp.pop %v2846
        %v2939 = vmul.f32 %v2846, %v2938
        %v2940 = vsub.f32 1.0, %v2939
        %v2941 = vmul.f32 %v2938, %v2940
        %v2942 = vadd.f32 %v2938, %v2941
        %vm2943 = vweird.f32 %v2846
        %vm2944 = vweird.f32 %v2938
        %vm2945 = vmor %vm2943, %vm2944
        %v2946 = vsel %vm2945, %v2938, %v2942
        %v2947 = vand.u32 2147483647, %v2846
        %vm2948 = vcmp.eq.f32.partialorder %v2947, 8.507059e+37
        %v2949 = vand.u32 %v2846, 2147483648
        %v2950 = vor.u32 1.1754944e-38, %v2949
        %v2951 = vsel %vm2948, %v2950, %v2946
        %v2952 = vmul.f32 1.0, %v2951
        %v2953 = vrcp.pop %v2847
        %v2954 = vmul.f32 %v2847, %v2953
        %v2955 = vsub.f32 1.0, %v2954
        %v2956 = vmul.f32 %v2953, %v2955
        %v2957 = vadd.f32 %v2953, %v2956
        %vm2958 = vweird.f32 %v2847
        %vm2959 = vweird.f32 %v2953
        %vm2960 = vmor %vm2958, %vm2959
        %v2961 = vsel %vm2960, %v2953, %v2957
        %v2962 = vand.u32 2147483647, %v2847
        %vm2963 = vcmp.eq.f32.partialorder %v2962, 8.507059e+37
        %v2964 = vand.u32 %v2847, 2147483648
        %v2965 = vor.u32 1.1754944e-38, %v2964
        %v2966 = vsel %vm2963, %v2965, %v2961
        %v2967 = vmul.f32 1.0, %v2966
        %v2968 = vmul.f32 %v2862, 1.0614054
        %v2969 = vmul.f32 %v2877, 1.0614054
        %v2970 = vmul.f32 %v2892, 1.0614054
        %v2971 = vmul.f32 %v2907, 1.0614054
        %v2972 = vmul.f32 %v2922, 1.0614054
        %v2973 = vmul.f32 %v2937, 1.0614054
        %v2974 = vmul.f32 %v2952, 1.0614054
        %v2975 = vmul.f32 %v2967, 1.0614054
        %v2976 = vadd.f32 %v2968, -1.4531521
        %v2977 = vadd.f32 %v2969, -1.4531521
        %v2978 = vadd.f32 %v2970, -1.4531521
        %v2979 = vadd.f32 %v2971, -1.4531521
        %v2980 = vadd.f32 %v2972, -1.4531521
        %v2981 = vadd.f32 %v2973, -1.4531521
        %v2982 = vadd.f32 %v2974, -1.4531521
        %v2983 = vadd.f32 %v2975, -1.4531521
        %v2984 = vmul.f32 %v2976, %v2862
        %v2985 = vmul.f32 %v2977, %v2877
        %v2986 = vmul.f32 %v2978, %v2892
        %v2987 = vmul.f32 %v2979, %v2907
        %v2988 = vmul.f32 %v2980, %v2922
        %v2989 = vmul.f32 %v2981, %v2937
        %v2990 = vmul.f32 %v2982, %v2952
        %v2991 = vmul.f32 %v2983, %v2967
        %v2992 = vadd.f32 %v2984, 1.4214138
        %v2993 = vadd.f32 %v2985, 1.4214138
        %v2994 = vadd.f32 %v2986, 1.4214138
        %v2995 = vadd.f32 %v2987, 1.4214138
        %v2996 = vadd.f32 %v2988, 1.4214138
        %v2997 = vadd.f32 %v2989, 1.4214138
        %v2998 = vadd.f32 %v2990, 1.4214138
        %v2999 = vadd.f32 %v2991, 1.4214138
        %v3000 = vmul.f32 %v2992, %v2862
        %v3001 = vmul.f32 %v2993, %v2877
        %v3002 = vmul.f32 %v2994, %v2892
        %v3003 = vmul.f32 %v2995, %v2907
        %v3004 = vmul.f32 %v2996, %v2922
        %v3005 = vmul.f32 %v2997, %v2937
        %v3006 = vmul.f32 %v2998, %v2952
        %v3007 = vmul.f32 %v2999, %v2967
        %v3008 = vadd.f32 %v3000, -0.28449672
        %v3009 = vadd.f32 %v3001, -0.28449672
        %v3010 = vadd.f32 %v3002, -0.28449672
        %v3011 = vadd.f32 %v3003, -0.28449672
        %v3012 = vadd.f32 %v3004, -0.28449672
        %v3013 = vadd.f32 %v3005, -0.28449672
        %v3014 = vadd.f32 %v3006, -0.28449672
        %v3015 = vadd.f32 %v3007, -0.28449672
        %v3016 = vmul.f32 %v3008, %v2862
        %v3017 = vmul.f32 %v3009, %v2877
        %v3018 = vmul.f32 %v3010, %v2892
        %v3019 = vmul.f32 %v3011, %v2907
        %v3020 = vmul.f32 %v3012, %v2922
        %v3021 = vmul.f32 %v3013, %v2937
        %v3022 = vmul.f32 %v3014, %v2952
        %v3023 = vmul.f32 %v3015, %v2967
        %v3024 = vadd.f32 %v3016, 0.2548296
        %v3025 = vadd.f32 %v3017, 0.2548296
        %v3026 = vadd.f32 %v3018, 0.2548296
        %v3027 = vadd.f32 %v3019, 0.2548296
        %v3028 = vadd.f32 %v3020, 0.2548296
        %v3029 = vadd.f32 %v3021, 0.2548296
        %v3030 = vadd.f32 %v3022, 0.2548296
        %v3031 = vadd.f32 %v3023, 0.2548296
        %v3032 = vmul.f32 %v3024, %v2862
        %v3033 = vmul.f32 %v3025, %v2877
        %v3034 = vmul.f32 %v3026, %v2892
        %v3035 = vmul.f32 %v3027, %v2907
        %v3036 = vmul.f32 %v3028, %v2922
        %v3037 = vmul.f32 %v3029, %v2937
        %v3038 = vmul.f32 %v3030, %v2952
        %v3039 = vmul.f32 %v3031, %v2967
        %v3040 = vsub.f32 0.0, %v2824
        %v3041 = vsub.f32 0.0, %v2825
        %v3042 = vsub.f32 0.0, %v2826
        %v3043 = vsub.f32 0.0, %v2827
        %v3044 = vsub.f32 0.0, %v2828
        %v3045 = vsub.f32 0.0, %v2829
        %v3046 = vsub.f32 0.0, %v2830
        %v3047 = vsub.f32 0.0, %v2831
        %v3048 = vmul.f32 %v3040, %v2824
        %v3049 = vmul.f32 %v3041, %v2825
        %v3050 = vmul.f32 %v3042, %v2826
        %v3051 = vmul.f32 %v3043, %v2827
        %v3052 = vmul.f32 %v3044, %v2828
        %v3053 = vmul.f32 %v3045, %v2829
        %v3054 = vmul.f32 %v3046, %v2830
        %v3055 = vmul.f32 %v3047, %v2831
        %v3056 = vmul.f32 %v3048, 1.442695
        %v3057 = vpow.pop %v3056
        %v3058 = vmul.f32 %v3049, 1.442695
        %v3059 = vpow.pop %v3058
        %v3060 = vmul.f32 %v3050, 1.442695
        %v3061 = vpow.pop %v3060
        %v3062 = vmul.f32 %v3051, 1.442695
        %v3063 = vpow.pop %v3062
        %v3064 = vmul.f32 %v3052, 1.442695
        %v3065 = vpow.pop %v3064
        %v3066 = vmul.f32 %v3053, 1.442695
        %v3067 = vpow.pop %v3066
        %v3068 = vmul.f32 %v3054, 1.442695
        %v3069 = vpow.pop %v3068
        %v3070 = vmul.f32 %v3055, 1.442695
        %v3071 = vpow.pop %v3070
        %v3072 = vmul.f32 %v3032, %v3057
        %v3073 = vmul.f32 %v3033, %v3059
        %v3074 = vmul.f32 %v3034, %v3061
        %v3075 = vmul.f32 %v3035, %v3063
        %v3076 = vmul.f32 %v3036, %v3065
        %v3077 = vmul.f32 %v3037, %v3067
        %v3078 = vmul.f32 %v3038, %v3069
        %v3079 = vmul.f32 %v3039, %v3071
        %v3080 = vsub.f32 1.0, %v3072
        %v3081 = vsub.f32 1.0, %v3073
        %v3082 = vsub.f32 1.0, %v3074
        %v3083 = vsub.f32 1.0, %v3075
        %v3084 = vsub.f32 1.0, %v3076
        %v3085 = vsub.f32 1.0, %v3077
        %v3086 = vsub.f32 1.0, %v3078
        %v3087 = vsub.f32 1.0, %v3079
        %vm3088 = vcmp.ge.f32.partialorder %v2816, 0.0
        %vm3089 = vcmp.ge.f32.partialorder %v2817, 0.0
        %vm3090 = vcmp.ge.f32.partialorder %v2818, 0.0
        %vm3091 = vcmp.ge.f32.partialorder %v2819, 0.0
        %vm3092 = vcmp.ge.f32.partialorder %v2820, 0.0
        %vm3093 = vcmp.ge.f32.partialorder %v2821, 0.0
        %vm3094 = vcmp.ge.f32.partialorder %v2822, 0.0
        %vm3095 = vcmp.ge.f32.partialorder %v2823, 0.0
        %v3096 = vsub.f32 0.0, %v3080
        %v3097 = vsub.f32 0.0, %v3081
        %v3098 = vsub.f32 0.0, %v3082
        %v3099 = vsub.f32 0.0, %v3083
        %v3100 = vsub.f32 0.0, %v3084
        %v3101 = vsub.f32 0.0, %v3085
        %v3102 = vsub.f32 0.0, %v3086
        %v3103 = vsub.f32 0.0, %v3087
        %v3104 = vsel %vm3088, %v3080, %v3096
        %v3105 = vsel %vm3089, %v3081, %v3097
        %v3106 = vsel %vm3090, %v3082, %v3098
        %v3107 = vsel %vm3091, %v3083, %v3099
        %v3108 = vsel %vm3092, %v3084, %v3100
        %v3109 = vsel %vm3093, %v3085, %v3101
        %v3110 = vsel %vm3094, %v3086, %v3102
        %v3111 = vsel %vm3095, %v3087, %v3103
        %v3112 = vadd.f32 %v3104, 1.0
        %v3113 = vadd.f32 %v3105, 1.0
        %v3114 = vadd.f32 %v3106, 1.0
        %v3115 = vadd.f32 %v3107, 1.0
        %v3116 = vadd.f32 %v3108, 1.0
        %v3117 = vadd.f32 %v3109, 1.0
        %v3118 = vadd.f32 %v3110, 1.0
        %v3119 = vadd.f32 %v3111, 1.0
        %v3120 = vmul.f32 %v2808, %v3112
        %v3121 = vmul.f32 %v2809, %v3113
        %v3122 = vmul.f32 %v2810, %v3114
        %v3123 = vmul.f32 %v2811, %v3115
        %v3124 = vmul.f32 %v2812, %v3116
        %v3125 = vmul.f32 %v2813, %v3117
        %v3126 = vmul.f32 %v2814, %v3118
        %v3127 = vmul.f32 %v2815, %v3119
        %3128 = vst.msk [vmem:[%s2249 + $0x1] sm:$0xff] %vm1870, %v3120
        %3129 = vst.msk [vmem:[%s2249 + $0x11] sm:$0xff] %vm1870, %v3121
        %3130 = vst.msk [vmem:[%s2249 + $0x21] sm:$0xff] %vm1870, %v3122
        %3131 = vst.msk [vmem:[%s2249 + $0x31] sm:$0xff] %vm1870, %v3123
        %3132 = vst.msk [vmem:[%s2249 + $0x41] sm:$0xff] %vm1870, %v3124
        %3133 = vst.msk [vmem:[%s2249 + $0x51] sm:$0xff] %vm1870, %v3125
        %3134 = vst.msk [vmem:[%s2249 + $0x61] sm:$0xff] %vm1870, %v3126
        %3135 = vst.msk [vmem:[%s2249 + $0x71] sm:$0xff] %vm1870, %v3127
        %v3136 = vld [vmem:[%s5] sm:$0x7]
        %v3137 = vld [vmem:[%s5 + $0x4] sm:$0x7]
        %v3138 = vld [vmem:[%s5 + $0x8] sm:$0x7]
        %v3139 = vld [vmem:[#allocation2] sm:$0xff]
        %v3140 = vld [vmem:[#allocation2 + $0x8] sm:$0x3]
        %v3141 = vld [vmem:[#allocation2 + $0x10] sm:$0xff]
        %v3142 = vld [vmem:[#allocation2 + $0x18] sm:$0x3]
        %v3143 = vld [vmem:[#allocation2 + $0x20] sm:$0xff]
        %v3144 = vld [vmem:[#allocation2 + $0x28] sm:$0x3]
        %v3145 = vld [vmem:[#allocation2 + $0x30] sm:$0xff]
        %v3146 = vld [vmem:[#allocation2 + $0x38] sm:$0x3]
        %v3147 = vld [vmem:[#allocation2 + $0x40] sm:$0xff]
        %v3148 = vld [vmem:[#allocation2 + $0x48] sm:$0x3]
        %v3149 = vld [vmem:[#allocation2 + $0x50] sm:$0xff]
        %v3150 = vld [vmem:[#allocation2 + $0x58] sm:$0x3]
        %v3151 = vld [vmem:[#allocation2 + $0x60] sm:$0xff]
        %v3152 = vld [vmem:[#allocation2 + $0x68] sm:$0x3]
        %v3153 = vld [vmem:[#allocation2 + $0x70] sm:$0xff]
        %v3154 = vld [vmem:[#allocation2 + $0x78] sm:$0x3]
        %v3155 = vperm.slane %v3136, 0
        %v3156 = vmul.f32 %v3139, %v3155
        %v3157 = vmul.f32 %v3141, %v3155
        %v3158 = vmul.f32 %v3143, %v3155
        %v3159 = vmul.f32 %v3145, %v3155
        %v3160 = vmul.f32 %v3147, %v3155
        %v3161 = vmul.f32 %v3149, %v3155
        %v3162 = vmul.f32 %v3151, %v3155
        %v3163 = vmul.f32 %v3153, %v3155
        %v3164 = vperm.slane %v3136, 1
        %v3165 = vmul.f32 %v3139, %v3164
        %v3166 = vmul.f32 %v3140, %v3164
        %v3167 = vmul.f32 %v3141, %v3164
        %v3168 = vmul.f32 %v3142, %v3164
        %v3169 = vmul.f32 %v3143, %v3164
        %v3170 = vmul.f32 %v3144, %v3164
        %v3171 = vmul.f32 %v3145, %v3164
        %v3172 = vmul.f32 %v3146, %v3164
        %v3173 = vmul.f32 %v3147, %v3164
        %v3174 = vmul.f32 %v3148, %v3164
        %v3175 = vmul.f32 %v3149, %v3164
        %v3176 = vmul.f32 %v3150, %v3164
        %v3177 = vmul.f32 %v3151, %v3164
        %v3178 = vmul.f32 %v3152, %v3164
        %v3179 = vmul.f32 %v3153, %v3164
        %v3180 = vmul.f32 %v3154, %v3164
        %v3197 = vrot.slane %v3165, 1
        %v3198 = vrot.slane %v3166, 1
        %v3199 = vsel %vm443, %v3197, %v3198
        %v3200 = vrot.slane %v3167, 1
        %v3201 = vrot.slane %v3168, 1
        %v3202 = vsel %vm443, %v3200, %v3201
        %v3203 = vrot.slane %v3169, 1
        %v3204 = vrot.slane %v3170, 1
        %v3205 = vsel %vm443, %v3203, %v3204
        %v3206 = vrot.slane %v3171, 1
        %v3207 = vrot.slane %v3172, 1
        %v3208 = vsel %vm443, %v3206, %v3207
        %v3209 = vrot.slane %v3173, 1
        %v3210 = vrot.slane %v3174, 1
        %v3211 = vsel %vm443, %v3209, %v3210
        %v3212 = vrot.slane %v3175, 1
        %v3213 = vrot.slane %v3176, 1
        %v3214 = vsel %vm443, %v3212, %v3213
        %v3215 = vrot.slane %v3177, 1
        %v3216 = vrot.slane %v3178, 1
        %v3217 = vsel %vm443, %v3215, %v3216
        %v3218 = vrot.slane %v3179, 1
        %v3219 = vrot.slane %v3180, 1
        %v3220 = vsel %vm443, %v3218, %v3219
        %v3229 = vadd.f32 %v3156, %v3199
        %v3230 = vadd.f32 %v3157, %v3202
        %v3231 = vadd.f32 %v3158, %v3205
        %v3232 = vadd.f32 %v3159, %v3208
        %v3233 = vadd.f32 %v3160, %v3211
        %v3234 = vadd.f32 %v3161, %v3214
        %v3235 = vadd.f32 %v3162, %v3217
        %v3236 = vadd.f32 %v3163, %v3220
        %v3237 = vperm.slane %v3136, 2
        %v3238 = vmul.f32 %v3139, %v3237
        %v3239 = vmul.f32 %v3140, %v3237
        %v3240 = vmul.f32 %v3141, %v3237
        %v3241 = vmul.f32 %v3142, %v3237
        %v3242 = vmul.f32 %v3143, %v3237
        %v3243 = vmul.f32 %v3144, %v3237
        %v3244 = vmul.f32 %v3145, %v3237
        %v3245 = vmul.f32 %v3146, %v3237
        %v3246 = vmul.f32 %v3147, %v3237
        %v3247 = vmul.f32 %v3148, %v3237
        %v3248 = vmul.f32 %v3149, %v3237
        %v3249 = vmul.f32 %v3150, %v3237
        %v3250 = vmul.f32 %v3151, %v3237
        %v3251 = vmul.f32 %v3152, %v3237
        %v3252 = vmul.f32 %v3153, %v3237
        %v3253 = vmul.f32 %v3154, %v3237
        %v3270 = vrot.slane %v3238, 2
        %v3271 = vrot.slane %v3239, 2
        %v3272 = vsel %vm663, %v3270, %v3271
        %v3273 = vrot.slane %v3240, 2
        %v3274 = vrot.slane %v3241, 2
        %v3275 = vsel %vm663, %v3273, %v3274
        %v3276 = vrot.slane %v3242, 2
        %v3277 = vrot.slane %v3243, 2
        %v3278 = vsel %vm663, %v3276, %v3277
        %v3279 = vrot.slane %v3244, 2
        %v3280 = vrot.slane %v3245, 2
        %v3281 = vsel %vm663, %v3279, %v3280
        %v3282 = vrot.slane %v3246, 2
        %v3283 = vrot.slane %v3247, 2
        %v3284 = vsel %vm663, %v3282, %v3283
        %v3285 = vrot.slane %v3248, 2
        %v3286 = vrot.slane %v3249, 2
        %v3287 = vsel %vm663, %v3285, %v3286
        %v3288 = vrot.slane %v3250, 2
        %v3289 = vrot.slane %v3251, 2
        %v3290 = vsel %vm663, %v3288, %v3289
        %v3291 = vrot.slane %v3252, 2
        %v3292 = vrot.slane %v3253, 2
        %v3293 = vsel %vm663, %v3291, %v3292
        %v3302 = vadd.f32 %v3229, %v3272
        %v3303 = vadd.f32 %v3230, %v3275
        %v3304 = vadd.f32 %v3231, %v3278
        %v3305 = vadd.f32 %v3232, %v3281
        %v3306 = vadd.f32 %v3233, %v3284
        %v3307 = vadd.f32 %v3234, %v3287
        %v3308 = vadd.f32 %v3235, %v3290
        %v3309 = vadd.f32 %v3236, %v3293
        %v3310 = vld [vmem:[%s2249] sm:$0xff]
        %v3311 = vld [vmem:[%s2249 + $0x8] sm:$0x3]
        %v3312 = vld [vmem:[%s2249 + $0x10] sm:$0xff]
        %v3313 = vld [vmem:[%s2249 + $0x18] sm:$0x3]
        %v3314 = vld [vmem:[%s2249 + $0x20] sm:$0xff]
        %v3315 = vld [vmem:[%s2249 + $0x28] sm:$0x3]
        %v3316 = vld [vmem:[%s2249 + $0x30] sm:$0xff]
        %v3317 = vld [vmem:[%s2249 + $0x38] sm:$0x3]
        %v3318 = vld [vmem:[%s2249 + $0x40] sm:$0xff]
        %v3319 = vld [vmem:[%s2249 + $0x48] sm:$0x3]
        %v3320 = vld [vmem:[%s2249 + $0x50] sm:$0xff]
        %v3321 = vld [vmem:[%s2249 + $0x58] sm:$0x3]
        %v3322 = vld [vmem:[%s2249 + $0x60] sm:$0xff]
        %v3323 = vld [vmem:[%s2249 + $0x68] sm:$0x3]
        %v3324 = vld [vmem:[%s2249 + $0x70] sm:$0xff]
        %v3325 = vld [vmem:[%s2249 + $0x78] sm:$0x3]
        %v3326 = vperm.slane %v3137, 0
        %v3327 = vmul.f32 %v3310, %v3326
        %v3328 = vmul.f32 %v3312, %v3326
        %v3329 = vmul.f32 %v3314, %v3326
        %v3330 = vmul.f32 %v3316, %v3326
        %v3331 = vmul.f32 %v3318, %v3326
        %v3332 = vmul.f32 %v3320, %v3326
        %v3333 = vmul.f32 %v3322, %v3326
        %v3334 = vmul.f32 %v3324, %v3326
        %v3335 = vadd.f32 %v3302, %v3327
        %v3336 = vadd.f32 %v3303, %v3328
        %v3337 = vadd.f32 %v3304, %v3329
        %v3338 = vadd.f32 %v3305, %v3330
        %v3339 = vadd.f32 %v3306, %v3331
        %v3340 = vadd.f32 %v3307, %v3332
        %v3341 = vadd.f32 %v3308, %v3333
        %v3342 = vadd.f32 %v3309, %v3334
        %v3343 = vperm.slane %v3137, 1
        %v3344 = vmul.f32 %v3310, %v3343
        %v3345 = vmul.f32 %v3311, %v3343
        %v3346 = vmul.f32 %v3312, %v3343
        %v3347 = vmul.f32 %v3313, %v3343
        %v3348 = vmul.f32 %v3314, %v3343
        %v3349 = vmul.f32 %v3315, %v3343
        %v3350 = vmul.f32 %v3316, %v3343
        %v3351 = vmul.f32 %v3317, %v3343
        %v3352 = vmul.f32 %v3318, %v3343
        %v3353 = vmul.f32 %v3319, %v3343
        %v3354 = vmul.f32 %v3320, %v3343
        %v3355 = vmul.f32 %v3321, %v3343
        %v3356 = vmul.f32 %v3322, %v3343
        %v3357 = vmul.f32 %v3323, %v3343
        %v3358 = vmul.f32 %v3324, %v3343
        %v3359 = vmul.f32 %v3325, %v3343
        %v3376 = vrot.slane %v3344, 1
        %v3377 = vrot.slane %v3345, 1
        %v3378 = vsel %vm443, %v3376, %v3377
        %v3379 = vrot.slane %v3346, 1
        %v3380 = vrot.slane %v3347, 1
        %v3381 = vsel %vm443, %v3379, %v3380
        %v3382 = vrot.slane %v3348, 1
        %v3383 = vrot.slane %v3349, 1
        %v3384 = vsel %vm443, %v3382, %v3383
        %v3385 = vrot.slane %v3350, 1
        %v3386 = vrot.slane %v3351, 1
        %v3387 = vsel %vm443, %v3385, %v3386
        %v3388 = vrot.slane %v3352, 1
        %v3389 = vrot.slane %v3353, 1
        %v3390 = vsel %vm443, %v3388, %v3389
        %v3391 = vrot.slane %v3354, 1
        %v3392 = vrot.slane %v3355, 1
        %v3393 = vsel %vm443, %v3391, %v3392
        %v3394 = vrot.slane %v3356, 1
        %v3395 = vrot.slane %v3357, 1
        %v3396 = vsel %vm443, %v3394, %v3395
        %v3397 = vrot.slane %v3358, 1
        %v3398 = vrot.slane %v3359, 1
        %v3399 = vsel %vm443, %v3397, %v3398
        %v3408 = vadd.f32 %v3335, %v3378
        %v3409 = vadd.f32 %v3336, %v3381
        %v3410 = vadd.f32 %v3337, %v3384
        %v3411 = vadd.f32 %v3338, %v3387
        %v3412 = vadd.f32 %v3339, %v3390
        %v3413 = vadd.f32 %v3340, %v3393
        %v3414 = vadd.f32 %v3341, %v3396
        %v3415 = vadd.f32 %v3342, %v3399
        %v3416 = vperm.slane %v3137, 2
        %v3417 = vmul.f32 %v3310, %v3416
        %v3418 = vmul.f32 %v3311, %v3416
        %v3419 = vmul.f32 %v3312, %v3416
        %v3420 = vmul.f32 %v3313, %v3416
        %v3421 = vmul.f32 %v3314, %v3416
        %v3422 = vmul.f32 %v3315, %v3416
        %v3423 = vmul.f32 %v3316, %v3416
        %v3424 = vmul.f32 %v3317, %v3416
        %v3425 = vmul.f32 %v3318, %v3416
        %v3426 = vmul.f32 %v3319, %v3416
        %v3427 = vmul.f32 %v3320, %v3416
        %v3428 = vmul.f32 %v3321, %v3416
        %v3429 = vmul.f32 %v3322, %v3416
        %v3430 = vmul.f32 %v3323, %v3416
        %v3431 = vmul.f32 %v3324, %v3416
        %v3432 = vmul.f32 %v3325, %v3416
        %v3449 = vrot.slane %v3417, 2
        %v3450 = vrot.slane %v3418, 2
        %v3451 = vsel %vm663, %v3449, %v3450
        %v3452 = vrot.slane %v3419, 2
        %v3453 = vrot.slane %v3420, 2
        %v3454 = vsel %vm663, %v3452, %v3453
        %v3455 = vrot.slane %v3421, 2
        %v3456 = vrot.slane %v3422, 2
        %v3457 = vsel %vm663, %v3455, %v3456
        %v3458 = vrot.slane %v3423, 2
        %v3459 = vrot.slane %v3424, 2
        %v3460 = vsel %vm663, %v3458, %v3459
        %v3461 = vrot.slane %v3425, 2
        %v3462 = vrot.slane %v3426, 2
        %v3463 = vsel %vm663, %v3461, %v3462
        %v3464 = vrot.slane %v3427, 2
        %v3465 = vrot.slane %v3428, 2
        %v3466 = vsel %vm663, %v3464, %v3465
        %v3467 = vrot.slane %v3429, 2
        %v3468 = vrot.slane %v3430, 2
        %v3469 = vsel %vm663, %v3467, %v3468
        %v3470 = vrot.slane %v3431, 2
        %v3471 = vrot.slane %v3432, 2
        %v3472 = vsel %vm663, %v3470, %v3471
        %v3481 = vadd.f32 %v3408, %v3451
        %v3482 = vadd.f32 %v3409, %v3454
        %v3483 = vadd.f32 %v3410, %v3457
        %v3484 = vadd.f32 %v3411, %v3460
        %v3485 = vadd.f32 %v3412, %v3463
        %v3486 = vadd.f32 %v3413, %v3466
        %v3487 = vadd.f32 %v3414, %v3469
        %v3488 = vadd.f32 %v3415, %v3472
        %v3489 = vld [vmem:[%s2628] sm:$0xff]
        %v3490 = vld [vmem:[%s2628 + $0x8] sm:$0x3]
        %v3491 = vld [vmem:[%s2628 + $0x10] sm:$0xff]
        %v3492 = vld [vmem:[%s2628 + $0x18] sm:$0x3]
        %v3493 = vld [vmem:[%s2628 + $0x20] sm:$0xff]
        %v3494 = vld [vmem:[%s2628 + $0x28] sm:$0x3]
        %v3495 = vld [vmem:[%s2628 + $0x30] sm:$0xff]
        %v3496 = vld [vmem:[%s2628 + $0x38] sm:$0x3]
        %v3497 = vld [vmem:[%s2628 + $0x40] sm:$0xff]
        %v3498 = vld [vmem:[%s2628 + $0x48] sm:$0x3]
        %v3499 = vld [vmem:[%s2628 + $0x50] sm:$0xff]
        %v3500 = vld [vmem:[%s2628 + $0x58] sm:$0x3]
        %v3501 = vld [vmem:[%s2628 + $0x60] sm:$0xff]
        %v3502 = vld [vmem:[%s2628 + $0x68] sm:$0x3]
        %v3503 = vld [vmem:[%s2628 + $0x70] sm:$0xff]
        %v3504 = vld [vmem:[%s2628 + $0x78] sm:$0x3]
        %v3505 = vperm.slane %v3138, 0
        %v3506 = vmul.f32 %v3489, %v3505
        %v3507 = vmul.f32 %v3491, %v3505
        %v3508 = vmul.f32 %v3493, %v3505
        %v3509 = vmul.f32 %v3495, %v3505
        %v3510 = vmul.f32 %v3497, %v3505
        %v3511 = vmul.f32 %v3499, %v3505
        %v3512 = vmul.f32 %v3501, %v3505
        %v3513 = vmul.f32 %v3503, %v3505
        %v3514 = vadd.f32 %v3481, %v3506
        %v3515 = vadd.f32 %v3482, %v3507
        %v3516 = vadd.f32 %v3483, %v3508
        %v3517 = vadd.f32 %v3484, %v3509
        %v3518 = vadd.f32 %v3485, %v3510
        %v3519 = vadd.f32 %v3486, %v3511
        %v3520 = vadd.f32 %v3487, %v3512
        %v3521 = vadd.f32 %v3488, %v3513
        %v3522 = vperm.slane %v3138, 1
        %v3523 = vmul.f32 %v3489, %v3522
        %v3524 = vmul.f32 %v3490, %v3522
        %v3525 = vmul.f32 %v3491, %v3522
        %v3526 = vmul.f32 %v3492, %v3522
        %v3527 = vmul.f32 %v3493, %v3522
        %v3528 = vmul.f32 %v3494, %v3522
        %v3529 = vmul.f32 %v3495, %v3522
        %v3530 = vmul.f32 %v3496, %v3522
        %v3531 = vmul.f32 %v3497, %v3522
        %v3532 = vmul.f32 %v3498, %v3522
        %v3533 = vmul.f32 %v3499, %v3522
        %v3534 = vmul.f32 %v3500, %v3522
        %v3535 = vmul.f32 %v3501, %v3522
        %v3536 = vmul.f32 %v3502, %v3522
        %v3537 = vmul.f32 %v3503, %v3522
        %v3538 = vmul.f32 %v3504, %v3522
        %v3555 = vrot.slane %v3523, 1
        %v3556 = vrot.slane %v3524, 1
        %v3557 = vsel %vm443, %v3555, %v3556
        %v3558 = vrot.slane %v3525, 1
        %v3559 = vrot.slane %v3526, 1
        %v3560 = vsel %vm443, %v3558, %v3559
        %v3561 = vrot.slane %v3527, 1
        %v3562 = vrot.slane %v3528, 1
        %v3563 = vsel %vm443, %v3561, %v3562
        %v3564 = vrot.slane %v3529, 1
        %v3565 = vrot.slane %v3530, 1
        %v3566 = vsel %vm443, %v3564, %v3565
        %v3567 = vrot.slane %v3531, 1
        %v3568 = vrot.slane %v3532, 1
        %v3569 = vsel %vm443, %v3567, %v3568
        %v3570 = vrot.slane %v3533, 1
        %v3571 = vrot.slane %v3534, 1
        %v3572 = vsel %vm443, %v3570, %v3571
        %v3573 = vrot.slane %v3535, 1
        %v3574 = vrot.slane %v3536, 1
        %v3575 = vsel %vm443, %v3573, %v3574
        %v3576 = vrot.slane %v3537, 1
        %v3577 = vrot.slane %v3538, 1
        %v3578 = vsel %vm443, %v3576, %v3577
        %v3587 = vadd.f32 %v3514, %v3557
        %v3588 = vadd.f32 %v3515, %v3560
        %v3589 = vadd.f32 %v3516, %v3563
        %v3590 = vadd.f32 %v3517, %v3566
        %v3591 = vadd.f32 %v3518, %v3569
        %v3592 = vadd.f32 %v3519, %v3572
        %v3593 = vadd.f32 %v3520, %v3575
        %v3594 = vadd.f32 %v3521, %v3578
        %v3595 = vperm.slane %v3138, 2
        %v3596 = vmul.f32 %v3489, %v3595
        %v3597 = vmul.f32 %v3490, %v3595
        %v3598 = vmul.f32 %v3491, %v3595
        %v3599 = vmul.f32 %v3492, %v3595
        %v3600 = vmul.f32 %v3493, %v3595
        %v3601 = vmul.f32 %v3494, %v3595
        %v3602 = vmul.f32 %v3495, %v3595
        %v3603 = vmul.f32 %v3496, %v3595
        %v3604 = vmul.f32 %v3497, %v3595
        %v3605 = vmul.f32 %v3498, %v3595
        %v3606 = vmul.f32 %v3499, %v3595
        %v3607 = vmul.f32 %v3500, %v3595
        %v3608 = vmul.f32 %v3501, %v3595
        %v3609 = vmul.f32 %v3502, %v3595
        %v3610 = vmul.f32 %v3503, %v3595
        %v3611 = vmul.f32 %v3504, %v3595
        %v3628 = vrot.slane %v3596, 2
        %v3629 = vrot.slane %v3597, 2
        %v3630 = vsel %vm663, %v3628, %v3629
        %v3631 = vrot.slane %v3598, 2
        %v3632 = vrot.slane %v3599, 2
        %v3633 = vsel %vm663, %v3631, %v3632
        %v3634 = vrot.slane %v3600, 2
        %v3635 = vrot.slane %v3601, 2
        %v3636 = vsel %vm663, %v3634, %v3635
        %v3637 = vrot.slane %v3602, 2
        %v3638 = vrot.slane %v3603, 2
        %v3639 = vsel %vm663, %v3637, %v3638
        %v3640 = vrot.slane %v3604, 2
        %v3641 = vrot.slane %v3605, 2
        %v3642 = vsel %vm663, %v3640, %v3641
        %v3643 = vrot.slane %v3606, 2
        %v3644 = vrot.slane %v3607, 2
        %v3645 = vsel %vm663, %v3643, %v3644
        %v3646 = vrot.slane %v3608, 2
        %v3647 = vrot.slane %v3609, 2
        %v3648 = vsel %vm663, %v3646, %v3647
        %v3649 = vrot.slane %v3610, 2
        %v3650 = vrot.slane %v3611, 2
        %v3651 = vsel %vm663, %v3649, %v3650
        %v3660 = vadd.f32 %v3587, %v3630
        %v3661 = vadd.f32 %v3588, %v3633
        %v3662 = vadd.f32 %v3589, %v3636
        %v3663 = vadd.f32 %v3590, %v3639
        %v3664 = vadd.f32 %v3591, %v3642
        %v3665 = vadd.f32 %v3592, %v3645
        %v3666 = vadd.f32 %v3593, %v3648
        %v3667 = vadd.f32 %v3594, %v3651
        %v3668 = vadd.f32 %v2220, %v3660
        %v3669 = vadd.f32 %v2223, %v3661
        %v3670 = vadd.f32 %v2226, %v3662
        %v3671 = vadd.f32 %v2229, %v3663
        %v3672 = vadd.f32 %v2232, %v3664
        %v3673 = vadd.f32 %v2235, %v3665
        %v3674 = vadd.f32 %v2238, %v3666
        %v3675 = vadd.f32 %v2241, %v3667
        %3676 = vst.msk [vmem:[%s352] sm:$0xff] %vm1870, %v3668
        %3677 = vst.msk [vmem:[%s352 + $0x8] sm:$0xff] %vm1870, %v3669
        %3678 = vst.msk [vmem:[%s352 + $0x10] sm:$0xff] %vm1870, %v3670
        %3679 = vst.msk [vmem:[%s352 + $0x18] sm:$0xff] %vm1870, %v3671
        %3680 = vst.msk [vmem:[%s352 + $0x20] sm:$0xff] %vm1870, %v3672
        %3681 = vst.msk [vmem:[%s352 + $0x28] sm:$0xff] %vm1870, %v3673
        %3682 = vst.msk [vmem:[%s352 + $0x30] sm:$0xff] %vm1870, %v3674
        %3683 = vst.msk [vmem:[%s352 + $0x38] sm:$0xff] %vm1870, %v3675
        %s3684 = sand.u32 %s247, 1
        %s3685 = scalar_lea.sflag [#allocation4], %s3684
        %s3686 = sand.u32 %s247, 1
        %s3687 = smul.addr %s3686, 64
        %s3688 = scalar_lea.vmem [#allocation3], %s3687
        // Predicated region
        $region61: #{tpu_custom_call.1} parent=59 // pred_check
          %p3689 = pneg %p257
        $region62: #{tpu_custom_call.1} parent=59 // pred_check_branch
          %3691 = sbr.rel (%p3689) target = $region64
        $region63: #{tpu_custom_call.1} parent=59 // pred_region
          %3693 = vsyncadd %s3685, 0
          %s3694 = smul.addr %s24, 8
          %s3695 = smul.addr %s3694, 8
          %s3696 = scalar_lea.hbm %s10, %s3695
          %s3697 = sshll.u32 %s3688, 4
          %s3698 = int_to_ptr.vmem [resolvable:$true] %s3697
          %s3699 = sshll.u32 %s3696, 4
          %s3700 = int_to_ptr.hbm [resolvable:$true] %s3699
          %3705 = dma.vmem_to_hbm [thread:$0]  %s3698, 1024, %s3700, %s3685, 128, 128, 8
        $region64: #{tpu_custom_call.1} parent=59 // pred_fallthru
          _
      $region60: #{tpu_custom_call.1} parent=5 // pred_fallthru
        _
      %p3706 = scmp.le.s32.totalorder 2, %s19
      // Predicated region
      $region65: #{tpu_custom_call.1} parent=5 // pred_check
        %p3707 = pneg %p3706
      $region66: #{tpu_custom_call.1} parent=5 // pred_check_branch
        %3709 = sbr.rel (%p3707) target = $region68
      $region67: #{tpu_custom_call.1} parent=5 // pred_region
        %s3710 = ssub.s32 %s19, 2
        // Predicated region
        $region69: #{tpu_custom_call.1} parent=67 // pred_check
          %p3711 = pneg %p263
        $region70: #{tpu_custom_call.1} parent=67 // pred_check_branch
          %3713 = sbr.rel (%p3711) target = $region72
        $region71: #{tpu_custom_call.1} parent=67 // pred_region
          %s3714 = sand.u32 %s248, 1
          %s3715 = scalar_lea.sflag [#allocation4], %s3714
          %s3716 = sand.u32 %s248, 1
          %s3717 = smul.addr %s3716, 64
          %s3718 = scalar_lea.vmem [#allocation3], %s3717
          %3720 = dma.done %s3715, 1024
        $region72: #{tpu_custom_call.1} parent=67 // pred_fallthru
          _
      $region68: #{tpu_custom_call.1} parent=5 // pred_fallthru
        _
    $region6: #{tpu_custom_call.1} parent=1 // loop_footer
      %s23 = sadd.s32 1, %s19
    $region7: #{tpu_custom_call.1} parent=1 // loop_footer_branch
      %18 = sbr.rel target = $region3
    $region8: #{tpu_custom_call.1} parent=1 // loop_exit
      _
    %3721 = vsyncpa [#allocation4], 1
    %s3722 = scalar_lea.sflag [#allocation4], 1
    %3723 = vsyncpa %s3722, 1

</llo_original>
